<compile_context>
chip_gen: v7x
topology: tpu7x:2x2x1
jax: 0.10.0
libtpu: 0.0.40
codegen_flags: <defaults>
</compile_context>

<pallas_src>
import functools
import math

import jax
import jax.numpy as jnp
from jax import lax
from jax.experimental import pallas as pl
from jax.experimental.pallas import tpu as pltpu

NEG_INF = -1e9
LN_EPS = 1e-5                 # PyTorch nn.LayerNorm default
MXU_DTYPE = jnp.bfloat16      # matmul-input dtype (accumulate in f32)


# ------------------------- in-kernel building blocks -------------------------

def _layernorm_res(x, r, g, b, eps):
    """LayerNorm(x + r) * g + b, all statistics in f32."""
    y = x + r
    mean = jnp.mean(y, axis=-1, keepdims=True)
    yc = y - mean
    var = jnp.mean(yc * yc, axis=-1, keepdims=True)
    return yc * lax.rsqrt(var + eps) * g + b


def _mha(q, k, v, n_heads, d_head, causal, q_offset):
    """Head-batched multi-head attention.

    q: (Tq, D) f32, k/v: (Lk, D) f32.  Heads are processed with one batched
    dot_general pair over an (H, L, Dh) layout (no per-head lane slicing, no
    concatenate).  Scale is folded into q before the score matmul.
    """
    Tq, D = q.shape
    Lk = k.shape[0]
    scale = 1.0 / math.sqrt(d_head)

    qh = (q * scale).reshape(Tq, n_heads, d_head).transpose(1, 0, 2).astype(MXU_DTYPE)
    kh = k.reshape(Lk, n_heads, d_head).transpose(1, 0, 2).astype(MXU_DTYPE)
    vh = v.reshape(Lk, n_heads, d_head).transpose(1, 0, 2).astype(MXU_DTYPE)

    # (H, Tq, Lk) scores, f32 accumulation on the MXU
    s = jnp.einsum('hqd,hkd->hqk', qh, kh, preferred_element_type=jnp.float32)
    if causal:
        row = q_offset + lax.broadcasted_iota(jnp.int32, (Tq, Lk), 0)
        col = lax.broadcasted_iota(jnp.int32, (Tq, Lk), 1)
        s = s + jnp.where(col <= row, 0.0, NEG_INF)[None, :, :]

    m = jnp.max(s, axis=-1, keepdims=True)
    p = jnp.exp(s - m)
    denom = jnp.sum(p, axis=-1, keepdims=True)
    p = p * pl.reciprocal(denom, approx=True)          # EUP slot, ~free

    o = jnp.einsum('hqk,hkd->hqd', p.astype(MXU_DTYPE), vh,
                   preferred_element_type=jnp.float32)
    return o.transpose(1, 0, 2).reshape(Tq, D)


def _dot(a_f32, w_ref):
    """bf16 MXU matmul with f32 accumulation (weights already stored bf16)."""
    return jnp.dot(a_f32.astype(MXU_DTYPE), w_ref[...],
                   preferred_element_type=jnp.float32)


# ------------------------------ fused kernels --------------------------------
# Packed (K, D) vector rows (biases + LN affine) — encoder layer:
#   0 bq | 1 bo | 2 ln1_g | 3 ln1_b | 4 ffn_b2 | 5 ln2_g | 6 ln2_b
# Decoder layer:
#   0 bq_s | 1 bo_s | 2 ln1_g | 3 ln1_b | 4 bq_c | 5 bo_c | 6 ln2_g | 7 ln2_b
#   8 ffn_b2 | 9 ln3_g | 10 ln3_b

def _encoder_layer_kernel(x_tile_ref, x_full_ref,
                          wq_ref, wkv_ref, wo_ref, w1_ref, w2_ref,
                          bkv_ref, b1_ref, vec_ref,
                          o_ref, *, n_heads, d_head, eps):
    D = n_heads * d_head
    vec = vec_ref[...]
    x = x_tile_ref[...].astype(jnp.float32)
    xf = x_full_ref[...].astype(jnp.float32)

    # self-attention (no mask): Q from the query tile, K/V from the full seq
    q = _dot(x, wq_ref) + vec[0]
    kv = _dot(xf, wkv_ref) + bkv_ref[...]
    a = _mha(q, kv[:, :D], kv[:, D:], n_heads, d_head, causal=False, q_offset=0)
    a = _dot(a, wo_ref) + vec[1]
    x = _layernorm_res(x, a, vec[2], vec[3], eps)

    # FFN (w1 + ReLU + w2) + add&LN; intermediate never leaves VMEM
    f = _dot(x, w1_ref) + b1_ref[...]
    f = jnp.maximum(f, 0.0)
    f = _dot(f, w2_ref) + vec[4]
    x = _layernorm_res(x, f, vec[5], vec[6], eps)

    o_ref[...] = x.astype(o_ref.dtype)


def _decoder_layer_kernel(y_tile_ref, y_full_ref, enc_ref,
                          wq_s_ref, wkv_s_ref, wo_s_ref,
                          wq_c_ref, wkv_c_ref, wo_c_ref,
                          w1_ref, w2_ref,
                          bkv_s_ref, bkv_c_ref, b1_ref, vec_ref,
                          o_ref, *, n_heads, d_head, eps, tile_l):
    D = n_heads * d_head
    vec = vec_ref[...]
    y = y_tile_ref[...].astype(jnp.float32)
    yf = y_full_ref[...].astype(jnp.float32)
    enc = enc_ref[...].astype(jnp.float32)
    q_off = pl.program_id(0) * tile_l

    # causal self-attention (mask generated in-kernel, offset by the tile row)
    q = _dot(y, wq_s_ref) + vec[0]
    kv = _dot(yf, wkv_s_ref) + bkv_s_ref[...]
    a = _mha(q, kv[:, :D], kv[:, D:], n_heads, d_head, causal=True, q_offset=q_off)
    a = _dot(a, wo_s_ref) + vec[1]
    y = _layernorm_res(y, a, vec[2], vec[3], eps)

    # cross-attention: Q from decoder stream, fused K/V from encoder output
    q = _dot(y, wq_c_ref) + vec[4]
    kv = _dot(enc, wkv_c_ref) + bkv_c_ref[...]
    a = _mha(q, kv[:, :D], kv[:, D:], n_heads, d_head, causal=False, q_offset=0)
    a = _dot(a, wo_c_ref) + vec[5]
    y = _layernorm_res(y, a, vec[6], vec[7], eps)

    # FFN + add&LN
    f = _dot(y, w1_ref) + b1_ref[...]
    f = jnp.maximum(f, 0.0)
    f = _dot(f, w2_ref) + vec[8]
    y = _layernorm_res(y, f, vec[9], vec[10], eps)

    o_ref[...] = y.astype(o_ref.dtype)


def _out_proj_kernel(x_ref, w_ref, b_ref, o_ref):
    y = _dot(x_ref[...].astype(jnp.float32), w_ref) + b_ref[...]
    o_ref[...] = y.astype(o_ref.dtype)


# ------------------------------ host wrappers --------------------------------

def _tile_rows(L, max_rows=256):
    """Largest row tile <= max_rows that divides L (multiple of 8 when tiled)."""
    if L <= max_rows:
        return L
    for t in range(max_rows, 7, -8):
        if L % t == 0:
            return t
    return L  # fallback: single full-extent tile


def encoder_layer(x, p, n_heads, d_head, tile_l):
    L, D = x.shape
    ffn = p["w1"].shape[1]
    tiled = lambda i: (i, 0)
    const = lambda i: (0, 0)
    return pl.pallas_call(
        functools.partial(_encoder_layer_kernel,
                          n_heads=n_heads, d_head=d_head, eps=LN_EPS),
        out_shape=jax.ShapeDtypeStruct((L, D), x.dtype),
        grid=(L // tile_l,),
        in_specs=[
            pl.BlockSpec((tile_l, D), tiled),      # x (query tile)
            pl.BlockSpec((L, D), const),           # x (full, K/V source)
            pl.BlockSpec((D, D), const),           # wq
            pl.BlockSpec((D, 2 * D), const),       # wkv (fused)
            pl.BlockSpec((D, D), const),           # wo
            pl.BlockSpec((D, ffn), const),         # ffn w1
            pl.BlockSpec((ffn, D), const),         # ffn w2
            pl.BlockSpec((1, 2 * D), const),       # bkv
            pl.BlockSpec((1, ffn), const),         # ffn b1
            pl.BlockSpec((8, D), const),           # packed D-wide vectors
        ],
        out_specs=pl.BlockSpec((tile_l, D), tiled),
        compiler_params=pltpu.CompilerParams(dimension_semantics=("parallel",)),
    )(x, x, p["wq"], p["wkv"], p["wo"], p["w1"], p["w2"],
      p["bkv"], p["b1"], p["vec"])


def decoder_layer(y, enc_out, p, n_heads, d_head, tile_l):
    Lt, D = y.shape
    Ls = enc_out.shape[0]
    ffn = p["w1"].shape[1]
    tiled = lambda i: (i, 0)
    const = lambda i: (0, 0)
    return pl.pallas_call(
        functools.partial(_decoder_layer_kernel,
                          n_heads=n_heads, d_head=d_head, eps=LN_EPS,
                          tile_l=tile_l),
        out_shape=jax.ShapeDtypeStruct((Lt, D), y.dtype),
        grid=(Lt // tile_l,),
        in_specs=[
            pl.BlockSpec((tile_l, D), tiled),      # y (query tile)
            pl.BlockSpec((Lt, D), const),          # y (full, self-attn K/V)
            pl.BlockSpec((Ls, D), const),          # encoder output (cross K/V)
            pl.BlockSpec((D, D), const),           # wq_s
            pl.BlockSpec((D, 2 * D), const),       # wkv_s
            pl.BlockSpec((D, D), const),           # wo_s
            pl.BlockSpec((D, D), const),           # wq_c
            pl.BlockSpec((D, 2 * D), const),       # wkv_c
            pl.BlockSpec((D, D), const),           # wo_c
            pl.BlockSpec((D, ffn), const),         # ffn w1
            pl.BlockSpec((ffn, D), const),         # ffn w2
            pl.BlockSpec((1, 2 * D), const),       # bkv_s
            pl.BlockSpec((1, 2 * D), const),       # bkv_c
            pl.BlockSpec((1, ffn), const),         # ffn b1
            pl.BlockSpec((16, D), const),          # packed D-wide vectors
        ],
        out_specs=pl.BlockSpec((tile_l, D), tiled),
        compiler_params=pltpu.CompilerParams(dimension_semantics=("parallel",)),
    )(y, y, enc_out,
      p["wq_s"], p["wkv_s"], p["wo_s"],
      p["wq_c"], p["wkv_c"], p["wo_c"],
      p["w1"], p["w2"],
      p["bkv_s"], p["bkv_c"], p["b1"], p["vec"])


def output_projection(y, w_pad, b_pad, vocab, tn=128):
    """(L, D) @ (D, vocab_pad) blocked over the lane-padded N axis."""
    L, D = y.shape
    n_pad = w_pad.shape[1]
    logits = pl.pallas_call(
        _out_proj_kernel,
        out_shape=jax.ShapeDtypeStruct((L, n_pad), y.dtype),
        grid=(n_pad // tn,),
        in_specs=[
            pl.BlockSpec((L, D), lambda j: (0, 0)),
            pl.BlockSpec((D, tn), lambda j: (0, j)),
            pl.BlockSpec((1, tn), lambda j: (0, j)),
        ],
        out_specs=pl.BlockSpec((L, tn), lambda j: (0, j)),
        compiler_params=pltpu.CompilerParams(dimension_semantics=("parallel",)),
    )(y, w_pad, b_pad)
    return logits[:, :vocab]      # vocab is a static Python int


def sinusoidal_pe(max_len, d_model):
    pos = jnp.arange(max_len, dtype=jnp.float32)[:, None]
    i = jnp.arange(0, d_model, 2, dtype=jnp.float32)
    div = jnp.exp(-math.log(10000.0) * i / d_model)
    pe = jnp.zeros((max_len, d_model), jnp.float32)
    pe = pe.at[:, 0::2].set(jnp.sin(pos * div))
    pe = pe.at[:, 1::2].set(jnp.cos(pos * div))
    return pe


def transformer_forward(params, src_ids, tgt_ids, *, n_heads, d_head, dec_vocab):
    Ls = src_ids.shape[0]
    Lt = tgt_ids.shape[0]

    # TransformerEmbedding: token-embedding gather + sinusoidal PE
    # (dropout = identity in eval).  Gather stays in plain JAX.
    enc_x = jnp.take(params["enc_emb"], src_ids, axis=0) + params["pe"][:Ls]
    dec_x = jnp.take(params["dec_emb"], tgt_ids, axis=0) + params["pe"][:Lt]

    # TODO(synk): overlap next-layer weight DMA with current-layer compute via
    # the cross-pallas_call DMA-future pattern once layer weights are large.
    x = enc_x
    for lp in params["enc_layers"]:
        x = encoder_layer(x, lp, n_heads, d_head, _tile_rows(Ls))
    enc_out = x

    y = dec_x
    for lp in params["dec_layers"]:
        y = decoder_layer(y, enc_out, lp, n_heads, d_head, _tile_rows(Lt))

    # final output projection: (Lt, d_model) -> (Lt, decoder_vocab)
    return output_projection(y, params["w_out_pad"], params["b_out_pad"], dec_vocab)


# ------------------------------ parameter init -------------------------------

def _xavier_normal(key, fan_in, fan_out, dtype=jnp.float32):
    std = math.sqrt(2.0 / (fan_in + fan_out))
    return (std * jax.random.normal(key, (fan_in, fan_out), jnp.float32)).astype(dtype)


def _enc_layer_params(key, d_model, ffn_hidden):
    ks = jax.random.split(key, 6)
    vec = jnp.zeros((8, d_model), jnp.float32)
    vec = vec.at[2].set(1.0).at[5].set(1.0)          # LN gammas
    return dict(
        wq=_xavier_normal(ks[0], d_model, d_model, MXU_DTYPE),
        wkv=jnp.concatenate([_xavier_normal(ks[1], d_model, d_model),
                             _xavier_normal(ks[2], d_model, d_model)],
                            axis=1).astype(MXU_DTYPE),
        wo=_xavier_normal(ks[3], d_model, d_model, MXU_DTYPE),
        w1=_xavier_normal(ks[4], d_model, ffn_hidden, MXU_DTYPE),
        w2=_xavier_normal(ks[5], ffn_hidden, d_model, MXU_DTYPE),
        bkv=jnp.zeros((1, 2 * d_model), jnp.float32),
        b1=jnp.zeros((1, ffn_hidden), jnp.float32),
        vec=vec,
    )


def _dec_layer_params(key, d_model, ffn_hidden):
    ks = jax.random.split(key, 10)
    vec = jnp.zeros((16, d_model), jnp.float32)
    vec = vec.at[2].set(1.0).at[6].set(1.0).at[9].set(1.0)   # LN gammas
    return dict(
        wq_s=_xavier_normal(ks[0], d_model, d_model, MXU_DTYPE),
        wkv_s=jnp.concatenate([_xavier_normal(ks[1], d_model, d_model),
                               _xavier_normal(ks[2], d_model, d_model)],
                              axis=1).astype(MXU_DTYPE),
        wo_s=_xavier_normal(ks[3], d_model, d_model, MXU_DTYPE),
        wq_c=_xavier_normal(ks[4], d_model, d_model, MXU_DTYPE),
        wkv_c=jnp.concatenate([_xavier_normal(ks[5], d_model, d_model),
                               _xavier_normal(ks[6], d_model, d_model)],
                              axis=1).astype(MXU_DTYPE),
        wo_c=_xavier_normal(ks[7], d_model, d_model, MXU_DTYPE),
        w1=_xavier_normal(ks[8], d_model, ffn_hidden, MXU_DTYPE),
        w2=_xavier_normal(ks[9], ffn_hidden, d_model, MXU_DTYPE),
        bkv_s=jnp.zeros((1, 2 * d_model), jnp.float32),
        bkv_c=jnp.zeros((1, 2 * d_model), jnp.float32),
        b1=jnp.zeros((1, ffn_hidden), jnp.float32),
        vec=vec,
    )


def init_params(key, *, enc_layers, dec_layers, enc_vocab, dec_vocab,
                d_model, ffn_hidden, max_len):
    n_keys = 3 + enc_layers + dec_layers
    ks = list(jax.random.split(key, n_keys))

    # lane-pad the output projection to a multiple of 128 for dense stores
    vocab_pad = ((dec_vocab + 127) // 128) * 128
    w_out = _xavier_normal(ks[2], d_model, dec_vocab)
    w_out_pad = (jnp.zeros((d_model, vocab_pad), jnp.float32)
                 .at[:, :dec_vocab].set(w_out).astype(MXU_DTYPE))
    b_out_pad = jnp.zeros((1, vocab_pad), jnp.float32)

    return dict(
        enc_emb=0.02 * jax.random.normal(ks[0], (enc_vocab, d_model), jnp.float32),
        dec_emb=0.02 * jax.random.normal(ks[1], (dec_vocab, d_model), jnp.float32),
        pe=sinusoidal_pe(max_len, d_model),
        w_out_pad=w_out_pad,
        b_out_pad=b_out_pad,
        enc_layers=[_enc_layer_params(ks[3 + i], d_model, ffn_hidden)
                    for i in range(enc_layers)],
        dec_layers=[_dec_layer_params(ks[3 + enc_layers + i], d_model, ffn_hidden)
                    for i in range(dec_layers)],
    )


# ----------------------------------- main ------------------------------------

if __name__ == "__main__":
    # small, forward-consistent shapes
    encoder_layers_amount = 2
    decoder_layers_amount = 2
    encoder_vocab_size = 50
    decoder_vocab_size = 60
    d_model = 32
    attention_d_head = 8            # dim per head -> n_heads = d_model // d_head = 4
    ffn_d_hidden = 64
    max_len = 16
    src_len = 8
    tgt_len = 8
    n_heads = d_model // attention_d_head

    key = jax.random.PRNGKey(0)
    k_params, k_src, k_tgt = jax.random.split(key, 3)

    params = init_params(
        k_params,
        enc_layers=encoder_layers_amount, dec_layers=decoder_layers_amount,
        enc_vocab=encoder_vocab_size, dec_vocab=decoder_vocab_size,
        d_model=d_model, ffn_hidden=ffn_d_hidden, max_len=max_len,
    )

    src_ids = jax.random.randint(k_src, (src_len,), 0, encoder_vocab_size, jnp.int32)
    tgt_ids = jax.random.randint(k_tgt, (tgt_len,), 0, decoder_vocab_size, jnp.int32)

    fwd = jax.jit(functools.partial(
        transformer_forward,
        n_heads=n_heads, d_head=attention_d_head, dec_vocab=decoder_vocab_size))
    logits = fwd(params, src_ids, tgt_ids)
    jax.block_until_ready(logits)

    assert logits.shape == (tgt_len, decoder_vocab_size)
    assert bool(jnp.all(jnp.isfinite(logits)))
    print("KERNEL_OK")
</pallas_src>

<mosaic_0001>
module attributes {stable_mosaic.version = 11 : i64} {
  func.func @_out_proj_kernel(%arg0: i32, %arg1: memref<8x32xf32, #tpu.memory_space<vmem>>, %arg2: memref<32x128xbf16, #tpu.memory_space<vmem>>, %arg3: memref<1x128xf32, #tpu.memory_space<vmem>>, %arg4: memref<8x128xf32, #tpu.memory_space<vmem>>) attributes {dimension_semantics = [#tpu.dimension_semantics<parallel>], iteration_bounds = array<i64: 1>, scalar_prefetch = 0 : i64, scratch_operands = 0 : i64, tpu.core_type = #tpu.core_type<tc>, window_params = [{pipeline_mode = #tpu.pipeline_mode<synchronous>, transform_indices = @transform_0, window_bounds = array<i64: 8, 32>}, {transform_indices = @transform_1, window_bounds = array<i64: 32, 128>}, {transform_indices = @transform_2, window_bounds = array<i64: 1, 128>}, {transform_indices = @transform_3, window_bounds = array<i64: 8, 128>}]} {
    %c0 = arith.constant 0 : index
    %c0_0 = arith.constant 0 : index
    %0 = vector.load %arg1[%c0, %c0_0] : memref<8x32xf32, #tpu.memory_space<vmem>>, vector<8x32xf32>
    %1 = arith.truncf %0 : vector<8x32xf32> to vector<8x32xbf16>
    %c0_1 = arith.constant 0 : index
    %c0_2 = arith.constant 0 : index
    %2 = vector.load %arg2[%c0_1, %c0_2] : memref<32x128xbf16, #tpu.memory_space<vmem>>, vector<32x128xbf16>
    %cst = arith.constant dense<0.000000e+00> : vector<8x128xf32>
    %3 = tpu.matmul %1, %2, %cst {dimension_numbers = #tpu.dot_dimension_numbers<[1], [0], [0], [1], [0, 0, 1, 1], [], []>} : vector<8x32xbf16>, vector<32x128xbf16>, vector<8x128xf32> -> vector<8x128xf32>
    %c0_3 = arith.constant 0 : index
    %c0_4 = arith.constant 0 : index
    %4 = vector.load %arg3[%c0_3, %c0_4] : memref<1x128xf32, #tpu.memory_space<vmem>>, vector<1x128xf32>
    %5 = vector.broadcast %4 : vector<1x128xf32> to vector<8x128xf32>
    %6 = arith.addf %3, %5 : vector<8x128xf32>
    %c0_5 = arith.constant 0 : index
    %c0_6 = arith.constant 0 : index
    %7 = vector.load %arg4[%c0_5, %c0_6] : memref<8x128xf32, #tpu.memory_space<vmem>>, vector<8x128xf32>
    tpu.vector_store %arg4[%c0_5, %c0_6], %6 {strides = array<i32>} : memref<8x128xf32, #tpu.memory_space<vmem>>, vector<8x128xf32>,
    return
  }
  func.func @transform_0(%arg0: i32) -> (i32, i32) {
    %c0_i32 = arith.constant 0 : i32
    %c0_i32_0 = arith.constant 0 : i32
    %c0_i32_1 = arith.constant 0 : i32
    return %c0_i32, %c0_i32_0 : i32, i32
  }
  func.func @transform_1(%arg0: i32) -> (i32, i32) {
    %c0_i32 = arith.constant 0 : i32
    %c0_i32_0 = arith.constant 0 : i32
    return %c0_i32, %arg0 : i32, i32
  }
  func.func @transform_2(%arg0: i32) -> (i32, i32) {
    %c0_i32 = arith.constant 0 : i32
    %c0_i32_0 = arith.constant 0 : i32
    return %c0_i32, %arg0 : i32, i32
  }
  func.func @transform_3(%arg0: i32) -> (i32, i32) {
    %c0_i32 = arith.constant 0 : i32
    %c0_i32_0 = arith.constant 0 : i32
    return %c0_i32, %arg0 : i32, i32
  }
}

module attributes {stable_mosaic.version = 11 : i64} {
  func.func @_encoder_layer_kernel(%arg0: i32, %arg1: memref<8x32xf32, #tpu.memory_space<vmem>>, %arg2: memref<8x32xf32, #tpu.memory_space<vmem>>, %arg3: memref<32x32xbf16, #tpu.memory_space<vmem>>, %arg4: memref<32x64xbf16, #tpu.memory_space<vmem>>, %arg5: memref<32x32xbf16, #tpu.memory_space<vmem>>, %arg6: memref<32x64xbf16, #tpu.memory_space<vmem>>, %arg7: memref<64x32xbf16, #tpu.memory_space<vmem>>, %arg8: memref<1x64xf32, #tpu.memory_space<vmem>>, %arg9: memref<1x64xf32, #tpu.memory_space<vmem>>, %arg10: memref<8x32xf32, #tpu.memory_space<vmem>>, %arg11: memref<8x32xf32, #tpu.memory_space<vmem>>) attributes {dimension_semantics = [#tpu.dimension_semantics<parallel>], iteration_bounds = array<i64: 1>, scalar_prefetch = 0 : i64, scratch_operands = 0 : i64, tpu.core_type = #tpu.core_type<tc>, window_params = [{transform_indices = @transform_0, window_bounds = array<i64: 8, 32>}, {pipeline_mode = #tpu.pipeline_mode<synchronous>, transform_indices = @transform_1, window_bounds = array<i64: 8, 32>}, {pipeline_mode = #tpu.pipeline_mode<synchronous>, transform_indices = @transform_2, window_bounds = array<i64: 32, 32>}, {pipeline_mode = #tpu.pipeline_mode<synchronous>, transform_indices = @transform_3, window_bounds = array<i64: 32, 64>}, {pipeline_mode = #tpu.pipeline_mode<synchronous>, transform_indices = @transform_4, window_bounds = array<i64: 32, 32>}, {pipeline_mode = #tpu.pipeline_mode<synchronous>, transform_indices = @transform_5, window_bounds = array<i64: 32, 64>}, {pipeline_mode = #tpu.pipeline_mode<synchronous>, transform_indices = @transform_6, window_bounds = array<i64: 64, 32>}, {pipeline_mode = #tpu.pipeline_mode<synchronous>, transform_indices = @transform_7, window_bounds = array<i64: 1, 64>}, {pipeline_mode = #tpu.pipeline_mode<synchronous>, transform_indices = @transform_8, window_bounds = array<i64: 1, 64>}, {pipeline_mode = #tpu.pipeline_mode<synchronous>, transform_indices = @transform_9, window_bounds = array<i64: 8, 32>}, {transform_indices = @transform_10, window_bounds = array<i64: 8, 32>}]} {
    %c0 = arith.constant 0 : index
    %c0_0 = arith.constant 0 : index
    %0 = vector.load %arg10[%c0, %c0_0] : memref<8x32xf32, #tpu.memory_space<vmem>>, vector<8x32xf32>
    %c0_1 = arith.constant 0 : index
    %c0_2 = arith.constant 0 : index
    %1 = vector.load %arg1[%c0_1, %c0_2] : memref<8x32xf32, #tpu.memory_space<vmem>>, vector<8x32xf32>
    %c0_3 = arith.constant 0 : index
    %c0_4 = arith.constant 0 : index
    %2 = vector.load %arg2[%c0_3, %c0_4] : memref<8x32xf32, #tpu.memory_space<vmem>>, vector<8x32xf32>
    %3 = arith.truncf %1 : vector<8x32xf32> to vector<8x32xbf16>
    %c0_5 = arith.constant 0 : index
    %c0_6 = arith.constant 0 : index
    %4 = vector.load %arg3[%c0_5, %c0_6] : memref<32x32xbf16, #tpu.memory_space<vmem>>, vector<32x32xbf16>
    %cst = arith.constant dense<0.000000e+00> : vector<8x32xf32>
    %5 = tpu.matmul %3, %4, %cst {dimension_numbers = #tpu.dot_dimension_numbers<[1], [0], [0], [1], [0, 0, 1, 1], [], []>} : vector<8x32xbf16>, vector<32x32xbf16>, vector<8x32xf32> -> vector<8x32xf32>
    %6 = vector.extract_strided_slice %0 {offsets = [0, 0], sizes = [1, 32], strides = [1, 1]} : vector<8x32xf32> to vector<1x32xf32>
    %7 = vector.shape_cast %6 : vector<1x32xf32> to vector<32xf32>
    %8 = vector.shape_cast %7 : vector<32xf32> to vector<1x32xf32>
    %9 = vector.broadcast %8 : vector<1x32xf32> to vector<8x32xf32>
    %10 = arith.addf %5, %9 : vector<8x32xf32>
    %11 = arith.truncf %2 : vector<8x32xf32> to vector<8x32xbf16>
    %c0_7 = arith.constant 0 : index
    %c0_8 = arith.constant 0 : index
    %12 = vector.load %arg4[%c0_7, %c0_8] : memref<32x64xbf16, #tpu.memory_space<vmem>>, vector<32x64xbf16>
    %cst_9 = arith.constant dense<0.000000e+00> : vector<8x64xf32>
    %13 = tpu.matmul %11, %12, %cst_9 {dimension_numbers = #tpu.dot_dimension_numbers<[1], [0], [0], [1], [0, 0, 1, 1], [], []>} : vector<8x32xbf16>, vector<32x64xbf16>, vector<8x64xf32> -> vector<8x64xf32>
    %c0_10 = arith.constant 0 : index
    %c0_11 = arith.constant 0 : index
    %14 = vector.load %arg8[%c0_10, %c0_11] : memref<1x64xf32, #tpu.memory_space<vmem>>, vector<1x64xf32>
    %15 = vector.broadcast %14 : vector<1x64xf32> to vector<8x64xf32>
    %16 = arith.addf %13, %15 : vector<8x64xf32>
    %17 = vector.extract_strided_slice %16 {offsets = [0, 0], sizes = [8, 32], strides = [1, 1]} : vector<8x64xf32> to vector<8x32xf32>
    %18 = vector.extract_strided_slice %16 {offsets = [0, 32], sizes = [8, 32], strides = [1, 1]} : vector<8x64xf32> to vector<8x32xf32>
    %cst_12 = arith.constant 0.353553385 : f32
    %19 = vector.broadcast %cst_12 : f32 to vector<8x32xf32>
    %20 = arith.mulf %10, %19 : vector<8x32xf32>
    %21 = vector.shape_cast %20 : vector<8x32xf32> to vector<8x4x8xf32>
    %22 = tpu.transpose %21, [1, 0, 2] : vector<8x4x8xf32> -> vector<4x8x8xf32>
    %23 = arith.truncf %22 : vector<4x8x8xf32> to vector<4x8x8xbf16>
    %24 = vector.shape_cast %17 : vector<8x32xf32> to vector<8x4x8xf32>
    %25 = tpu.transpose %24, [1, 0, 2] : vector<8x4x8xf32> -> vector<4x8x8xf32>
    %26 = arith.truncf %25 : vector<4x8x8xf32> to vector<4x8x8xbf16>
    %27 = vector.shape_cast %18 : vector<8x32xf32> to vector<8x4x8xf32>
    %28 = tpu.transpose %27, [1, 0, 2] : vector<8x4x8xf32> -> vector<4x8x8xf32>
    %29 = arith.truncf %28 : vector<4x8x8xf32> to vector<4x8x8xbf16>
    "tpu.trace_start"() <{level = 10 : i32, message = "hqd,hkd->hqk"}> : () -> ()
    %cst_13 = arith.constant dense<0.000000e+00> : vector<4x8x8xf32>
    %30 = tpu.matmul %23, %26, %cst_13 {dimension_numbers = #tpu.dot_dimension_numbers<[2], [2], [1], [1], [0, 0, 0, 1, 1, 1], [0], [0]>} : vector<4x8x8xbf16>, vector<4x8x8xbf16>, vector<4x8x8xf32> -> vector<4x8x8xf32>
    "tpu.trace_stop"() : () -> ()
    %cst_14 = arith.constant dense<0xFF800000> : vector<4x8xf32>
    %31 = vector.multi_reduction <maximumf>, %30, %cst_14 [2] : vector<4x8x8xf32> to vector<4x8xf32>
    %32 = vector.shape_cast %31 : vector<4x8xf32> to vector<4x8x1xf32>
    %33 = vector.broadcast %32 : vector<4x8x1xf32> to vector<4x8x8xf32>
    %34 = arith.subf %30, %33 : vector<4x8x8xf32>
    %35 = math.exp %34 : vector<4x8x8xf32>
    %cst_15 = arith.constant dense<0.000000e+00> : vector<4x8xf32>
    %36 = vector.multi_reduction <add>, %35, %cst_15 [2] : vector<4x8x8xf32> to vector<4x8xf32>
    %37 = vector.shape_cast %36 : vector<4x8xf32> to vector<4x8x1xf32>
    %38 = tpu.reciprocal %37 {approx = true} : vector<4x8x1xf32> -> vector<4x8x1xf32>
    %39 = vector.broadcast %38 : vector<4x8x1xf32> to vector<4x8x8xf32>
    %40 = arith.mulf %35, %39 : vector<4x8x8xf32>
    %41 = arith.truncf %40 : vector<4x8x8xf32> to vector<4x8x8xbf16>
    "tpu.trace_start"() <{level = 10 : i32, message = "hqk,hkd->hqd"}> : () -> ()
    %cst_16 = arith.constant dense<0.000000e+00> : vector<4x8x8xf32>
    %42 = tpu.matmul %41, %29, %cst_16 {dimension_numbers = #tpu.dot_dimension_numbers<[2], [1], [1], [2], [0, 0, 0, 1, 1, 2], [0], [0]>} : vector<4x8x8xbf16>, vector<4x8x8xbf16>, vector<4x8x8xf32> -> vector<4x8x8xf32>
    "tpu.trace_stop"() : () -> ()
    %43 = tpu.transpose %42, [1, 0, 2] : vector<4x8x8xf32> -> vector<8x4x8xf32>
    %44 = vector.shape_cast %43 : vector<8x4x8xf32> to vector<8x32xf32>
    %45 = arith.truncf %44 : vector<8x32xf32> to vector<8x32xbf16>
    %c0_17 = arith.constant 0 : index
    %c0_18 = arith.constant 0 : index
    %46 = vector.load %arg5[%c0_17, %c0_18] : memref<32x32xbf16, #tpu.memory_space<vmem>>, vector<32x32xbf16>
    %cst_19 = arith.constant dense<0.000000e+00> : vector<8x32xf32>
    %47 = tpu.matmul %45, %46, %cst_19 {dimension_numbers = #tpu.dot_dimension_numbers<[1], [0], [0], [1], [0, 0, 1, 1], [], []>} : vector<8x32xbf16>, vector<32x32xbf16>, vector<8x32xf32> -> vector<8x32xf32>
    %48 = vector.extract_strided_slice %0 {offsets = [1, 0], sizes = [1, 32], strides = [1, 1]} : vector<8x32xf32> to vector<1x32xf32>
    %49 = vector.shape_cast %48 : vector<1x32xf32> to vector<32xf32>
    %50 = vector.shape_cast %49 : vector<32xf32> to vector<1x32xf32>
    %51 = vector.broadcast %50 : vector<1x32xf32> to vector<8x32xf32>
    %52 = arith.addf %47, %51 : vector<8x32xf32>
    %53 = vector.extract_strided_slice %0 {offsets = [2, 0], sizes = [1, 32], strides = [1, 1]} : vector<8x32xf32> to vector<1x32xf32>
    %54 = vector.shape_cast %53 : vector<1x32xf32> to vector<32xf32>
    %55 = vector.extract_strided_slice %0 {offsets = [3, 0], sizes = [1, 32], strides = [1, 1]} : vector<8x32xf32> to vector<1x32xf32>
    %56 = vector.shape_cast %55 : vector<1x32xf32> to vector<32xf32>
    %57 = arith.addf %1, %52 : vector<8x32xf32>
    %cst_20 = arith.constant dense<0.000000e+00> : vector<8xf32>
    %58 = vector.multi_reduction <add>, %57, %cst_20 [1] : vector<8x32xf32> to vector<8xf32>
    %59 = vector.shape_cast %58 : vector<8xf32> to vector<8x1xf32>
    %cst_21 = arith.constant 3.200000e+01 : f32
    %60 = vector.broadcast %cst_21 : f32 to vector<8x1xf32>
    %61 = arith.divf %59, %60 : vector<8x1xf32>
    %62 = vector.broadcast %61 : vector<8x1xf32> to vector<8x32xf32>
    %63 = arith.subf %57, %62 : vector<8x32xf32>
    %64 = arith.mulf %63, %63 : vector<8x32xf32>
    %cst_22 = arith.constant dense<0.000000e+00> : vector<8xf32>
    %65 = vector.multi_reduction <add>, %64, %cst_22 [1] : vector<8x32xf32> to vector<8xf32>
    %66 = vector.shape_cast %65 : vector<8xf32> to vector<8x1xf32>
    %cst_23 = arith.constant 3.200000e+01 : f32
    %67 = vector.broadcast %cst_23 : f32 to vector<8x1xf32>
    %68 = arith.divf %66, %67 : vector<8x1xf32>
    %cst_24 = arith.constant 9.99999974E-6 : f32
    %69 = vector.broadcast %cst_24 : f32 to vector<8x1xf32>
    %70 = arith.addf %68, %69 : vector<8x1xf32>
    %71 = math.rsqrt %70 : vector<8x1xf32>
    %72 = vector.broadcast %71 : vector<8x1xf32> to vector<8x32xf32>
    %73 = arith.mulf %63, %72 : vector<8x32xf32>
    %74 = vector.shape_cast %54 : vector<32xf32> to vector<1x32xf32>
    %75 = vector.broadcast %74 : vector<1x32xf32> to vector<8x32xf32>
    %76 = arith.mulf %73, %75 : vector<8x32xf32>
    %77 = vector.shape_cast %56 : vector<32xf32> to vector<1x32xf32>
    %78 = vector.broadcast %77 : vector<1x32xf32> to vector<8x32xf32>
    %79 = arith.addf %76, %78 : vector<8x32xf32>
    %80 = arith.truncf %79 : vector<8x32xf32> to vector<8x32xbf16>
    %c0_25 = arith.constant 0 : index
    %c0_26 = arith.constant 0 : index
    %81 = vector.load %arg6[%c0_25, %c0_26] : memref<32x64xbf16, #tpu.memory_space<vmem>>, vector<32x64xbf16>
    %cst_27 = arith.constant dense<0.000000e+00> : vector<8x64xf32>
    %82 = tpu.matmul %80, %81, %cst_27 {dimension_numbers = #tpu.dot_dimension_numbers<[1], [0], [0], [1], [0, 0, 1, 1], [], []>} : vector<8x32xbf16>, vector<32x64xbf16>, vector<8x64xf32> -> vector<8x64xf32>
    %c0_28 = arith.constant 0 : index
    %c0_29 = arith.constant 0 : index
    %83 = vector.load %arg9[%c0_28, %c0_29] : memref<1x64xf32, #tpu.memory_space<vmem>>, vector<1x64xf32>
    %84 = vector.broadcast %83 : vector<1x64xf32> to vector<8x64xf32>
    %85 = arith.addf %82, %84 : vector<8x64xf32>
    %cst_30 = arith.constant 0.000000e+00 : f32
    %86 = vector.broadcast %cst_30 : f32 to vector<8x64xf32>
    %87 = arith.maximumf %85, %86 : vector<8x64xf32>
    %88 = arith.truncf %87 : vector<8x64xf32> to vector<8x64xbf16>
    %c0_31 = arith.constant 0 : index
    %c0_32 = arith.constant 0 : index
    %89 = vector.load %arg7[%c0_31, %c0_32] : memref<64x32xbf16, #tpu.memory_space<vmem>>, vector<64x32xbf16>
    %cst_33 = arith.constant dense<0.000000e+00> : vector<8x32xf32>
    %90 = tpu.matmul %88, %89, %cst_33 {dimension_numbers = #tpu.dot_dimension_numbers<[1], [0], [0], [1], [0, 0, 1, 1], [], []>} : vector<8x64xbf16>, vector<64x32xbf16>, vector<8x32xf32> -> vector<8x32xf32>
    %91 = vector.extract_strided_slice %0 {offsets = [4, 0], sizes = [1, 32], strides = [1, 1]} : vector<8x32xf32> to vector<1x32xf32>
    %92 = vector.shape_cast %91 : vector<1x32xf32> to vector<32xf32>
    %93 = vector.shape_cast %92 : vector<32xf32> to vector<1x32xf32>
    %94 = vector.broadcast %93 : vector<1x32xf32> to vector<8x32xf32>
    %95 = arith.addf %90, %94 : vector<8x32xf32>
    %96 = vector.extract_strided_slice %0 {offsets = [5, 0], sizes = [1, 32], strides = [1, 1]} : vector<8x32xf32> to vector<1x32xf32>
    %97 = vector.shape_cast %96 : vector<1x32xf32> to vector<32xf32>
    %98 = vector.extract_strided_slice %0 {offsets = [6, 0], sizes = [1, 32], strides = [1, 1]} : vector<8x32xf32> to vector<1x32xf32>
    %99 = vector.shape_cast %98 : vector<1x32xf32> to vector<32xf32>
    %100 = arith.addf %79, %95 : vector<8x32xf32>
    %cst_34 = arith.constant dense<0.000000e+00> : vector<8xf32>
    %101 = vector.multi_reduction <add>, %100, %cst_34 [1] : vector<8x32xf32> to vector<8xf32>
    %102 = vector.shape_cast %101 : vector<8xf32> to vector<8x1xf32>
    %cst_35 = arith.constant 3.200000e+01 : f32
    %103 = vector.broadcast %cst_35 : f32 to vector<8x1xf32>
    %104 = arith.divf %102, %103 : vector<8x1xf32>
    %105 = vector.broadcast %104 : vector<8x1xf32> to vector<8x32xf32>
    %106 = arith.subf %100, %105 : vector<8x32xf32>
    %107 = arith.mulf %106, %106 : vector<8x32xf32>
    %cst_36 = arith.constant dense<0.000000e+00> : vector<8xf32>
    %108 = vector.multi_reduction <add>, %107, %cst_36 [1] : vector<8x32xf32> to vector<8xf32>
    %109 = vector.shape_cast %108 : vector<8xf32> to vector<8x1xf32>
    %cst_37 = arith.constant 3.200000e+01 : f32
    %110 = vector.broadcast %cst_37 : f32 to vector<8x1xf32>
    %111 = arith.divf %109, %110 : vector<8x1xf32>
    %cst_38 = arith.constant 9.99999974E-6 : f32
    %112 = vector.broadcast %cst_38 : f32 to vector<8x1xf32>
    %113 = arith.addf %111, %112 : vector<8x1xf32>
    %114 = math.rsqrt %113 : vector<8x1xf32>
    %115 = vector.broadcast %114 : vector<8x1xf32> to vector<8x32xf32>
    %116 = arith.mulf %106, %115 : vector<8x32xf32>
    %117 = vector.shape_cast %97 : vector<32xf32> to vector<1x32xf32>
    %118 = vector.broadcast %117 : vector<1x32xf32> to vector<8x32xf32>
    %119 = arith.mulf %116, %118 : vector<8x32xf32>
    %120 = vector.shape_cast %99 : vector<32xf32> to vector<1x32xf32>
    %121 = vector.broadcast %120 : vector<1x32xf32> to vector<8x32xf32>
    %122 = arith.addf %119, %121 : vector<8x32xf32>
    %c0_39 = arith.constant 0 : index
    %c0_40 = arith.constant 0 : index
    %123 = vector.load %arg11[%c0_39, %c0_40] : memref<8x32xf32, #tpu.memory_space<vmem>>, vector<8x32xf32>
    tpu.vector_store %arg11[%c0_39, %c0_40], %122 {strides = array<i32>} : memref<8x32xf32, #tpu.memory_space<vmem>>, vector<8x32xf32>,
    return
  }
  func.func @transform_0(%arg0: i32) -> (i32, i32) {
    %c0_i32 = arith.constant 0 : i32
    %c0_i32_0 = arith.constant 0 : i32
    return %arg0, %c0_i32 : i32, i32
  }
  func.func @transform_1(%arg0: i32) -> (i32, i32) {
    %c0_i32 = arith.constant 0 : i32
    %c0_i32_0 = arith.constant 0 : i32
    %c0_i32_1 = arith.constant 0 : i32
    return %c0_i32, %c0_i32_0 : i32, i32
  }
  func.func @transform_2(%arg0: i32) -> (i32, i32) {
    %c0_i32 = arith.constant 0 : i32
    %c0_i32_0 = arith.constant 0 : i32
    %c0_i32_1 = arith.constant 0 : i32
    return %c0_i32, %c0_i32_0 : i32, i32
  }
  func.func @transform_3(%arg0: i32) -> (i32, i32) {
    %c0_i32 = arith.constant 0 : i32
    %c0_i32_0 = arith.constant 0 : i32
    %c0_i32_1 = arith.constant 0 : i32
    return %c0_i32, %c0_i32_0 : i32, i32
  }
  func.func @transform_4(%arg0: i32) -> (i32, i32) {
    %c0_i32 = arith.constant 0 : i32
    %c0_i32_0 = arith.constant 0 : i32
    %c0_i32_1 = arith.constant 0 : i32
    return %c0_i32, %c0_i32_0 : i32, i32
  }
  func.func @transform_5(%arg0: i32) -> (i32, i32) {
    %c0_i32 = arith.constant 0 : i32
    %c0_i32_0 = arith.constant 0 : i32
    %c0_i32_1 = arith.constant 0 : i32
    return %c0_i32, %c0_i32_0 : i32, i32
  }
  func.func @transform_6(%arg0: i32) -> (i32, i32) {
    %c0_i32 = arith.constant 0 : i32
    %c0_i32_0 = arith.constant 0 : i32
    %c0_i32_1 = arith.constant 0 : i32
    return %c0_i32, %c0_i32_0 : i32, i32
  }
  func.func @transform_7(%arg0: i32) -> (i32, i32) {
    %c0_i32 = arith.constant 0 : i32
    %c0_i32_0 = arith.constant 0 : i32
    %c0_i32_1 = arith.constant 0 : i32
    return %c0_i32, %c0_i32_0 : i32, i32
  }
  func.func @transform_8(%arg0: i32) -> (i32, i32) {
    %c0_i32 = arith.constant 0 : i32
    %c0_i32_0 = arith.constant 0 : i32
    %c0_i32_1 = arith.constant 0 : i32
    return %c0_i32, %c0_i32_0 : i32, i32
  }
  func.func @transform_9(%arg0: i32) -> (i32, i32) {
    %c0_i32 = arith.constant 0 : i32
    %c0_i32_0 = arith.constant 0 : i32
    %c0_i32_1 = arith.constant 0 : i32
    return %c0_i32, %c0_i32_0 : i32, i32
  }
  func.func @transform_10(%arg0: i32) -> (i32, i32) {
    %c0_i32 = arith.constant 0 : i32
    %c0_i32_0 = arith.constant 0 : i32
    return %arg0, %c0_i32 : i32, i32
  }
}

module attributes {stable_mosaic.version = 11 : i64} {
  func.func @_decoder_layer_kernel(%arg0: i32, %arg1: memref<8x32xf32, #tpu.memory_space<vmem>>, %arg2: memref<8x32xf32, #tpu.memory_space<vmem>>, %arg3: memref<8x32xf32, #tpu.memory_space<vmem>>, %arg4: memref<32x32xbf16, #tpu.memory_space<vmem>>, %arg5: memref<32x64xbf16, #tpu.memory_space<vmem>>, %arg6: memref<32x32xbf16, #tpu.memory_space<vmem>>, %arg7: memref<32x32xbf16, #tpu.memory_space<vmem>>, %arg8: memref<32x64xbf16, #tpu.memory_space<vmem>>, %arg9: memref<32x32xbf16, #tpu.memory_space<vmem>>, %arg10: memref<32x64xbf16, #tpu.memory_space<vmem>>, %arg11: memref<64x32xbf16, #tpu.memory_space<vmem>>, %arg12: memref<1x64xf32, #tpu.memory_space<vmem>>, %arg13: memref<1x64xf32, #tpu.memory_space<vmem>>, %arg14: memref<1x64xf32, #tpu.memory_space<vmem>>, %arg15: memref<16x32xf32, #tpu.memory_space<vmem>>, %arg16: memref<8x32xf32, #tpu.memory_space<vmem>>) attributes {dimension_semantics = [#tpu.dimension_semantics<parallel>], iteration_bounds = array<i64: 1>, scalar_prefetch = 0 : i64, scratch_operands = 0 : i64, tpu.core_type = #tpu.core_type<tc>, window_params = [{transform_indices = @transform_0, window_bounds = array<i64: 8, 32>}, {pipeline_mode = #tpu.pipeline_mode<synchronous>, transform_indices = @transform_1, window_bounds = array<i64: 8, 32>}, {pipeline_mode = #tpu.pipeline_mode<synchronous>, transform_indices = @transform_2, window_bounds = array<i64: 8, 32>}, {pipeline_mode = #tpu.pipeline_mode<synchronous>, transform_indices = @transform_3, window_bounds = array<i64: 32, 32>}, {pipeline_mode = #tpu.pipeline_mode<synchronous>, transform_indices = @transform_4, window_bounds = array<i64: 32, 64>}, {pipeline_mode = #tpu.pipeline_mode<synchronous>, transform_indices = @transform_5, window_bounds = array<i64: 32, 32>}, {pipeline_mode = #tpu.pipeline_mode<synchronous>, transform_indices = @transform_6, window_bounds = array<i64: 32, 32>}, {pipeline_mode = #tpu.pipeline_mode<synchronous>, transform_indices = @transform_7, window_bounds = array<i64: 32, 64>}, {pipeline_mode = #tpu.pipeline_mode<synchronous>, transform_indices = @transform_8, window_bounds = array<i64: 32, 32>}, {pipeline_mode = #tpu.pipeline_mode<synchronous>, transform_indices = @transform_9, window_bounds = array<i64: 32, 64>}, {pipeline_mode = #tpu.pipeline_mode<synchronous>, transform_indices = @transform_10, window_bounds = array<i64: 64, 32>}, {pipeline_mode = #tpu.pipeline_mode<synchronous>, transform_indices = @transform_11, window_bounds = array<i64: 1, 64>}, {pipeline_mode = #tpu.pipeline_mode<synchronous>, transform_indices = @transform_12, window_bounds = array<i64: 1, 64>}, {pipeline_mode = #tpu.pipeline_mode<synchronous>, transform_indices = @transform_13, window_bounds = array<i64: 1, 64>}, {pipeline_mode = #tpu.pipeline_mode<synchronous>, transform_indices = @transform_14, window_bounds = array<i64: 16, 32>}, {transform_indices = @transform_15, window_bounds = array<i64: 8, 32>}]} {
    %c0 = arith.constant 0 : index
    %c0_0 = arith.constant 0 : index
    %0 = vector.load %arg15[%c0, %c0_0] : memref<16x32xf32, #tpu.memory_space<vmem>>, vector<16x32xf32>
    %c0_1 = arith.constant 0 : index
    %c0_2 = arith.constant 0 : index
    %1 = vector.load %arg1[%c0_1, %c0_2] : memref<8x32xf32, #tpu.memory_space<vmem>>, vector<8x32xf32>
    %c0_3 = arith.constant 0 : index
    %c0_4 = arith.constant 0 : index
    %2 = vector.load %arg2[%c0_3, %c0_4] : memref<8x32xf32, #tpu.memory_space<vmem>>, vector<8x32xf32>
    %c0_5 = arith.constant 0 : index
    %c0_6 = arith.constant 0 : index
    %3 = vector.load %arg3[%c0_5, %c0_6] : memref<8x32xf32, #tpu.memory_space<vmem>>, vector<8x32xf32>
    %c8_i32 = arith.constant 8 : i32
    %4 = arith.muli %arg0, %c8_i32 : i32
    %5 = arith.truncf %1 : vector<8x32xf32> to vector<8x32xbf16>
    %c0_7 = arith.constant 0 : index
    %c0_8 = arith.constant 0 : index
    %6 = vector.load %arg4[%c0_7, %c0_8] : memref<32x32xbf16, #tpu.memory_space<vmem>>, vector<32x32xbf16>
    %cst = arith.constant dense<0.000000e+00> : vector<8x32xf32>
    %7 = tpu.matmul %5, %6, %cst {dimension_numbers = #tpu.dot_dimension_numbers<[1], [0], [0], [1], [0, 0, 1, 1], [], []>} : vector<8x32xbf16>, vector<32x32xbf16>, vector<8x32xf32> -> vector<8x32xf32>
    %8 = vector.extract_strided_slice %0 {offsets = [0, 0], sizes = [1, 32], strides = [1, 1]} : vector<16x32xf32> to vector<1x32xf32>
    %9 = vector.shape_cast %8 : vector<1x32xf32> to vector<32xf32>
    %10 = vector.shape_cast %9 : vector<32xf32> to vector<1x32xf32>
    %11 = vector.broadcast %10 : vector<1x32xf32> to vector<8x32xf32>
    %12 = arith.addf %7, %11 : vector<8x32xf32>
    %13 = arith.truncf %2 : vector<8x32xf32> to vector<8x32xbf16>
    %c0_9 = arith.constant 0 : index
    %c0_10 = arith.constant 0 : index
    %14 = vector.load %arg5[%c0_9, %c0_10] : memref<32x64xbf16, #tpu.memory_space<vmem>>, vector<32x64xbf16>
    %cst_11 = arith.constant dense<0.000000e+00> : vector<8x64xf32>
    %15 = tpu.matmul %13, %14, %cst_11 {dimension_numbers = #tpu.dot_dimension_numbers<[1], [0], [0], [1], [0, 0, 1, 1], [], []>} : vector<8x32xbf16>, vector<32x64xbf16>, vector<8x64xf32> -> vector<8x64xf32>
    %c0_12 = arith.constant 0 : index
    %c0_13 = arith.constant 0 : index
    %16 = vector.load %arg12[%c0_12, %c0_13] : memref<1x64xf32, #tpu.memory_space<vmem>>, vector<1x64xf32>
    %17 = vector.broadcast %16 : vector<1x64xf32> to vector<8x64xf32>
    %18 = arith.addf %15, %17 : vector<8x64xf32>
    %19 = vector.extract_strided_slice %18 {offsets = [0, 0], sizes = [8, 32], strides = [1, 1]} : vector<8x64xf32> to vector<8x32xf32>
    %20 = vector.extract_strided_slice %18 {offsets = [0, 32], sizes = [8, 32], strides = [1, 1]} : vector<8x64xf32> to vector<8x32xf32>
    %cst_14 = arith.constant 0.353553385 : f32
    %21 = vector.broadcast %cst_14 : f32 to vector<8x32xf32>
    %22 = arith.mulf %12, %21 : vector<8x32xf32>
    %23 = vector.shape_cast %22 : vector<8x32xf32> to vector<8x4x8xf32>
    %24 = tpu.transpose %23, [1, 0, 2] : vector<8x4x8xf32> -> vector<4x8x8xf32>
    %25 = arith.truncf %24 : vector<4x8x8xf32> to vector<4x8x8xbf16>
    %26 = vector.shape_cast %19 : vector<8x32xf32> to vector<8x4x8xf32>
    %27 = tpu.transpose %26, [1, 0, 2] : vector<8x4x8xf32> -> vector<4x8x8xf32>
    %28 = arith.truncf %27 : vector<4x8x8xf32> to vector<4x8x8xbf16>
    %29 = vector.shape_cast %20 : vector<8x32xf32> to vector<8x4x8xf32>
    %30 = tpu.transpose %29, [1, 0, 2] : vector<8x4x8xf32> -> vector<4x8x8xf32>
    %31 = arith.truncf %30 : vector<4x8x8xf32> to vector<4x8x8xbf16>
    "tpu.trace_start"() <{level = 10 : i32, message = "hqd,hkd->hqk"}> : () -> ()
    %cst_15 = arith.constant dense<0.000000e+00> : vector<4x8x8xf32>
    %32 = tpu.matmul %25, %28, %cst_15 {dimension_numbers = #tpu.dot_dimension_numbers<[2], [2], [1], [1], [0, 0, 0, 1, 1, 1], [0], [0]>} : vector<4x8x8xbf16>, vector<4x8x8xbf16>, vector<4x8x8xf32> -> vector<4x8x8xf32>
    "tpu.trace_stop"() : () -> ()
    %33 = tpu.iota {dimensions = array<i32: 0>} : vector<8x8xi32>
    %34 = vector.broadcast %4 : i32 to vector<8x8xi32>
    %35 = arith.addi %34, %33 : vector<8x8xi32>
    %36 = tpu.iota {dimensions = array<i32: 1>} : vector<8x8xi32>
    %37 = arith.cmpi sle, %36, %35 : vector<8x8xi32>
    %cst_16 = arith.constant 0.000000e+00 : f32
    %cst_17 = arith.constant -1.000000e+09 : f32
    %38 = vector.broadcast %cst_16 : f32 to vector<8x8xf32>
    %39 = vector.broadcast %cst_17 : f32 to vector<8x8xf32>
    %40 = arith.select %37, %38, %39 : vector<8x8xi1>, vector<8x8xf32>
    %41 = vector.shape_cast %40 : vector<8x8xf32> to vector<1x8x8xf32>
    %42 = vector.broadcast %41 : vector<1x8x8xf32> to vector<4x8x8xf32>
    %43 = arith.addf %32, %42 : vector<4x8x8xf32>
    %cst_18 = arith.constant dense<0xFF800000> : vector<4x8xf32>
    %44 = vector.multi_reduction <maximumf>, %43, %cst_18 [2] : vector<4x8x8xf32> to vector<4x8xf32>
    %45 = vector.shape_cast %44 : vector<4x8xf32> to vector<4x8x1xf32>
    %46 = vector.broadcast %45 : vector<4x8x1xf32> to vector<4x8x8xf32>
    %47 = arith.subf %43, %46 : vector<4x8x8xf32>
    %48 = math.exp %47 : vector<4x8x8xf32>
    %cst_19 = arith.constant dense<0.000000e+00> : vector<4x8xf32>
    %49 = vector.multi_reduction <add>, %48, %cst_19 [2] : vector<4x8x8xf32> to vector<4x8xf32>
    %50 = vector.shape_cast %49 : vector<4x8xf32> to vector<4x8x1xf32>
    %51 = tpu.reciprocal %50 {approx = true} : vector<4x8x1xf32> -> vector<4x8x1xf32>
    %52 = vector.broadcast %51 : vector<4x8x1xf32> to vector<4x8x8xf32>
    %53 = arith.mulf %48, %52 : vector<4x8x8xf32>
    %54 = arith.truncf %53 : vector<4x8x8xf32> to vector<4x8x8xbf16>
    "tpu.trace_start"() <{level = 10 : i32, message = "hqk,hkd->hqd"}> : () -> ()
    %cst_20 = arith.constant dense<0.000000e+00> : vector<4x8x8xf32>
    %55 = tpu.matmul %54, %31, %cst_20 {dimension_numbers = #tpu.dot_dimension_numbers<[2], [1], [1], [2], [0, 0, 0, 1, 1, 2], [0], [0]>} : vector<4x8x8xbf16>, vector<4x8x8xbf16>, vector<4x8x8xf32> -> vector<4x8x8xf32>
    "tpu.trace_stop"() : () -> ()
    %56 = tpu.transpose %55, [1, 0, 2] : vector<4x8x8xf32> -> vector<8x4x8xf32>
    %57 = vector.shape_cast %56 : vector<8x4x8xf32> to vector<8x32xf32>
    %58 = arith.truncf %57 : vector<8x32xf32> to vector<8x32xbf16>
    %c0_21 = arith.constant 0 : index
    %c0_22 = arith.constant 0 : index
    %59 = vector.load %arg6[%c0_21, %c0_22] : memref<32x32xbf16, #tpu.memory_space<vmem>>, vector<32x32xbf16>
    %cst_23 = arith.constant dense<0.000000e+00> : vector<8x32xf32>
    %60 = tpu.matmul %58, %59, %cst_23 {dimension_numbers = #tpu.dot_dimension_numbers<[1], [0], [0], [1], [0, 0, 1, 1], [], []>} : vector<8x32xbf16>, vector<32x32xbf16>, vector<8x32xf32> -> vector<8x32xf32>
    %61 = vector.extract_strided_slice %0 {offsets = [1, 0], sizes = [1, 32], strides = [1, 1]} : vector<16x32xf32> to vector<1x32xf32>
    %62 = vector.shape_cast %61 : vector<1x32xf32> to vector<32xf32>
    %63 = vector.shape_cast %62 : vector<32xf32> to vector<1x32xf32>
    %64 = vector.broadcast %63 : vector<1x32xf32> to vector<8x32xf32>
    %65 = arith.addf %60, %64 : vector<8x32xf32>
    %66 = vector.extract_strided_slice %0 {offsets = [2, 0], sizes = [1, 32], strides = [1, 1]} : vector<16x32xf32> to vector<1x32xf32>
    %67 = vector.shape_cast %66 : vector<1x32xf32> to vector<32xf32>
    %68 = vector.extract_strided_slice %0 {offsets = [3, 0], sizes = [1, 32], strides = [1, 1]} : vector<16x32xf32> to vector<1x32xf32>
    %69 = vector.shape_cast %68 : vector<1x32xf32> to vector<32xf32>
    %70 = arith.addf %1, %65 : vector<8x32xf32>
    %cst_24 = arith.constant dense<0.000000e+00> : vector<8xf32>
    %71 = vector.multi_reduction <add>, %70, %cst_24 [1] : vector<8x32xf32> to vector<8xf32>
    %72 = vector.shape_cast %71 : vector<8xf32> to vector<8x1xf32>
    %cst_25 = arith.constant 3.200000e+01 : f32
    %73 = vector.broadcast %cst_25 : f32 to vector<8x1xf32>
    %74 = arith.divf %72, %73 : vector<8x1xf32>
    %75 = vector.broadcast %74 : vector<8x1xf32> to vector<8x32xf32>
    %76 = arith.subf %70, %75 : vector<8x32xf32>
    %77 = arith.mulf %76, %76 : vector<8x32xf32>
    %cst_26 = arith.constant dense<0.000000e+00> : vector<8xf32>
    %78 = vector.multi_reduction <add>, %77, %cst_26 [1] : vector<8x32xf32> to vector<8xf32>
    %79 = vector.shape_cast %78 : vector<8xf32> to vector<8x1xf32>
    %cst_27 = arith.constant 3.200000e+01 : f32
    %80 = vector.broadcast %cst_27 : f32 to vector<8x1xf32>
    %81 = arith.divf %79, %80 : vector<8x1xf32>
    %cst_28 = arith.constant 9.99999974E-6 : f32
    %82 = vector.broadcast %cst_28 : f32 to vector<8x1xf32>
    %83 = arith.addf %81, %82 : vector<8x1xf32>
    %84 = math.rsqrt %83 : vector<8x1xf32>
    %85 = vector.broadcast %84 : vector<8x1xf32> to vector<8x32xf32>
    %86 = arith.mulf %76, %85 : vector<8x32xf32>
    %87 = vector.shape_cast %67 : vector<32xf32> to vector<1x32xf32>
    %88 = vector.broadcast %87 : vector<1x32xf32> to vector<8x32xf32>
    %89 = arith.mulf %86, %88 : vector<8x32xf32>
    %90 = vector.shape_cast %69 : vector<32xf32> to vector<1x32xf32>
    %91 = vector.broadcast %90 : vector<1x32xf32> to vector<8x32xf32>
    %92 = arith.addf %89, %91 : vector<8x32xf32>
    %93 = arith.truncf %92 : vector<8x32xf32> to vector<8x32xbf16>
    %c0_29 = arith.constant 0 : index
    %c0_30 = arith.constant 0 : index
    %94 = vector.load %arg7[%c0_29, %c0_30] : memref<32x32xbf16, #tpu.memory_space<vmem>>, vector<32x32xbf16>
    %cst_31 = arith.constant dense<0.000000e+00> : vector<8x32xf32>
    %95 = tpu.matmul %93, %94, %cst_31 {dimension_numbers = #tpu.dot_dimension_numbers<[1], [0], [0], [1], [0, 0, 1, 1], [], []>} : vector<8x32xbf16>, vector<32x32xbf16>, vector<8x32xf32> -> vector<8x32xf32>
    %96 = vector.extract_strided_slice %0 {offsets = [4, 0], sizes = [1, 32], strides = [1, 1]} : vector<16x32xf32> to vector<1x32xf32>
    %97 = vector.shape_cast %96 : vector<1x32xf32> to vector<32xf32>
    %98 = vector.shape_cast %97 : vector<32xf32> to vector<1x32xf32>
    %99 = vector.broadcast %98 : vector<1x32xf32> to vector<8x32xf32>
    %100 = arith.addf %95, %99 : vector<8x32xf32>
    %101 = arith.truncf %3 : vector<8x32xf32> to vector<8x32xbf16>
    %c0_32 = arith.constant 0 : index
    %c0_33 = arith.constant 0 : index
    %102 = vector.load %arg8[%c0_32, %c0_33] : memref<32x64xbf16, #tpu.memory_space<vmem>>, vector<32x64xbf16>
    %cst_34 = arith.constant dense<0.000000e+00> : vector<8x64xf32>
    %103 = tpu.matmul %101, %102, %cst_34 {dimension_numbers = #tpu.dot_dimension_numbers<[1], [0], [0], [1], [0, 0, 1, 1], [], []>} : vector<8x32xbf16>, vector<32x64xbf16>, vector<8x64xf32> -> vector<8x64xf32>
    %c0_35 = arith.constant 0 : index
    %c0_36 = arith.constant 0 : index
    %104 = vector.load %arg13[%c0_35, %c0_36] : memref<1x64xf32, #tpu.memory_space<vmem>>, vector<1x64xf32>
    %105 = vector.broadcast %104 : vector<1x64xf32> to vector<8x64xf32>
    %106 = arith.addf %103, %105 : vector<8x64xf32>
    %107 = vector.extract_strided_slice %106 {offsets = [0, 0], sizes = [8, 32], strides = [1, 1]} : vector<8x64xf32> to vector<8x32xf32>
    %108 = vector.extract_strided_slice %106 {offsets = [0, 32], sizes = [8, 32], strides = [1, 1]} : vector<8x64xf32> to vector<8x32xf32>
    %cst_37 = arith.constant 0.353553385 : f32
    %109 = vector.broadcast %cst_37 : f32 to vector<8x32xf32>
    %110 = arith.mulf %100, %109 : vector<8x32xf32>
    %111 = vector.shape_cast %110 : vector<8x32xf32> to vector<8x4x8xf32>
    %112 = tpu.transpose %111, [1, 0, 2] : vector<8x4x8xf32> -> vector<4x8x8xf32>
    %113 = arith.truncf %112 : vector<4x8x8xf32> to vector<4x8x8xbf16>
    %114 = vector.shape_cast %107 : vector<8x32xf32> to vector<8x4x8xf32>
    %115 = tpu.transpose %114, [1, 0, 2] : vector<8x4x8xf32> -> vector<4x8x8xf32>
    %116 = arith.truncf %115 : vector<4x8x8xf32> to vector<4x8x8xbf16>
    %117 = vector.shape_cast %108 : vector<8x32xf32> to vector<8x4x8xf32>
    %118 = tpu.transpose %117, [1, 0, 2] : vector<8x4x8xf32> -> vector<4x8x8xf32>
    %119 = arith.truncf %118 : vector<4x8x8xf32> to vector<4x8x8xbf16>
    "tpu.trace_start"() <{level = 10 : i32, message = "hqd,hkd->hqk"}> : () -> ()
    %cst_38 = arith.constant dense<0.000000e+00> : vector<4x8x8xf32>
    %120 = tpu.matmul %113, %116, %cst_38 {dimension_numbers = #tpu.dot_dimension_numbers<[2], [2], [1], [1], [0, 0, 0, 1, 1, 1], [0], [0]>} : vector<4x8x8xbf16>, vector<4x8x8xbf16>, vector<4x8x8xf32> -> vector<4x8x8xf32>
    "tpu.trace_stop"() : () -> ()
    %cst_39 = arith.constant dense<0xFF800000> : vector<4x8xf32>
    %121 = vector.multi_reduction <maximumf>, %120, %cst_39 [2] : vector<4x8x8xf32> to vector<4x8xf32>
    %122 = vector.shape_cast %121 : vector<4x8xf32> to vector<4x8x1xf32>
    %123 = vector.broadcast %122 : vector<4x8x1xf32> to vector<4x8x8xf32>
    %124 = arith.subf %120, %123 : vector<4x8x8xf32>
    %125 = math.exp %124 : vector<4x8x8xf32>
    %cst_40 = arith.constant dense<0.000000e+00> : vector<4x8xf32>
    %126 = vector.multi_reduction <add>, %125, %cst_40 [2] : vector<4x8x8xf32> to vector<4x8xf32>
    %127 = vector.shape_cast %126 : vector<4x8xf32> to vector<4x8x1xf32>
    %128 = tpu.reciprocal %127 {approx = true} : vector<4x8x1xf32> -> vector<4x8x1xf32>
    %129 = vector.broadcast %128 : vector<4x8x1xf32> to vector<4x8x8xf32>
    %130 = arith.mulf %125, %129 : vector<4x8x8xf32>
    %131 = arith.truncf %130 : vector<4x8x8xf32> to vector<4x8x8xbf16>
    "tpu.trace_start"() <{level = 10 : i32, message = "hqk,hkd->hqd"}> : () -> ()
    %cst_41 = arith.constant dense<0.000000e+00> : vector<4x8x8xf32>
    %132 = tpu.matmul %131, %119, %cst_41 {dimension_numbers = #tpu.dot_dimension_numbers<[2], [1], [1], [2], [0, 0, 0, 1, 1, 2], [0], [0]>} : vector<4x8x8xbf16>, vector<4x8x8xbf16>, vector<4x8x8xf32> -> vector<4x8x8xf32>
    "tpu.trace_stop"() : () -> ()
    %133 = tpu.transpose %132, [1, 0, 2] : vector<4x8x8xf32> -> vector<8x4x8xf32>
    %134 = vector.shape_cast %133 : vector<8x4x8xf32> to vector<8x32xf32>
    %135 = arith.truncf %134 : vector<8x32xf32> to vector<8x32xbf16>
    %c0_42 = arith.constant 0 : index
    %c0_43 = arith.constant 0 : index
    %136 = vector.load %arg9[%c0_42, %c0_43] : memref<32x32xbf16, #tpu.memory_space<vmem>>, vector<32x32xbf16>
    %cst_44 = arith.constant dense<0.000000e+00> : vector<8x32xf32>
    %137 = tpu.matmul %135, %136, %cst_44 {dimension_numbers = #tpu.dot_dimension_numbers<[1], [0], [0], [1], [0, 0, 1, 1], [], []>} : vector<8x32xbf16>, vector<32x32xbf16>, vector<8x32xf32> -> vector<8x32xf32>
    %138 = vector.extract_strided_slice %0 {offsets = [5, 0], sizes = [1, 32], strides = [1, 1]} : vector<16x32xf32> to vector<1x32xf32>
    %139 = vector.shape_cast %138 : vector<1x32xf32> to vector<32xf32>
    %140 = vector.shape_cast %139 : vector<32xf32> to vector<1x32xf32>
    %141 = vector.broadcast %140 : vector<1x32xf32> to vector<8x32xf32>
    %142 = arith.addf %137, %141 : vector<8x32xf32>
    %143 = vector.extract_strided_slice %0 {offsets = [6, 0], sizes = [1, 32], strides = [1, 1]} : vector<16x32xf32> to vector<1x32xf32>
    %144 = vector.shape_cast %143 : vector<1x32xf32> to vector<32xf32>
    %145 = vector.extract_strided_slice %0 {offsets = [7, 0], sizes = [1, 32], strides = [1, 1]} : vector<16x32xf32> to vector<1x32xf32>
    %146 = vector.shape_cast %145 : vector<1x32xf32> to vector<32xf32>
    %147 = arith.addf %92, %142 : vector<8x32xf32>
    %cst_45 = arith.constant dense<0.000000e+00> : vector<8xf32>
    %148 = vector.multi_reduction <add>, %147, %cst_45 [1] : vector<8x32xf32> to vector<8xf32>
    %149 = vector.shape_cast %148 : vector<8xf32> to vector<8x1xf32>
    %cst_46 = arith.constant 3.200000e+01 : f32
    %150 = vector.broadcast %cst_46 : f32 to vector<8x1xf32>
    %151 = arith.divf %149, %150 : vector<8x1xf32>
    %152 = vector.broadcast %151 : vector<8x1xf32> to vector<8x32xf32>
    %153 = arith.subf %147, %152 : vector<8x32xf32>
    %154 = arith.mulf %153, %153 : vector<8x32xf32>
    %cst_47 = arith.constant dense<0.000000e+00> : vector<8xf32>
    %155 = vector.multi_reduction <add>, %154, %cst_47 [1] : vector<8x32xf32> to vector<8xf32>
    %156 = vector.shape_cast %155 : vector<8xf32> to vector<8x1xf32>
    %cst_48 = arith.constant 3.200000e+01 : f32
    %157 = vector.broadcast %cst_48 : f32 to vector<8x1xf32>
    %158 = arith.divf %156, %157 : vector<8x1xf32>
    %cst_49 = arith.constant 9.99999974E-6 : f32
    %159 = vector.broadcast %cst_49 : f32 to vector<8x1xf32>
    %160 = arith.addf %158, %159 : vector<8x1xf32>
    %161 = math.rsqrt %160 : vector<8x1xf32>
    %162 = vector.broadcast %161 : vector<8x1xf32> to vector<8x32xf32>
    %163 = arith.mulf %153, %162 : vector<8x32xf32>
    %164 = vector.shape_cast %144 : vector<32xf32> to vector<1x32xf32>
    %165 = vector.broadcast %164 : vector<1x32xf32> to vector<8x32xf32>
    %166 = arith.mulf %163, %165 : vector<8x32xf32>
    %167 = vector.shape_cast %146 : vector<32xf32> to vector<1x32xf32>
    %168 = vector.broadcast %167 : vector<1x32xf32> to vector<8x32xf32>
    %169 = arith.addf %166, %168 : vector<8x32xf32>
    %170 = arith.truncf %169 : vector<8x32xf32> to vector<8x32xbf16>
    %c0_50 = arith.constant 0 : index
    %c0_51 = arith.constant 0 : index
    %171 = vector.load %arg10[%c0_50, %c0_51] : memref<32x64xbf16, #tpu.memory_space<vmem>>, vector<32x64xbf16>
    %cst_52 = arith.constant dense<0.000000e+00> : vector<8x64xf32>
    %172 = tpu.matmul %170, %171, %cst_52 {dimension_numbers = #tpu.dot_dimension_numbers<[1], [0], [0], [1], [0, 0, 1, 1], [], []>} : vector<8x32xbf16>, vector<32x64xbf16>, vector<8x64xf32> -> vector<8x64xf32>
    %c0_53 = arith.constant 0 : index
    %c0_54 = arith.constant 0 : index
    %173 = vector.load %arg14[%c0_53, %c0_54] : memref<1x64xf32, #tpu.memory_space<vmem>>, vector<1x64xf32>
    %174 = vector.broadcast %173 : vector<1x64xf32> to vector<8x64xf32>
    %175 = arith.addf %172, %174 : vector<8x64xf32>
    %cst_55 = arith.constant 0.000000e+00 : f32
    %176 = vector.broadcast %cst_55 : f32 to vector<8x64xf32>
    %177 = arith.maximumf %175, %176 : vector<8x64xf32>
    %178 = arith.truncf %177 : vector<8x64xf32> to vector<8x64xbf16>
    %c0_56 = arith.constant 0 : index
    %c0_57 = arith.constant 0 : index
    %179 = vector.load %arg11[%c0_56, %c0_57] : memref<64x32xbf16, #tpu.memory_space<vmem>>, vector<64x32xbf16>
    %cst_58 = arith.constant dense<0.000000e+00> : vector<8x32xf32>
    %180 = tpu.matmul %178, %179, %cst_58 {dimension_numbers = #tpu.dot_dimension_numbers<[1], [0], [0], [1], [0, 0, 1, 1], [], []>} : vector<8x64xbf16>, vector<64x32xbf16>, vector<8x32xf32> -> vector<8x32xf32>
    %181 = vector.extract_strided_slice %0 {offsets = [8, 0], sizes = [1, 32], strides = [1, 1]} : vector<16x32xf32> to vector<1x32xf32>
    %182 = vector.shape_cast %181 : vector<1x32xf32> to vector<32xf32>
    %183 = vector.shape_cast %182 : vector<32xf32> to vector<1x32xf32>
    %184 = vector.broadcast %183 : vector<1x32xf32> to vector<8x32xf32>
    %185 = arith.addf %180, %184 : vector<8x32xf32>
    %186 = vector.extract_strided_slice %0 {offsets = [9, 0], sizes = [1, 32], strides = [1, 1]} : vector<16x32xf32> to vector<1x32xf32>
    %187 = vector.shape_cast %186 : vector<1x32xf32> to vector<32xf32>
    %188 = vector.extract_strided_slice %0 {offsets = [10, 0], sizes = [1, 32], strides = [1, 1]} : vector<16x32xf32> to vector<1x32xf32>
    %189 = vector.shape_cast %188 : vector<1x32xf32> to vector<32xf32>
    %190 = arith.addf %169, %185 : vector<8x32xf32>
    %cst_59 = arith.constant dense<0.000000e+00> : vector<8xf32>
    %191 = vector.multi_reduction <add>, %190, %cst_59 [1] : vector<8x32xf32> to vector<8xf32>
    %192 = vector.shape_cast %191 : vector<8xf32> to vector<8x1xf32>
    %cst_60 = arith.constant 3.200000e+01 : f32
    %193 = vector.broadcast %cst_60 : f32 to vector<8x1xf32>
    %194 = arith.divf %192, %193 : vector<8x1xf32>
    %195 = vector.broadcast %194 : vector<8x1xf32> to vector<8x32xf32>
    %196 = arith.subf %190, %195 : vector<8x32xf32>
    %197 = arith.mulf %196, %196 : vector<8x32xf32>
    %cst_61 = arith.constant dense<0.000000e+00> : vector<8xf32>
    %198 = vector.multi_reduction <add>, %197, %cst_61 [1] : vector<8x32xf32> to vector<8xf32>
    %199 = vector.shape_cast %198 : vector<8xf32> to vector<8x1xf32>
    %cst_62 = arith.constant 3.200000e+01 : f32
    %200 = vector.broadcast %cst_62 : f32 to vector<8x1xf32>
    %201 = arith.divf %199, %200 : vector<8x1xf32>
    %cst_63 = arith.constant 9.99999974E-6 : f32
    %202 = vector.broadcast %cst_63 : f32 to vector<8x1xf32>
    %203 = arith.addf %201, %202 : vector<8x1xf32>
    %204 = math.rsqrt %203 : vector<8x1xf32>
    %205 = vector.broadcast %204 : vector<8x1xf32> to vector<8x32xf32>
    %206 = arith.mulf %196, %205 : vector<8x32xf32>
    %207 = vector.shape_cast %187 : vector<32xf32> to vector<1x32xf32>
    %208 = vector.broadcast %207 : vector<1x32xf32> to vector<8x32xf32>
    %209 = arith.mulf %206, %208 : vector<8x32xf32>
    %210 = vector.shape_cast %189 : vector<32xf32> to vector<1x32xf32>
    %211 = vector.broadcast %210 : vector<1x32xf32> to vector<8x32xf32>
    %212 = arith.addf %209, %211 : vector<8x32xf32>
    %c0_64 = arith.constant 0 : index
    %c0_65 = arith.constant 0 : index
    %213 = vector.load %arg16[%c0_64, %c0_65] : memref<8x32xf32, #tpu.memory_space<vmem>>, vector<8x32xf32>
    tpu.vector_store %arg16[%c0_64, %c0_65], %212 {strides = array<i32>} : memref<8x32xf32, #tpu.memory_space<vmem>>, vector<8x32xf32>,
    return
  }
  func.func @transform_0(%arg0: i32) -> (i32, i32) {
    %c0_i32 = arith.constant 0 : i32
    %c0_i32_0 = arith.constant 0 : i32
    return %arg0, %c0_i32 : i32, i32
  }
  func.func @transform_1(%arg0: i32) -> (i32, i32) {
    %c0_i32 = arith.constant 0 : i32
    %c0_i32_0 = arith.constant 0 : i32
    %c0_i32_1 = arith.constant 0 : i32
    return %c0_i32, %c0_i32_0 : i32, i32
  }
  func.func @transform_2(%arg0: i32) -> (i32, i32) {
    %c0_i32 = arith.constant 0 : i32
    %c0_i32_0 = arith.constant 0 : i32
    %c0_i32_1 = arith.constant 0 : i32
    return %c0_i32, %c0_i32_0 : i32, i32
  }
  func.func @transform_3(%arg0: i32) -> (i32, i32) {
    %c0_i32 = arith.constant 0 : i32
    %c0_i32_0 = arith.constant 0 : i32
    %c0_i32_1 = arith.constant 0 : i32
    return %c0_i32, %c0_i32_0 : i32, i32
  }
  func.func @transform_4(%arg0: i32) -> (i32, i32) {
    %c0_i32 = arith.constant 0 : i32
    %c0_i32_0 = arith.constant 0 : i32
    %c0_i32_1 = arith.constant 0 : i32
    return %c0_i32, %c0_i32_0 : i32, i32
  }
  func.func @transform_5(%arg0: i32) -> (i32, i32) {
    %c0_i32 = arith.constant 0 : i32
    %c0_i32_0 = arith.constant 0 : i32
    %c0_i32_1 = arith.constant 0 : i32
    return %c0_i32, %c0_i32_0 : i32, i32
  }
  func.func @transform_6(%arg0: i32) -> (i32, i32) {
    %c0_i32 = arith.constant 0 : i32
    %c0_i32_0 = arith.constant 0 : i32
    %c0_i32_1 = arith.constant 0 : i32
    return %c0_i32, %c0_i32_0 : i32, i32
  }
  func.func @transform_7(%arg0: i32) -> (i32, i32) {
    %c0_i32 = arith.constant 0 : i32
    %c0_i32_0 = arith.constant 0 : i32
    %c0_i32_1 = arith.constant 0 : i32
    return %c0_i32, %c0_i32_0 : i32, i32
  }
  func.func @transform_8(%arg0: i32) -> (i32, i32) {
    %c0_i32 = arith.constant 0 : i32
    %c0_i32_0 = arith.constant 0 : i32
    %c0_i32_1 = arith.constant 0 : i32
    return %c0_i32, %c0_i32_0 : i32, i32
  }
  func.func @transform_9(%arg0: i32) -> (i32, i32) {
    %c0_i32 = arith.constant 0 : i32
    %c0_i32_0 = arith.constant 0 : i32
    %c0_i32_1 = arith.constant 0 : i32
    return %c0_i32, %c0_i32_0 : i32, i32
  }
  func.func @transform_10(%arg0: i32) -> (i32, i32) {
    %c0_i32 = arith.constant 0 : i32
    %c0_i32_0 = arith.constant 0 : i32
    %c0_i32_1 = arith.constant 0 : i32
    return %c0_i32, %c0_i32_0 : i32, i32
  }
  func.func @transform_11(%arg0: i32) -> (i32, i32) {
    %c0_i32 = arith.constant 0 : i32
    %c0_i32_0 = arith.constant 0 : i32
    %c0_i32_1 = arith.constant 0 : i32
    return %c0_i32, %c0_i32_0 : i32, i32
  }
  func.func @transform_12(%arg0: i32) -> (i32, i32) {
    %c0_i32 = arith.constant 0 : i32
    %c0_i32_0 = arith.constant 0 : i32
    %c0_i32_1 = arith.constant 0 : i32
    return %c0_i32, %c0_i32_0 : i32, i32
  }
  func.func @transform_13(%arg0: i32) -> (i32, i32) {
    %c0_i32 = arith.constant 0 : i32
    %c0_i32_0 = arith.constant 0 : i32
    %c0_i32_1 = arith.constant 0 : i32
    return %c0_i32, %c0_i32_0 : i32, i32
  }
  func.func @transform_14(%arg0: i32) -> (i32, i32) {
    %c0_i32 = arith.constant 0 : i32
    %c0_i32_0 = arith.constant 0 : i32
    %c0_i32_1 = arith.constant 0 : i32
    return %c0_i32, %c0_i32_0 : i32, i32
  }
  func.func @transform_15(%arg0: i32) -> (i32, i32) {
    %c0_i32 = arith.constant 0 : i32
    %c0_i32_0 = arith.constant 0 : i32
    return %arg0, %c0_i32 : i32, i32
  }
}

</mosaic_0001>

<llo_original>
// kernel: transformer_forward.9
$region0: #{transformer_forward.9}
  #allocation0 [shape = 'u32[]', space=smem, size = 0x4, offset = 0x4, fixed_abs, tag = 'smem constant byte address 0x4 - core index']
  #allocation1 [shape = 'u32[144,128]{1,0:T(1,128)}', space=vmem, size = 0x12000, scoped, tag = 'internal scratch']
  %s0 = inlined_call_operand.vmem [shape: f32[8,32], index: 0, kind: input, shape index: {}]
  %s1 = inlined_call_operand.vmem [shape: bf16[32,128], index: 1, kind: input, shape index: {}]
  %s2 = inlined_call_operand.vmem [shape: f32[1,128], index: 2, kind: input, shape index: {}]
  %s3 = inlined_call_operand.hbm [shape: f32[8,128], index: 3, kind: output, shape index: {}]
  %s4 = sld [smem:[#allocation0]]
  $region22: #{transformer_forward.9} parent=0
    _
  %s6 = ssub.s32 1, %s4
  %s7 = scalar_select 0, %s6, %s4
  $region1: #{transformer_forward.9} parent=0
    #allocation2 [shape = 'u8[4096]{0}', space=vmem, size = 0x1000, scoped, tag = 'output window, operand 0, single buffered']
    #allocation3 [shape = 's32[1]{0}', space=sflag, size = 0x4, scoped, tag = 'scoped memory for transformer_forward.9']
    %8 = vsyncpa [#allocation3], 0
    // Predicated region
    $region2: #{transformer_forward.9} parent=1 // pred_check
      _
    $region3: #{transformer_forward.9} parent=1 // pred_check_branch
      %10 = sbr.rel (0) target = $region5
    $region4: #{transformer_forward.9} parent=1 // pred_region
      _
    $region5: #{transformer_forward.9} parent=1 // pred_fallthru
      _
    // Predicated region
    $region6: #{transformer_forward.9} parent=1 // pred_check
      _
    $region7: #{transformer_forward.9} parent=1 // pred_check_branch
      %12 = sbr.rel (0) target = $region9
    $region8: #{transformer_forward.9} parent=1 // pred_region
      _
    $region9: #{transformer_forward.9} parent=1 // pred_fallthru
      _
    // Predicated region
    $region10: #{transformer_forward.9} parent=1 // pred_check
      _
    $region11: #{transformer_forward.9} parent=1 // pred_check_branch
      %14 = sbr.rel (0) target = $region13
    $region12: #{transformer_forward.9} parent=1 // pred_region
      _
    $region13: #{transformer_forward.9} parent=1 // pred_fallthru
      _
    %v16 = vld [vmem:[%s0] sm:$0xff]
    %v17 = vpack.c.bf16 %v16, %v16
    %v18 = vld [vmem:[%s1] sm:$0xf]
    %v19 = vld [vmem:[%s1 + $0x4] sm:$0xf]
    %v20 = vld [vmem:[%s1 + $0x8] sm:$0xf]
    %v21 = vld [vmem:[%s1 + $0xc] sm:$0xf]
    %v22 = vld [vmem:[%s2] sm:$0x1]
    %v24 = vlaneseq
    %v25 = vshrl.u32 %v24, 7
    %v26 = vsub.s32 0, %v25
    %v27 = vrot.slane %v22, %v26
    %v33 = vunpack.c.l.b16 %v18
    %v34 = vunpack.c.l.b16 %v19
    %v35 = vunpack.c.l.b16 %v20
    %v36 = vunpack.c.l.b16 %v21
    %v37 = vpack.c.b16 %v34, %v33
    %v38 = vpack.c.b16 %v36, %v35
    %vm41 = vcmask 261120
    %v43 = vsel %vm41, %v17, 0
    %45 = vmatprep.subr.bf16.mxu0 0
    %46 = vmatpush1.bf16.msra.mxu0 %v37
    %47 = vmatprep.subr.bf16.mxu0 0
    %48 = vmatpush1.bf16.msra.mxu0 %v38
    %49 = vmatprep.subr.bf16.mxu0 0
    %50 = vmatpush1.bf16.msra.mxu0 0
    %51 = vmatprep.subr.bf16.mxu0 0
    %52 = vmatpush1.bf16.msra.mxu0 0
    %53 = vmatprep.subr.bf16.mxu0 0
    %54 = vmatpush1.bf16.msra.mxu0 0
    %55 = vmatprep.subr.bf16.mxu0 0
    %56 = vmatpush1.bf16.msra.mxu0 0
    %57 = vmatprep.subr.bf16.mxu0 0
    %58 = vmatpush1.bf16.msra.mxu0 0
    %59 = vmatprep.subr.bf16.mxu0 0
    %60 = vmatpush1.bf16.msra.mxu0 0
    %61 = vmatprep.subr.bf16.mxu0 0
    %62 = vmatpush1.bf16.msra.mxu0 0
    %63 = vmatprep.subr.bf16.mxu0 0
    %64 = vmatpush1.bf16.msra.mxu0 0
    %65 = vmatprep.subr.bf16.mxu0 0
    %66 = vmatpush1.bf16.msra.mxu0 0
    %67 = vmatprep.subr.bf16.mxu0 0
    %68 = vmatpush1.bf16.msra.mxu0 0
    %69 = vmatprep.subr.bf16.mxu0 0
    %70 = vmatpush1.bf16.msra.mxu0 0
    %71 = vmatprep.subr.bf16.mxu0 0
    %72 = vmatpush1.bf16.msra.mxu0 0
    %73 = vmatprep.subr.bf16.mxu0 0
    %74 = vmatpush1.bf16.msra.mxu0 0
    %75 = vmatprep.subr.bf16.mxu0 0
    %76 = vmatpush1.bf16.msra.mxu0 0
    %77 = vmatprep.mubr.bf16.mxu0 0
    %78 = vmatmul.mubr.bf16.gmra.mrb[0].mxu0 %v43
    %v79 = vpop.f32.mrb[0].mxu0
    %v80 = vadd.f32 %v27, %v79
    %v81 = vpop.f32.mrb[0].mxu0
    %v82 = vpop.f32.mrb[0].mxu0
    %v83 = vpop.f32.mrb[0].mxu0
    %84 = vdwg.mxu0
    %85 = vst [vmem:[#allocation2] sm:$0xff] %v80
    // Predicated region
    $region14: #{transformer_forward.9} parent=1 // pred_check
      _
    $region15: #{transformer_forward.9} parent=1 // pred_check_branch
      %87 = sbr.rel (0) target = $region17
    $region16: #{transformer_forward.9} parent=1 // pred_region
      %s89 = ssub.s32 128, 128
      %90 = vsyncadd [#allocation3], %s89
      %s92 = sshll.u32 [#allocation2], 4
      %s93 = int_to_ptr.vmem [resolvable:$true] %s92
      %95 = dma.vmem_to_hbm [thread:$0]  %s93, 128, %s3, [#allocation3]
    $region17: #{transformer_forward.9} parent=1 // pred_fallthru
      _
    // Predicated region
    $region18: #{transformer_forward.9} parent=1 // pred_check
      _
    $region19: #{transformer_forward.9} parent=1 // pred_check_branch
      %97 = sbr.rel (0) target = $region21
    $region20: #{transformer_forward.9} parent=1 // pred_region
      %98 = dma.done [#allocation3], 128
    $region21: #{transformer_forward.9} parent=1 // pred_fallthru
      _
    %99 = vsyncpa [#allocation3], 1

// kernel: transformer_forward.5
$region0: #{transformer_forward.5}
  #allocation0 [shape = 'u32[]', space=smem, size = 0x4, offset = 0x4, fixed_abs, tag = 'smem constant byte address 0x4 - core index']
  #allocation1 [shape = 'u32[144,128]{1,0:T(1,128)}', space=vmem, size = 0x12000, scoped, tag = 'internal scratch']
  %s0 = inlined_call_operand.vmem [shape: f32[8,32], index: 0, kind: input, shape index: {}, may-alias: {0,1}]
  %s1 = inlined_call_operand.vmem [shape: f32[8,32], index: 1, kind: input, shape index: {}, may-alias: {0,1}]
  %s2 = inlined_call_operand.vmem [shape: bf16[32,32], index: 2, kind: input, shape index: {}]
  %s3 = inlined_call_operand.vmem [shape: bf16[32,64], index: 3, kind: input, shape index: {}]
  %s4 = inlined_call_operand.vmem [shape: bf16[32,32], index: 4, kind: input, shape index: {}]
  %s5 = inlined_call_operand.vmem [shape: bf16[32,64], index: 5, kind: input, shape index: {}]
  %s6 = inlined_call_operand.vmem [shape: bf16[64,32], index: 6, kind: input, shape index: {}]
  %s7 = inlined_call_operand.vmem [shape: f32[1,64], index: 7, kind: input, shape index: {}]
  %s8 = inlined_call_operand.vmem [shape: f32[1,64], index: 8, kind: input, shape index: {}]
  %s9 = inlined_call_operand.vmem [shape: f32[8,32], index: 9, kind: input, shape index: {}]
  %s10 = inlined_call_operand.vmem [shape: f32[8,32], index: 10, kind: output, shape index: {}]
  %s11 = sld [smem:[#allocation0]]
  $region50: #{transformer_forward.5} parent=0
    _
  %s13 = ssub.s32 1, %s11
  %s14 = scalar_select 0, %s13, %s11
  // Predicated region
  $region2: #{transformer_forward.5} parent=0 // pred_check
    _
  $region3: #{transformer_forward.5} parent=0 // pred_check_branch
    %16 = sbr.rel (0) target = $region5
  $region4: #{transformer_forward.5} parent=0 // pred_region
    _
  $region5: #{transformer_forward.5} parent=0 // pred_fallthru
    _
  // Predicated region
  $region6: #{transformer_forward.5} parent=0 // pred_check
    _
  $region7: #{transformer_forward.5} parent=0 // pred_check_branch
    %18 = sbr.rel (0) target = $region9
  $region8: #{transformer_forward.5} parent=0 // pred_region
    _
  $region9: #{transformer_forward.5} parent=0 // pred_fallthru
    _
  // Predicated region
  $region10: #{transformer_forward.5} parent=0 // pred_check
    _
  $region11: #{transformer_forward.5} parent=0 // pred_check_branch
    %20 = sbr.rel (0) target = $region13
  $region12: #{transformer_forward.5} parent=0 // pred_region
    _
  $region13: #{transformer_forward.5} parent=0 // pred_fallthru
    _
  // Predicated region
  $region14: #{transformer_forward.5} parent=0 // pred_check
    _
  $region15: #{transformer_forward.5} parent=0 // pred_check_branch
    %22 = sbr.rel (0) target = $region17
  $region16: #{transformer_forward.5} parent=0 // pred_region
    _
  $region17: #{transformer_forward.5} parent=0 // pred_fallthru
    _
  // Predicated region
  $region18: #{transformer_forward.5} parent=0 // pred_check
    _
  $region19: #{transformer_forward.5} parent=0 // pred_check_branch
    %24 = sbr.rel (0) target = $region21
  $region20: #{transformer_forward.5} parent=0 // pred_region
    _
  $region21: #{transformer_forward.5} parent=0 // pred_fallthru
    _
  // Predicated region
  $region22: #{transformer_forward.5} parent=0 // pred_check
    _
  $region23: #{transformer_forward.5} parent=0 // pred_check_branch
    %26 = sbr.rel (0) target = $region25
  $region24: #{transformer_forward.5} parent=0 // pred_region
    _
  $region25: #{transformer_forward.5} parent=0 // pred_fallthru
    _
  // Predicated region
  $region26: #{transformer_forward.5} parent=0 // pred_check
    _
  $region27: #{transformer_forward.5} parent=0 // pred_check_branch
    %28 = sbr.rel (0) target = $region29
  $region28: #{transformer_forward.5} parent=0 // pred_region
    _
  $region29: #{transformer_forward.5} parent=0 // pred_fallthru
    _
  // Predicated region
  $region30: #{transformer_forward.5} parent=0 // pred_check
    _
  $region31: #{transformer_forward.5} parent=0 // pred_check_branch
    %30 = sbr.rel (0) target = $region33
  $region32: #{transformer_forward.5} parent=0 // pred_region
    _
  $region33: #{transformer_forward.5} parent=0 // pred_fallthru
    _
  // Predicated region
  $region34: #{transformer_forward.5} parent=0 // pred_check
    _
  $region35: #{transformer_forward.5} parent=0 // pred_check_branch
    %32 = sbr.rel (0) target = $region37
  $region36: #{transformer_forward.5} parent=0 // pred_region
    _
  $region37: #{transformer_forward.5} parent=0 // pred_fallthru
    _
  // Predicated region
  $region38: #{transformer_forward.5} parent=0 // pred_check
    _
  $region39: #{transformer_forward.5} parent=0 // pred_check_branch
    %34 = sbr.rel (0) target = $region41
  $region40: #{transformer_forward.5} parent=0 // pred_region
    _
  $region41: #{transformer_forward.5} parent=0 // pred_fallthru
    _
  %v36 = vld [vmem:[%s9] sm:$0xff]
  %v37 = vld [vmem:[%s0] sm:$0xff]
  %v38 = vld [vmem:[%s1] sm:$0xff]
  %v39 = vpack.c.bf16 %v37, %v37
  %v40 = vld [vmem:[%s2] sm:$0xf]
  %v41 = vld [vmem:[%s2 + $0x4] sm:$0xf]
  %v42 = vld [vmem:[%s2 + $0x8] sm:$0xf]
  %v43 = vld [vmem:[%s2 + $0xc] sm:$0xf]
  %v44 = vlaneseq
  %v45 = vshrl.u32 %v44, 7
  %v46 = vsub.s32 0, %v45
  %v47 = vrot.slane %v36, %v46
  %v52 = vunpack.c.l.b16 %v40
  %v53 = vunpack.c.l.b16 %v41
  %v54 = vunpack.c.l.b16 %v42
  %v55 = vunpack.c.l.b16 %v43
  %v56 = vpack.c.b16 %v53, %v52
  %v57 = vpack.c.b16 %v55, %v54
  %vm60 = vcmask 261120
  %v62 = vsel %vm60, %v39, 0
  %64 = vmatprep.subr.bf16.mxu0 0
  %65 = vmatpush1.bf16.msra.mxu0 %v56
  %66 = vmatprep.subr.bf16.mxu0 0
  %67 = vmatpush1.bf16.msra.mxu0 %v57
  %68 = vmatprep.subr.bf16.mxu0 0
  %69 = vmatpush1.bf16.msra.mxu0 0
  %70 = vmatprep.subr.bf16.mxu0 0
  %71 = vmatpush1.bf16.msra.mxu0 0
  %72 = vmatprep.subr.bf16.mxu0 0
  %73 = vmatpush1.bf16.msra.mxu0 0
  %74 = vmatprep.subr.bf16.mxu0 0
  %75 = vmatpush1.bf16.msra.mxu0 0
  %76 = vmatprep.subr.bf16.mxu0 0
  %77 = vmatpush1.bf16.msra.mxu0 0
  %78 = vmatprep.subr.bf16.mxu0 0
  %79 = vmatpush1.bf16.msra.mxu0 0
  %80 = vmatprep.subr.bf16.mxu0 0
  %81 = vmatpush1.bf16.msra.mxu0 0
  %82 = vmatprep.subr.bf16.mxu0 0
  %83 = vmatpush1.bf16.msra.mxu0 0
  %84 = vmatprep.subr.bf16.mxu0 0
  %85 = vmatpush1.bf16.msra.mxu0 0
  %86 = vmatprep.subr.bf16.mxu0 0
  %87 = vmatpush1.bf16.msra.mxu0 0
  %88 = vmatprep.subr.bf16.mxu0 0
  %89 = vmatpush1.bf16.msra.mxu0 0
  %90 = vmatprep.subr.bf16.mxu0 0
  %91 = vmatpush1.bf16.msra.mxu0 0
  %92 = vmatprep.subr.bf16.mxu0 0
  %93 = vmatpush1.bf16.msra.mxu0 0
  %94 = vmatprep.subr.bf16.mxu0 0
  %95 = vmatpush1.bf16.msra.mxu0 0
  %96 = vmatprep.mubr.bf16.mxu0 0
  %97 = vmatmul.mubr.bf16.gmra.mrb[0].mxu0 %v62
  %v98 = vpop.f32.mrb[0].mxu0
  %v99 = vadd.f32 %v47, %v98
  %v100 = vpop.f32.mrb[0].mxu0
  %v101 = vpop.f32.mrb[0].mxu0
  %v102 = vpop.f32.mrb[0].mxu0
  %103 = vdwg.mxu0
  %v104 = vpack.c.bf16 %v38, %v38
  %v105 = vld [vmem:[%s3] sm:$0xf]
  %v106 = vld [vmem:[%s3 + $0x4] sm:$0xf]
  %v107 = vld [vmem:[%s3 + $0x8] sm:$0xf]
  %v108 = vld [vmem:[%s3 + $0xc] sm:$0xf]
  %v109 = vld [vmem:[%s7] sm:$0x1]
  %v111 = vlaneseq
  %v112 = vshrl.u32 %v111, 7
  %v113 = vsub.s32 0, %v112
  %v114 = vrot.slane %v109, %v113
  %v120 = vunpack.c.l.b16 %v105
  %v121 = vunpack.c.l.b16 %v106
  %v122 = vunpack.c.l.b16 %v107
  %v123 = vunpack.c.l.b16 %v108
  %v124 = vpack.c.b16 %v121, %v120
  %v125 = vpack.c.b16 %v123, %v122
  %v129 = vsel %vm60, %v104, 0
  %131 = vmatprep.subr.bf16.mxu0 0
  %132 = vmatpush1.bf16.msra.mxu0 %v124
  %133 = vmatprep.subr.bf16.mxu0 0
  %134 = vmatpush1.bf16.msra.mxu0 %v125
  %135 = vmatprep.subr.bf16.mxu0 0
  %136 = vmatpush1.bf16.msra.mxu0 0
  %137 = vmatprep.subr.bf16.mxu0 0
  %138 = vmatpush1.bf16.msra.mxu0 0
  %139 = vmatprep.subr.bf16.mxu0 0
  %140 = vmatpush1.bf16.msra.mxu0 0
  %141 = vmatprep.subr.bf16.mxu0 0
  %142 = vmatpush1.bf16.msra.mxu0 0
  %143 = vmatprep.subr.bf16.mxu0 0
  %144 = vmatpush1.bf16.msra.mxu0 0
  %145 = vmatprep.subr.bf16.mxu0 0
  %146 = vmatpush1.bf16.msra.mxu0 0
  %147 = vmatprep.subr.bf16.mxu0 0
  %148 = vmatpush1.bf16.msra.mxu0 0
  %149 = vmatprep.subr.bf16.mxu0 0
  %150 = vmatpush1.bf16.msra.mxu0 0
  %151 = vmatprep.subr.bf16.mxu0 0
  %152 = vmatpush1.bf16.msra.mxu0 0
  %153 = vmatprep.subr.bf16.mxu0 0
  %154 = vmatpush1.bf16.msra.mxu0 0
  %155 = vmatprep.subr.bf16.mxu0 0
  %156 = vmatpush1.bf16.msra.mxu0 0
  %157 = vmatprep.subr.bf16.mxu0 0
  %158 = vmatpush1.bf16.msra.mxu0 0
  %159 = vmatprep.subr.bf16.mxu0 0
  %160 = vmatpush1.bf16.msra.mxu0 0
  %161 = vmatprep.subr.bf16.mxu0 0
  %162 = vmatpush1.bf16.msra.mxu0 0
  %163 = vmatprep.mubr.bf16.mxu0 0
  %164 = vmatmul.mubr.bf16.gmra.mrb[0].mxu0 %v129
  %v165 = vpop.f32.mrb[0].mxu0
  %v166 = vadd.f32 %v114, %v165
  %v167 = vpop.f32.mrb[0].mxu0
  %v168 = vpop.f32.mrb[0].mxu0
  %v169 = vpop.f32.mrb[0].mxu0
  %170 = vdwg.mxu0
  %v171 = vmul.f32 %v99, 0.35355338
  %173 = vrot.lane.b32.xlu0 %v171, 120
  %v174 = vpop.permute.xlu0 %173
  %176 = vrot.lane.b32.xlu0 %v171, 112
  %v177 = vpop.permute.xlu0 %176
  %179 = vrot.lane.b32.xlu0 %v171, 104
  %v180 = vpop.permute.xlu0 %179
  %v182 = vcombine.low %v171, %v177
  %v183 = vcombine.high %v171, %v177
  %v185 = vunpack.c.l.s4 1983009808
  %v186 = vunpack.c.0.s8 %v185
  %v187 = vlaneseq
  %v188 = vshrl.u32 %v187, 7
  %v189 = vsub.s32 %v186, %v188
  %v190 = vrot.slane %v182, %v189
  %v192 = vunpack.c.l.s4 1983009808
  %v193 = vunpack.c.0.s8 %v192
  %v194 = vlaneseq
  %v195 = vshrl.u32 %v194, 7
  %v196 = vsub.s32 %v193, %v195
  %v197 = vrot.slane %v183, %v196
  %v198 = vcombine.low %v174, %v180
  %v199 = vcombine.high %v174, %v180
  %v201 = vunpack.c.l.s4 1983009808
  %v202 = vunpack.c.0.s8 %v201
  %v203 = vlaneseq
  %v204 = vshrl.u32 %v203, 7
  %v205 = vsub.s32 %v202, %v204
  %v206 = vrot.slane %v198, %v205
  %v208 = vunpack.c.l.s4 1983009808
  %v209 = vunpack.c.0.s8 %v208
  %v210 = vlaneseq
  %v211 = vshrl.u32 %v210, 7
  %v212 = vsub.s32 %v209, %v211
  %v213 = vrot.slane %v199, %v212
  %v214 = vcombine.low %v190, %v206
  %v215 = vcombine.high %v190, %v206
  %v217 = vunpack.c.l.s4 1934713408
  %v218 = vunpack.c.0.s8 %v217
  %v219 = vlaneseq
  %v220 = vshrl.u32 %v219, 7
  %v221 = vsub.s32 %v218, %v220
  %v222 = vrot.slane %v214, %v221
  %v224 = vunpack.c.l.s4 1934713408
  %v225 = vunpack.c.0.s8 %v224
  %v226 = vlaneseq
  %v227 = vshrl.u32 %v226, 7
  %v228 = vsub.s32 %v225, %v227
  %v229 = vrot.slane %v215, %v228
  %v230 = vcombine.low %v197, %v213
  %v231 = vcombine.high %v197, %v213
  %v233 = vunpack.c.l.s4 1934713408
  %v234 = vunpack.c.0.s8 %v233
  %v235 = vlaneseq
  %v236 = vshrl.u32 %v235, 7
  %v237 = vsub.s32 %v234, %v236
  %v238 = vrot.slane %v230, %v237
  %v240 = vunpack.c.l.s4 1934713408
  %v241 = vunpack.c.0.s8 %v240
  %v242 = vlaneseq
  %v243 = vshrl.u32 %v242, 7
  %v244 = vsub.s32 %v241, %v243
  %v245 = vrot.slane %v231, %v244
  %v246 = vcombine.high %v222, 0.0
  %v247 = vcombine.high %v229, 0.0
  %v248 = vcombine.high %v238, 0.0
  %v249 = vcombine.high %v245, 0.0
  %v250 = vcombine.low %v222, %v229
  %v252 = vunpack.c.l.s4 1983009808
  %v253 = vunpack.c.0.s8 %v252
  %v254 = vlaneseq
  %v255 = vshrl.u32 %v254, 7
  %v256 = vsub.s32 %v253, %v255
  %v257 = vrot.slane %v250, %v256
  %v258 = vcombine.low %v246, %v247
  %v260 = vunpack.c.l.s4 1983009808
  %v261 = vunpack.c.0.s8 %v260
  %v262 = vlaneseq
  %v263 = vshrl.u32 %v262, 7
  %v264 = vsub.s32 %v261, %v263
  %v265 = vrot.slane %v258, %v264
  %v266 = vcombine.low %v238, %v245
  %v268 = vunpack.c.l.s4 1983009808
  %v269 = vunpack.c.0.s8 %v268
  %v270 = vlaneseq
  %v271 = vshrl.u32 %v270, 7
  %v272 = vsub.s32 %v269, %v271
  %v273 = vrot.slane %v266, %v272
  %v274 = vcombine.low %v248, %v249
  %v276 = vunpack.c.l.s4 1983009808
  %v277 = vunpack.c.0.s8 %v276
  %v278 = vlaneseq
  %v279 = vshrl.u32 %v278, 7
  %v280 = vsub.s32 %v277, %v279
  %v281 = vrot.slane %v274, %v280
  %v282 = vcombine.low %v257, %v265
  %v283 = vcombine.high %v257, %v265
  %v285 = vunpack.c.l.s4 1934713408
  %v286 = vunpack.c.0.s8 %v285
  %v287 = vlaneseq
  %v288 = vshrl.u32 %v287, 7
  %v289 = vsub.s32 %v286, %v288
  %v290 = vrot.slane %v282, %v289
  %v292 = vunpack.c.l.s4 1934713408
  %v293 = vunpack.c.0.s8 %v292
  %v294 = vlaneseq
  %v295 = vshrl.u32 %v294, 7
  %v296 = vsub.s32 %v293, %v295
  %v297 = vrot.slane %v283, %v296
  %v298 = vcombine.low %v273, %v281
  %v299 = vcombine.high %v273, %v281
  %v301 = vunpack.c.l.s4 1934713408
  %v302 = vunpack.c.0.s8 %v301
  %v303 = vlaneseq
  %v304 = vshrl.u32 %v303, 7
  %v305 = vsub.s32 %v302, %v304
  %v306 = vrot.slane %v298, %v305
  %v308 = vunpack.c.l.s4 1934713408
  %v309 = vunpack.c.0.s8 %v308
  %v310 = vlaneseq
  %v311 = vshrl.u32 %v310, 7
  %v312 = vsub.s32 %v309, %v311
  %v313 = vrot.slane %v299, %v312
  %v314 = vcombine.low %v290, %v306
  %v315 = vcombine.high %v290, %v306
  %v316 = vcombine.low %v297, %v313
  %v317 = vcombine.high %v297, %v313
  %v318 = vpack.c.bf16 %v314, %v314
  %v319 = vpack.c.bf16 %v315, %v315
  %v320 = vpack.c.bf16 %v316, %v316
  %v321 = vpack.c.bf16 %v317, %v317
  %323 = vrot.lane.b32.xlu0 %v166, 120
  %v324 = vpop.permute.xlu0 %323
  %326 = vrot.lane.b32.xlu0 %v166, 112
  %v327 = vpop.permute.xlu0 %326
  %329 = vrot.lane.b32.xlu0 %v166, 104
  %v330 = vpop.permute.xlu0 %329
  %v332 = vcombine.low %v166, %v327
  %v333 = vcombine.high %v166, %v327
  %v335 = vunpack.c.l.s4 1983009808
  %v336 = vunpack.c.0.s8 %v335
  %v337 = vlaneseq
  %v338 = vshrl.u32 %v337, 7
  %v339 = vsub.s32 %v336, %v338
  %v340 = vrot.slane %v332, %v339
  %v342 = vunpack.c.l.s4 1983009808
  %v343 = vunpack.c.0.s8 %v342
  %v344 = vlaneseq
  %v345 = vshrl.u32 %v344, 7
  %v346 = vsub.s32 %v343, %v345
  %v347 = vrot.slane %v333, %v346
  %v348 = vcombine.low %v324, %v330
  %v349 = vcombine.high %v324, %v330
  %v351 = vunpack.c.l.s4 1983009808
  %v352 = vunpack.c.0.s8 %v351
  %v353 = vlaneseq
  %v354 = vshrl.u32 %v353, 7
  %v355 = vsub.s32 %v352, %v354
  %v356 = vrot.slane %v348, %v355
  %v358 = vunpack.c.l.s4 1983009808
  %v359 = vunpack.c.0.s8 %v358
  %v360 = vlaneseq
  %v361 = vshrl.u32 %v360, 7
  %v362 = vsub.s32 %v359, %v361
  %v363 = vrot.slane %v349, %v362
  %v364 = vcombine.low %v340, %v356
  %v365 = vcombine.high %v340, %v356
  %v367 = vunpack.c.l.s4 1934713408
  %v368 = vunpack.c.0.s8 %v367
  %v369 = vlaneseq
  %v370 = vshrl.u32 %v369, 7
  %v371 = vsub.s32 %v368, %v370
  %v372 = vrot.slane %v364, %v371
  %v374 = vunpack.c.l.s4 1934713408
  %v375 = vunpack.c.0.s8 %v374
  %v376 = vlaneseq
  %v377 = vshrl.u32 %v376, 7
  %v378 = vsub.s32 %v375, %v377
  %v379 = vrot.slane %v365, %v378
  %v380 = vcombine.low %v347, %v363
  %v381 = vcombine.high %v347, %v363
  %v383 = vunpack.c.l.s4 1934713408
  %v384 = vunpack.c.0.s8 %v383
  %v385 = vlaneseq
  %v386 = vshrl.u32 %v385, 7
  %v387 = vsub.s32 %v384, %v386
  %v388 = vrot.slane %v380, %v387
  %v390 = vunpack.c.l.s4 1934713408
  %v391 = vunpack.c.0.s8 %v390
  %v392 = vlaneseq
  %v393 = vshrl.u32 %v392, 7
  %v394 = vsub.s32 %v391, %v393
  %v395 = vrot.slane %v381, %v394
  %v396 = vcombine.high %v372, 0.0
  %v397 = vcombine.high %v379, 0.0
  %v398 = vcombine.high %v388, 0.0
  %v399 = vcombine.high %v395, 0.0
  %v400 = vcombine.low %v372, %v379
  %v402 = vunpack.c.l.s4 1983009808
  %v403 = vunpack.c.0.s8 %v402
  %v404 = vlaneseq
  %v405 = vshrl.u32 %v404, 7
  %v406 = vsub.s32 %v403, %v405
  %v407 = vrot.slane %v400, %v406
  %v408 = vcombine.low %v396, %v397
  %v410 = vunpack.c.l.s4 1983009808
  %v411 = vunpack.c.0.s8 %v410
  %v412 = vlaneseq
  %v413 = vshrl.u32 %v412, 7
  %v414 = vsub.s32 %v411, %v413
  %v415 = vrot.slane %v408, %v414
  %v416 = vcombine.low %v388, %v395
  %v418 = vunpack.c.l.s4 1983009808
  %v419 = vunpack.c.0.s8 %v418
  %v420 = vlaneseq
  %v421 = vshrl.u32 %v420, 7
  %v422 = vsub.s32 %v419, %v421
  %v423 = vrot.slane %v416, %v422
  %v424 = vcombine.low %v398, %v399
  %v426 = vunpack.c.l.s4 1983009808
  %v427 = vunpack.c.0.s8 %v426
  %v428 = vlaneseq
  %v429 = vshrl.u32 %v428, 7
  %v430 = vsub.s32 %v427, %v429
  %v431 = vrot.slane %v424, %v430
  %v432 = vcombine.low %v407, %v415
  %v433 = vcombine.high %v407, %v415
  %v435 = vunpack.c.l.s4 1934713408
  %v436 = vunpack.c.0.s8 %v435
  %v437 = vlaneseq
  %v438 = vshrl.u32 %v437, 7
  %v439 = vsub.s32 %v436, %v438
  %v440 = vrot.slane %v432, %v439
  %v442 = vunpack.c.l.s4 1934713408
  %v443 = vunpack.c.0.s8 %v442
  %v444 = vlaneseq
  %v445 = vshrl.u32 %v444, 7
  %v446 = vsub.s32 %v443, %v445
  %v447 = vrot.slane %v433, %v446
  %v448 = vcombine.low %v423, %v431
  %v449 = vcombine.high %v423, %v431
  %v451 = vunpack.c.l.s4 1934713408
  %v452 = vunpack.c.0.s8 %v451
  %v453 = vlaneseq
  %v454 = vshrl.u32 %v453, 7
  %v455 = vsub.s32 %v452, %v454
  %v456 = vrot.slane %v448, %v455
  %v458 = vunpack.c.l.s4 1934713408
  %v459 = vunpack.c.0.s8 %v458
  %v460 = vlaneseq
  %v461 = vshrl.u32 %v460, 7
  %v462 = vsub.s32 %v459, %v461
  %v463 = vrot.slane %v449, %v462
  %v464 = vcombine.low %v440, %v456
  %v465 = vcombine.high %v440, %v456
  %v466 = vcombine.low %v447, %v463
  %v467 = vcombine.high %v447, %v463
  %v468 = vpack.c.bf16 %v464, %v464
  %v469 = vpack.c.bf16 %v465, %v465
  %v470 = vpack.c.bf16 %v466, %v466
  %v471 = vpack.c.bf16 %v467, %v467
  %472 = vrot.lane.b32.xlu0 %v166, 96
  %v473 = vpop.permute.xlu0 %472
  %474 = vrot.lane.b32.xlu0 %v324, 96
  %v475 = vpop.permute.xlu0 %474
  %476 = vrot.lane.b32.xlu0 %v327, 96
  %v477 = vpop.permute.xlu0 %476
  %478 = vrot.lane.b32.xlu0 %v330, 96
  %v479 = vpop.permute.xlu0 %478
  %v484 = vcombine.low %v473, %v477
  %v485 = vcombine.high %v473, %v477
  %v487 = vunpack.c.l.s4 1983009808
  %v488 = vunpack.c.0.s8 %v487
  %v489 = vlaneseq
  %v490 = vshrl.u32 %v489, 7
  %v491 = vsub.s32 %v488, %v490
  %v492 = vrot.slane %v484, %v491
  %v494 = vunpack.c.l.s4 1983009808
  %v495 = vunpack.c.0.s8 %v494
  %v496 = vlaneseq
  %v497 = vshrl.u32 %v496, 7
  %v498 = vsub.s32 %v495, %v497
  %v499 = vrot.slane %v485, %v498
  %v500 = vcombine.low %v475, %v479
  %v501 = vcombine.high %v475, %v479
  %v503 = vunpack.c.l.s4 1983009808
  %v504 = vunpack.c.0.s8 %v503
  %v505 = vlaneseq
  %v506 = vshrl.u32 %v505, 7
  %v507 = vsub.s32 %v504, %v506
  %v508 = vrot.slane %v500, %v507
  %v510 = vunpack.c.l.s4 1983009808
  %v511 = vunpack.c.0.s8 %v510
  %v512 = vlaneseq
  %v513 = vshrl.u32 %v512, 7
  %v514 = vsub.s32 %v511, %v513
  %v515 = vrot.slane %v501, %v514
  %v516 = vcombine.low %v492, %v508
  %v517 = vcombine.high %v492, %v508
  %v519 = vunpack.c.l.s4 1934713408
  %v520 = vunpack.c.0.s8 %v519
  %v521 = vlaneseq
  %v522 = vshrl.u32 %v521, 7
  %v523 = vsub.s32 %v520, %v522
  %v524 = vrot.slane %v516, %v523
  %v526 = vunpack.c.l.s4 1934713408
  %v527 = vunpack.c.0.s8 %v526
  %v528 = vlaneseq
  %v529 = vshrl.u32 %v528, 7
  %v530 = vsub.s32 %v527, %v529
  %v531 = vrot.slane %v517, %v530
  %v532 = vcombine.low %v499, %v515
  %v533 = vcombine.high %v499, %v515
  %v535 = vunpack.c.l.s4 1934713408
  %v536 = vunpack.c.0.s8 %v535
  %v537 = vlaneseq
  %v538 = vshrl.u32 %v537, 7
  %v539 = vsub.s32 %v536, %v538
  %v540 = vrot.slane %v532, %v539
  %v542 = vunpack.c.l.s4 1934713408
  %v543 = vunpack.c.0.s8 %v542
  %v544 = vlaneseq
  %v545 = vshrl.u32 %v544, 7
  %v546 = vsub.s32 %v543, %v545
  %v547 = vrot.slane %v533, %v546
  %v548 = vcombine.high %v524, 0.0
  %v549 = vcombine.high %v531, 0.0
  %v550 = vcombine.high %v540, 0.0
  %v551 = vcombine.high %v547, 0.0
  %v552 = vcombine.low %v524, %v531
  %v554 = vunpack.c.l.s4 1983009808
  %v555 = vunpack.c.0.s8 %v554
  %v556 = vlaneseq
  %v557 = vshrl.u32 %v556, 7
  %v558 = vsub.s32 %v555, %v557
  %v559 = vrot.slane %v552, %v558
  %v560 = vcombine.low %v548, %v549
  %v562 = vunpack.c.l.s4 1983009808
  %v563 = vunpack.c.0.s8 %v562
  %v564 = vlaneseq
  %v565 = vshrl.u32 %v564, 7
  %v566 = vsub.s32 %v563, %v565
  %v567 = vrot.slane %v560, %v566
  %v568 = vcombine.low %v540, %v547
  %v570 = vunpack.c.l.s4 1983009808
  %v571 = vunpack.c.0.s8 %v570
  %v572 = vlaneseq
  %v573 = vshrl.u32 %v572, 7
  %v574 = vsub.s32 %v571, %v573
  %v575 = vrot.slane %v568, %v574
  %v576 = vcombine.low %v550, %v551
  %v578 = vunpack.c.l.s4 1983009808
  %v579 = vunpack.c.0.s8 %v578
  %v580 = vlaneseq
  %v581 = vshrl.u32 %v580, 7
  %v582 = vsub.s32 %v579, %v581
  %v583 = vrot.slane %v576, %v582
  %v584 = vcombine.low %v559, %v567
  %v585 = vcombine.high %v559, %v567
  %v587 = vunpack.c.l.s4 1934713408
  %v588 = vunpack.c.0.s8 %v587
  %v589 = vlaneseq
  %v590 = vshrl.u32 %v589, 7
  %v591 = vsub.s32 %v588, %v590
  %v592 = vrot.slane %v584, %v591
  %v594 = vunpack.c.l.s4 1934713408
  %v595 = vunpack.c.0.s8 %v594
  %v596 = vlaneseq
  %v597 = vshrl.u32 %v596, 7
  %v598 = vsub.s32 %v595, %v597
  %v599 = vrot.slane %v585, %v598
  %v600 = vcombine.low %v575, %v583
  %v601 = vcombine.high %v575, %v583
  %v603 = vunpack.c.l.s4 1934713408
  %v604 = vunpack.c.0.s8 %v603
  %v605 = vlaneseq
  %v606 = vshrl.u32 %v605, 7
  %v607 = vsub.s32 %v604, %v606
  %v608 = vrot.slane %v600, %v607
  %v610 = vunpack.c.l.s4 1934713408
  %v611 = vunpack.c.0.s8 %v610
  %v612 = vlaneseq
  %v613 = vshrl.u32 %v612, 7
  %v614 = vsub.s32 %v611, %v613
  %v615 = vrot.slane %v601, %v614
  %v616 = vcombine.low %v592, %v608
  %v617 = vcombine.high %v592, %v608
  %v618 = vcombine.low %v599, %v615
  %v619 = vcombine.high %v599, %v615
  %v620 = vpack.c.bf16 %v616, %v616
  %v621 = vpack.c.bf16 %v617, %v617
  %v622 = vpack.c.bf16 %v618, %v618
  %v623 = vpack.c.bf16 %v619, %v619
  %vm624 = vcmask 64512
  %v626 = vsel %vm624, %v318, 0
  %v629 = vsel %vm624, %v468, 0
  %631 = vmatprep.subr.bf16.mxu0 0
  %632 = vmatpush1.bf16.xpose.msra.mxu0 %v629
  %633 = vmatprep.subr.bf16.mxu0 0
  %634 = vmatpush1.bf16.xpose.msra.mxu0 0
  %635 = vmatprep.subr.bf16.mxu0 0
  %636 = vmatpush1.bf16.xpose.msra.mxu0 0
  %637 = vmatprep.subr.bf16.mxu0 0
  %638 = vmatpush1.bf16.xpose.msra.mxu0 0
  %639 = vmatprep.subr.bf16.mxu0 0
  %640 = vmatpush1.bf16.xpose.msra.mxu0 0
  %641 = vmatprep.subr.bf16.mxu0 0
  %642 = vmatpush1.bf16.xpose.msra.mxu0 0
  %643 = vmatprep.subr.bf16.mxu0 0
  %644 = vmatpush1.bf16.xpose.msra.mxu0 0
  %645 = vmatprep.subr.bf16.mxu0 0
  %646 = vmatpush1.bf16.xpose.msra.mxu0 0
  %647 = vmatprep.subr.bf16.mxu0 0
  %648 = vmatpush1.bf16.xpose.msra.mxu0 0
  %649 = vmatprep.subr.bf16.mxu0 0
  %650 = vmatpush1.bf16.xpose.msra.mxu0 0
  %651 = vmatprep.subr.bf16.mxu0 0
  %652 = vmatpush1.bf16.xpose.msra.mxu0 0
  %653 = vmatprep.subr.bf16.mxu0 0
  %654 = vmatpush1.bf16.xpose.msra.mxu0 0
  %655 = vmatprep.subr.bf16.mxu0 0
  %656 = vmatpush1.bf16.xpose.msra.mxu0 0
  %657 = vmatprep.subr.bf16.mxu0 0
  %658 = vmatpush1.bf16.xpose.msra.mxu0 0
  %659 = vmatprep.subr.bf16.mxu0 0
  %660 = vmatpush1.bf16.xpose.msra.mxu0 0
  %661 = vmatprep.subr.bf16.mxu0 0
  %662 = vmatpush1.bf16.xpose.msra.mxu0 0
  %663 = vmatprep.mubr.bf16.mxu0 0
  %664 = vmatmul.mubr.bf16.gmra.mrb[0].mxu0 %v626
  %v665 = vpop.f32.mrb[0].mxu0
  %v666 = vadd.f32 0.0, %v665
  %v667 = vpop.f32.mrb[0].mxu0
  %v668 = vpop.f32.mrb[0].mxu0
  %v669 = vpop.f32.mrb[0].mxu0
  %670 = vdwg.mxu0
  %v672 = vsel %vm624, %v319, 0
  %v675 = vsel %vm624, %v469, 0
  %677 = vmatprep.subr.bf16.mxu0 0
  %678 = vmatpush1.bf16.xpose.msra.mxu0 %v675
  %679 = vmatprep.subr.bf16.mxu0 0
  %680 = vmatpush1.bf16.xpose.msra.mxu0 0
  %681 = vmatprep.subr.bf16.mxu0 0
  %682 = vmatpush1.bf16.xpose.msra.mxu0 0
  %683 = vmatprep.subr.bf16.mxu0 0
  %684 = vmatpush1.bf16.xpose.msra.mxu0 0
  %685 = vmatprep.subr.bf16.mxu0 0
  %686 = vmatpush1.bf16.xpose.msra.mxu0 0
  %687 = vmatprep.subr.bf16.mxu0 0
  %688 = vmatpush1.bf16.xpose.msra.mxu0 0
  %689 = vmatprep.subr.bf16.mxu0 0
  %690 = vmatpush1.bf16.xpose.msra.mxu0 0
  %691 = vmatprep.subr.bf16.mxu0 0
  %692 = vmatpush1.bf16.xpose.msra.mxu0 0
  %693 = vmatprep.subr.bf16.mxu0 0
  %694 = vmatpush1.bf16.xpose.msra.mxu0 0
  %695 = vmatprep.subr.bf16.mxu0 0
  %696 = vmatpush1.bf16.xpose.msra.mxu0 0
  %697 = vmatprep.subr.bf16.mxu0 0
  %698 = vmatpush1.bf16.xpose.msra.mxu0 0
  %699 = vmatprep.subr.bf16.mxu0 0
  %700 = vmatpush1.bf16.xpose.msra.mxu0 0
  %701 = vmatprep.subr.bf16.mxu0 0
  %702 = vmatpush1.bf16.xpose.msra.mxu0 0
  %703 = vmatprep.subr.bf16.mxu0 0
  %704 = vmatpush1.bf16.xpose.msra.mxu0 0
  %705 = vmatprep.subr.bf16.mxu0 0
  %706 = vmatpush1.bf16.xpose.msra.mxu0 0
  %707 = vmatprep.subr.bf16.mxu0 0
  %708 = vmatpush1.bf16.xpose.msra.mxu0 0
  %709 = vmatprep.mubr.bf16.mxu0 0
  %710 = vmatmul.mubr.bf16.gmra.mrb[0].mxu0 %v672
  %v711 = vpop.f32.mrb[0].mxu0
  %v712 = vadd.f32 0.0, %v711
  %v713 = vpop.f32.mrb[0].mxu0
  %v714 = vpop.f32.mrb[0].mxu0
  %v715 = vpop.f32.mrb[0].mxu0
  %716 = vdwg.mxu0
  %v718 = vsel %vm624, %v320, 0
  %v721 = vsel %vm624, %v470, 0
  %723 = vmatprep.subr.bf16.mxu0 0
  %724 = vmatpush1.bf16.xpose.msra.mxu0 %v721
  %725 = vmatprep.subr.bf16.mxu0 0
  %726 = vmatpush1.bf16.xpose.msra.mxu0 0
  %727 = vmatprep.subr.bf16.mxu0 0
  %728 = vmatpush1.bf16.xpose.msra.mxu0 0
  %729 = vmatprep.subr.bf16.mxu0 0
  %730 = vmatpush1.bf16.xpose.msra.mxu0 0
  %731 = vmatprep.subr.bf16.mxu0 0
  %732 = vmatpush1.bf16.xpose.msra.mxu0 0
  %733 = vmatprep.subr.bf16.mxu0 0
  %734 = vmatpush1.bf16.xpose.msra.mxu0 0
  %735 = vmatprep.subr.bf16.mxu0 0
  %736 = vmatpush1.bf16.xpose.msra.mxu0 0
  %737 = vmatprep.subr.bf16.mxu0 0
  %738 = vmatpush1.bf16.xpose.msra.mxu0 0
  %739 = vmatprep.subr.bf16.mxu0 0
  %740 = vmatpush1.bf16.xpose.msra.mxu0 0
  %741 = vmatprep.subr.bf16.mxu0 0
  %742 = vmatpush1.bf16.xpose.msra.mxu0 0
  %743 = vmatprep.subr.bf16.mxu0 0
  %744 = vmatpush1.bf16.xpose.msra.mxu0 0
  %745 = vmatprep.subr.bf16.mxu0 0
  %746 = vmatpush1.bf16.xpose.msra.mxu0 0
  %747 = vmatprep.subr.bf16.mxu0 0
  %748 = vmatpush1.bf16.xpose.msra.mxu0 0
  %749 = vmatprep.subr.bf16.mxu0 0
  %750 = vmatpush1.bf16.xpose.msra.mxu0 0
  %751 = vmatprep.subr.bf16.mxu0 0
  %752 = vmatpush1.bf16.xpose.msra.mxu0 0
  %753 = vmatprep.subr.bf16.mxu0 0
  %754 = vmatpush1.bf16.xpose.msra.mxu0 0
  %755 = vmatprep.mubr.bf16.mxu0 0
  %756 = vmatmul.mubr.bf16.gmra.mrb[0].mxu0 %v718
  %v757 = vpop.f32.mrb[0].mxu0
  %v758 = vadd.f32 0.0, %v757
  %v759 = vpop.f32.mrb[0].mxu0
  %v760 = vpop.f32.mrb[0].mxu0
  %v761 = vpop.f32.mrb[0].mxu0
  %762 = vdwg.mxu0
  %v764 = vsel %vm624, %v321, 0
  %v767 = vsel %vm624, %v471, 0
  %769 = vmatprep.subr.bf16.mxu0 0
  %770 = vmatpush1.bf16.xpose.msra.mxu0 %v767
  %771 = vmatprep.subr.bf16.mxu0 0
  %772 = vmatpush1.bf16.xpose.msra.mxu0 0
  %773 = vmatprep.subr.bf16.mxu0 0
  %774 = vmatpush1.bf16.xpose.msra.mxu0 0
  %775 = vmatprep.subr.bf16.mxu0 0
  %776 = vmatpush1.bf16.xpose.msra.mxu0 0
  %777 = vmatprep.subr.bf16.mxu0 0
  %778 = vmatpush1.bf16.xpose.msra.mxu0 0
  %779 = vmatprep.subr.bf16.mxu0 0
  %780 = vmatpush1.bf16.xpose.msra.mxu0 0
  %781 = vmatprep.subr.bf16.mxu0 0
  %782 = vmatpush1.bf16.xpose.msra.mxu0 0
  %783 = vmatprep.subr.bf16.mxu0 0
  %784 = vmatpush1.bf16.xpose.msra.mxu0 0
  %785 = vmatprep.subr.bf16.mxu0 0
  %786 = vmatpush1.bf16.xpose.msra.mxu0 0
  %787 = vmatprep.subr.bf16.mxu0 0
  %788 = vmatpush1.bf16.xpose.msra.mxu0 0
  %789 = vmatprep.subr.bf16.mxu0 0
  %790 = vmatpush1.bf16.xpose.msra.mxu0 0
  %791 = vmatprep.subr.bf16.mxu0 0
  %792 = vmatpush1.bf16.xpose.msra.mxu0 0
  %793 = vmatprep.subr.bf16.mxu0 0
  %794 = vmatpush1.bf16.xpose.msra.mxu0 0
  %795 = vmatprep.subr.bf16.mxu0 0
  %796 = vmatpush1.bf16.xpose.msra.mxu0 0
  %797 = vmatprep.subr.bf16.mxu0 0
  %798 = vmatpush1.bf16.xpose.msra.mxu0 0
  %799 = vmatprep.subr.bf16.mxu0 0
  %800 = vmatpush1.bf16.xpose.msra.mxu0 0
  %801 = vmatprep.mubr.bf16.mxu0 0
  %802 = vmatmul.mubr.bf16.gmra.mrb[0].mxu0 %v764
  %v803 = vpop.f32.mrb[0].mxu0
  %v804 = vadd.f32 0.0, %v803
  %v805 = vpop.f32.mrb[0].mxu0
  %v806 = vpop.f32.mrb[0].mxu0
  %v807 = vpop.f32.mrb[0].mxu0
  %808 = vdwg.mxu0
  %v809 = vsel %vm624, %v666, -inf
  %810 = vmax.xlane.f32.xlu0 %v809
  %v811 = vpop.xlane.xlu0 %810
  %v812 = vsel %vm624, %v712, -inf
  %813 = vmax.xlane.f32.xlu0 %v812
  %v814 = vpop.xlane.xlu0 %813
  %v815 = vsel %vm624, %v758, -inf
  %816 = vmax.xlane.f32.xlu0 %v815
  %v817 = vpop.xlane.xlu0 %816
  %v818 = vsel %vm624, %v804, -inf
  %819 = vmax.xlane.f32.xlu0 %v818
  %v820 = vpop.xlane.xlu0 %819
  %v821 = vsub.f32 %v666, %v811
  %v822 = vsub.f32 %v712, %v814
  %v823 = vsub.f32 %v758, %v817
  %v824 = vsub.f32 %v804, %v820
  %v825 = vmul.f32 %v821, 1.442695
  %v826 = vpow.pop %v825
  %v827 = vmul.f32 %v822, 1.442695
  %v828 = vpow.pop %v827
  %v829 = vmul.f32 %v823, 1.442695
  %v830 = vpow.pop %v829
  %v831 = vmul.f32 %v824, 1.442695
  %v832 = vpow.pop %v831
  %v833 = vsel %vm624, %v826, 0.0
  %834 = vadd.xlane.f32.xlu0 %v833
  %v835 = vpop.xlane.xlu0 %834
  %v836 = vsel %vm624, %v828, 0.0
  %837 = vadd.xlane.f32.xlu0 %v836
  %v838 = vpop.xlane.xlu0 %837
  %v839 = vsel %vm624, %v830, 0.0
  %840 = vadd.xlane.f32.xlu0 %v839
  %v841 = vpop.xlane.xlu0 %840
  %v842 = vsel %vm624, %v832, 0.0
  %843 = vadd.xlane.f32.xlu0 %v842
  %v844 = vpop.xlane.xlu0 %843
  %v845 = vrcp.pop %v835
  %v846 = vrcp.pop %v838
  %v847 = vrcp.pop %v841
  %v848 = vrcp.pop %v844
  %v849 = vmul.f32 %v826, %v845
  %v850 = vmul.f32 %v828, %v846
  %v851 = vmul.f32 %v830, %v847
  %v852 = vmul.f32 %v832, %v848
  %v853 = vpack.c.bf16 %v849, %v849
  %v854 = vpack.c.bf16 %v850, %v850
  %v855 = vpack.c.bf16 %v851, %v851
  %v856 = vpack.c.bf16 %v852, %v852
  %v858 = vsel %vm624, %v853, 0
  %vm860 = vcmask 1043456
  %v862 = vsel %vm860, %v620, 0
  %864 = vmatprep.subr.bf16.mxu0 0
  %865 = vmatpush1.bf16.msra.mxu0 %v862
  %866 = vmatprep.subr.bf16.mxu0 0
  %867 = vmatpush1.bf16.msra.mxu0 0
  %868 = vmatprep.subr.bf16.mxu0 0
  %869 = vmatpush1.bf16.msra.mxu0 0
  %870 = vmatprep.subr.bf16.mxu0 0
  %871 = vmatpush1.bf16.msra.mxu0 0
  %872 = vmatprep.subr.bf16.mxu0 0
  %873 = vmatpush1.bf16.msra.mxu0 0
  %874 = vmatprep.subr.bf16.mxu0 0
  %875 = vmatpush1.bf16.msra.mxu0 0
  %876 = vmatprep.subr.bf16.mxu0 0
  %877 = vmatpush1.bf16.msra.mxu0 0
  %878 = vmatprep.subr.bf16.mxu0 0
  %879 = vmatpush1.bf16.msra.mxu0 0
  %880 = vmatprep.subr.bf16.mxu0 0
  %881 = vmatpush1.bf16.msra.mxu0 0
  %882 = vmatprep.subr.bf16.mxu0 0
  %883 = vmatpush1.bf16.msra.mxu0 0
  %884 = vmatprep.subr.bf16.mxu0 0
  %885 = vmatpush1.bf16.msra.mxu0 0
  %886 = vmatprep.subr.bf16.mxu0 0
  %887 = vmatpush1.bf16.msra.mxu0 0
  %888 = vmatprep.subr.bf16.mxu0 0
  %889 = vmatpush1.bf16.msra.mxu0 0
  %890 = vmatprep.subr.bf16.mxu0 0
  %891 = vmatpush1.bf16.msra.mxu0 0
  %892 = vmatprep.subr.bf16.mxu0 0
  %893 = vmatpush1.bf16.msra.mxu0 0
  %894 = vmatprep.subr.bf16.mxu0 0
  %895 = vmatpush1.bf16.msra.mxu0 0
  %896 = vmatprep.mubr.bf16.mxu0 0
  %897 = vmatmul.mubr.bf16.gmra.mrb[0].mxu0 %v858
  %v898 = vpop.f32.mrb[0].mxu0
  %v899 = vadd.f32 0.0, %v898
  %v900 = vpop.f32.mrb[0].mxu0
  %v901 = vpop.f32.mrb[0].mxu0
  %v902 = vpop.f32.mrb[0].mxu0
  %903 = vdwg.mxu0
  %v905 = vsel %vm624, %v854, 0
  %v908 = vsel %vm860, %v621, 0
  %910 = vmatprep.subr.bf16.mxu0 0
  %911 = vmatpush1.bf16.msra.mxu0 %v908
  %912 = vmatprep.subr.bf16.mxu0 0
  %913 = vmatpush1.bf16.msra.mxu0 0
  %914 = vmatprep.subr.bf16.mxu0 0
  %915 = vmatpush1.bf16.msra.mxu0 0
  %916 = vmatprep.subr.bf16.mxu0 0
  %917 = vmatpush1.bf16.msra.mxu0 0
  %918 = vmatprep.subr.bf16.mxu0 0
  %919 = vmatpush1.bf16.msra.mxu0 0
  %920 = vmatprep.subr.bf16.mxu0 0
  %921 = vmatpush1.bf16.msra.mxu0 0
  %922 = vmatprep.subr.bf16.mxu0 0
  %923 = vmatpush1.bf16.msra.mxu0 0
  %924 = vmatprep.subr.bf16.mxu0 0
  %925 = vmatpush1.bf16.msra.mxu0 0
  %926 = vmatprep.subr.bf16.mxu0 0
  %927 = vmatpush1.bf16.msra.mxu0 0
  %928 = vmatprep.subr.bf16.mxu0 0
  %929 = vmatpush1.bf16.msra.mxu0 0
  %930 = vmatprep.subr.bf16.mxu0 0
  %931 = vmatpush1.bf16.msra.mxu0 0
  %932 = vmatprep.subr.bf16.mxu0 0
  %933 = vmatpush1.bf16.msra.mxu0 0
  %934 = vmatprep.subr.bf16.mxu0 0
  %935 = vmatpush1.bf16.msra.mxu0 0
  %936 = vmatprep.subr.bf16.mxu0 0
  %937 = vmatpush1.bf16.msra.mxu0 0
  %938 = vmatprep.subr.bf16.mxu0 0
  %939 = vmatpush1.bf16.msra.mxu0 0
  %940 = vmatprep.subr.bf16.mxu0 0
  %941 = vmatpush1.bf16.msra.mxu0 0
  %942 = vmatprep.mubr.bf16.mxu0 0
  %943 = vmatmul.mubr.bf16.gmra.mrb[0].mxu0 %v905
  %v944 = vpop.f32.mrb[0].mxu0
  %v945 = vadd.f32 0.0, %v944
  %v946 = vpop.f32.mrb[0].mxu0
  %v947 = vpop.f32.mrb[0].mxu0
  %v948 = vpop.f32.mrb[0].mxu0
  %949 = vdwg.mxu0
  %v951 = vsel %vm624, %v855, 0
  %v954 = vsel %vm860, %v622, 0
  %956 = vmatprep.subr.bf16.mxu0 0
  %957 = vmatpush1.bf16.msra.mxu0 %v954
  %958 = vmatprep.subr.bf16.mxu0 0
  %959 = vmatpush1.bf16.msra.mxu0 0
  %960 = vmatprep.subr.bf16.mxu0 0
  %961 = vmatpush1.bf16.msra.mxu0 0
  %962 = vmatprep.subr.bf16.mxu0 0
  %963 = vmatpush1.bf16.msra.mxu0 0
  %964 = vmatprep.subr.bf16.mxu0 0
  %965 = vmatpush1.bf16.msra.mxu0 0
  %966 = vmatprep.subr.bf16.mxu0 0
  %967 = vmatpush1.bf16.msra.mxu0 0
  %968 = vmatprep.subr.bf16.mxu0 0
  %969 = vmatpush1.bf16.msra.mxu0 0
  %970 = vmatprep.subr.bf16.mxu0 0
  %971 = vmatpush1.bf16.msra.mxu0 0
  %972 = vmatprep.subr.bf16.mxu0 0
  %973 = vmatpush1.bf16.msra.mxu0 0
  %974 = vmatprep.subr.bf16.mxu0 0
  %975 = vmatpush1.bf16.msra.mxu0 0
  %976 = vmatprep.subr.bf16.mxu0 0
  %977 = vmatpush1.bf16.msra.mxu0 0
  %978 = vmatprep.subr.bf16.mxu0 0
  %979 = vmatpush1.bf16.msra.mxu0 0
  %980 = vmatprep.subr.bf16.mxu0 0
  %981 = vmatpush1.bf16.msra.mxu0 0
  %982 = vmatprep.subr.bf16.mxu0 0
  %983 = vmatpush1.bf16.msra.mxu0 0
  %984 = vmatprep.subr.bf16.mxu0 0
  %985 = vmatpush1.bf16.msra.mxu0 0
  %986 = vmatprep.subr.bf16.mxu0 0
  %987 = vmatpush1.bf16.msra.mxu0 0
  %988 = vmatprep.mubr.bf16.mxu0 0
  %989 = vmatmul.mubr.bf16.gmra.mrb[0].mxu0 %v951
  %v990 = vpop.f32.mrb[0].mxu0
  %v991 = vadd.f32 0.0, %v990
  %v992 = vpop.f32.mrb[0].mxu0
  %v993 = vpop.f32.mrb[0].mxu0
  %v994 = vpop.f32.mrb[0].mxu0
  %995 = vdwg.mxu0
  %v997 = vsel %vm624, %v856, 0
  %v1000 = vsel %vm860, %v623, 0
  %1002 = vmatprep.subr.bf16.mxu0 0
  %1003 = vmatpush1.bf16.msra.mxu0 %v1000
  %1004 = vmatprep.subr.bf16.mxu0 0
  %1005 = vmatpush1.bf16.msra.mxu0 0
  %1006 = vmatprep.subr.bf16.mxu0 0
  %1007 = vmatpush1.bf16.msra.mxu0 0
  %1008 = vmatprep.subr.bf16.mxu0 0
  %1009 = vmatpush1.bf16.msra.mxu0 0
  %1010 = vmatprep.subr.bf16.mxu0 0
  %1011 = vmatpush1.bf16.msra.mxu0 0
  %1012 = vmatprep.subr.bf16.mxu0 0
  %1013 = vmatpush1.bf16.msra.mxu0 0
  %1014 = vmatprep.subr.bf16.mxu0 0
  %1015 = vmatpush1.bf16.msra.mxu0 0
  %1016 = vmatprep.subr.bf16.mxu0 0
  %1017 = vmatpush1.bf16.msra.mxu0 0
  %1018 = vmatprep.subr.bf16.mxu0 0
  %1019 = vmatpush1.bf16.msra.mxu0 0
  %1020 = vmatprep.subr.bf16.mxu0 0
  %1021 = vmatpush1.bf16.msra.mxu0 0
  %1022 = vmatprep.subr.bf16.mxu0 0
  %1023 = vmatpush1.bf16.msra.mxu0 0
  %1024 = vmatprep.subr.bf16.mxu0 0
  %1025 = vmatpush1.bf16.msra.mxu0 0
  %1026 = vmatprep.subr.bf16.mxu0 0
  %1027 = vmatpush1.bf16.msra.mxu0 0
  %1028 = vmatprep.subr.bf16.mxu0 0
  %1029 = vmatpush1.bf16.msra.mxu0 0
  %1030 = vmatprep.subr.bf16.mxu0 0
  %1031 = vmatpush1.bf16.msra.mxu0 0
  %1032 = vmatprep.subr.bf16.mxu0 0
  %1033 = vmatpush1.bf16.msra.mxu0 0
  %1034 = vmatprep.mubr.bf16.mxu0 0
  %1035 = vmatmul.mubr.bf16.gmra.mrb[0].mxu0 %v997
  %v1036 = vpop.f32.mrb[0].mxu0
  %v1037 = vadd.f32 0.0, %v1036
  %v1038 = vpop.f32.mrb[0].mxu0
  %v1039 = vpop.f32.mrb[0].mxu0
  %v1040 = vpop.f32.mrb[0].mxu0
  %1041 = vdwg.mxu0
  %v1042 = vcombine.low %v899, %v991
  %v1043 = vcombine.high %v899, %v991
  %v1045 = vunpack.c.l.s4 1983009808
  %v1046 = vunpack.c.0.s8 %v1045
  %v1047 = vlaneseq
  %v1048 = vshrl.u32 %v1047, 7
  %v1049 = vsub.s32 %v1046, %v1048
  %v1050 = vrot.slane %v1042, %v1049
  %v1052 = vunpack.c.l.s4 1983009808
  %v1053 = vunpack.c.0.s8 %v1052
  %v1054 = vlaneseq
  %v1055 = vshrl.u32 %v1054, 7
  %v1056 = vsub.s32 %v1053, %v1055
  %v1057 = vrot.slane %v1043, %v1056
  %v1058 = vcombine.low %v945, %v1037
  %v1059 = vcombine.high %v945, %v1037
  %v1061 = vunpack.c.l.s4 1983009808
  %v1062 = vunpack.c.0.s8 %v1061
  %v1063 = vlaneseq
  %v1064 = vshrl.u32 %v1063, 7
  %v1065 = vsub.s32 %v1062, %v1064
  %v1066 = vrot.slane %v1058, %v1065
  %v1068 = vunpack.c.l.s4 1983009808
  %v1069 = vunpack.c.0.s8 %v1068
  %v1070 = vlaneseq
  %v1071 = vshrl.u32 %v1070, 7
  %v1072 = vsub.s32 %v1069, %v1071
  %v1073 = vrot.slane %v1059, %v1072
  %v1074 = vcombine.low %v1050, %v1066
  %v1075 = vcombine.high %v1050, %v1066
  %v1077 = vunpack.c.l.s4 1934713408
  %v1078 = vunpack.c.0.s8 %v1077
  %v1079 = vlaneseq
  %v1080 = vshrl.u32 %v1079, 7
  %v1081 = vsub.s32 %v1078, %v1080
  %v1082 = vrot.slane %v1074, %v1081
  %v1084 = vunpack.c.l.s4 1934713408
  %v1085 = vunpack.c.0.s8 %v1084
  %v1086 = vlaneseq
  %v1087 = vshrl.u32 %v1086, 7
  %v1088 = vsub.s32 %v1085, %v1087
  %v1089 = vrot.slane %v1075, %v1088
  %v1090 = vcombine.low %v1057, %v1073
  %v1091 = vcombine.high %v1057, %v1073
  %v1093 = vunpack.c.l.s4 1934713408
  %v1094 = vunpack.c.0.s8 %v1093
  %v1095 = vlaneseq
  %v1096 = vshrl.u32 %v1095, 7
  %v1097 = vsub.s32 %v1094, %v1096
  %v1098 = vrot.slane %v1090, %v1097
  %v1100 = vunpack.c.l.s4 1934713408
  %v1101 = vunpack.c.0.s8 %v1100
  %v1102 = vlaneseq
  %v1103 = vshrl.u32 %v1102, 7
  %v1104 = vsub.s32 %v1101, %v1103
  %v1105 = vrot.slane %v1091, %v1104
  %v1106 = vcombine.high %v1082, 0.0
  %v1107 = vcombine.high %v1089, 0.0
  %v1108 = vcombine.high %v1098, 0.0
  %v1109 = vcombine.high %v1105, 0.0
  %v1110 = vcombine.low %v1082, %v1089
  %v1112 = vunpack.c.l.s4 1983009808
  %v1113 = vunpack.c.0.s8 %v1112
  %v1114 = vlaneseq
  %v1115 = vshrl.u32 %v1114, 7
  %v1116 = vsub.s32 %v1113, %v1115
  %v1117 = vrot.slane %v1110, %v1116
  %v1118 = vcombine.low %v1106, %v1107
  %v1120 = vunpack.c.l.s4 1983009808
  %v1121 = vunpack.c.0.s8 %v1120
  %v1122 = vlaneseq
  %v1123 = vshrl.u32 %v1122, 7
  %v1124 = vsub.s32 %v1121, %v1123
  %v1125 = vrot.slane %v1118, %v1124
  %v1126 = vcombine.low %v1098, %v1105
  %v1128 = vunpack.c.l.s4 1983009808
  %v1129 = vunpack.c.0.s8 %v1128
  %v1130 = vlaneseq
  %v1131 = vshrl.u32 %v1130, 7
  %v1132 = vsub.s32 %v1129, %v1131
  %v1133 = vrot.slane %v1126, %v1132
  %v1134 = vcombine.low %v1108, %v1109
  %v1136 = vunpack.c.l.s4 1983009808
  %v1137 = vunpack.c.0.s8 %v1136
  %v1138 = vlaneseq
  %v1139 = vshrl.u32 %v1138, 7
  %v1140 = vsub.s32 %v1137, %v1139
  %v1141 = vrot.slane %v1134, %v1140
  %v1142 = vcombine.low %v1117, %v1125
  %v1143 = vcombine.high %v1117, %v1125
  %v1145 = vunpack.c.l.s4 1934713408
  %v1146 = vunpack.c.0.s8 %v1145
  %v1147 = vlaneseq
  %v1148 = vshrl.u32 %v1147, 7
  %v1149 = vsub.s32 %v1146, %v1148
  %v1150 = vrot.slane %v1142, %v1149
  %v1152 = vunpack.c.l.s4 1934713408
  %v1153 = vunpack.c.0.s8 %v1152
  %v1154 = vlaneseq
  %v1155 = vshrl.u32 %v1154, 7
  %v1156 = vsub.s32 %v1153, %v1155
  %v1157 = vrot.slane %v1143, %v1156
  %v1158 = vcombine.low %v1133, %v1141
  %v1159 = vcombine.high %v1133, %v1141
  %v1161 = vunpack.c.l.s4 1934713408
  %v1162 = vunpack.c.0.s8 %v1161
  %v1163 = vlaneseq
  %v1164 = vshrl.u32 %v1163, 7
  %v1165 = vsub.s32 %v1162, %v1164
  %v1166 = vrot.slane %v1158, %v1165
  %v1168 = vunpack.c.l.s4 1934713408
  %v1169 = vunpack.c.0.s8 %v1168
  %v1170 = vlaneseq
  %v1171 = vshrl.u32 %v1170, 7
  %v1172 = vsub.s32 %v1169, %v1171
  %v1173 = vrot.slane %v1159, %v1172
  %v1174 = vcombine.low %v1150, %v1166
  %v1175 = vcombine.high %v1150, %v1166
  %v1176 = vcombine.low %v1157, %v1173
  %v1177 = vcombine.high %v1157, %v1173
  %1179 = vrot.lane.b32.xlu0 %v1175, 8
  %v1180 = vpop.permute.xlu0 %1179
  %1183 = vrot.lane.b32.xlu0 %v1176, 16
  %v1184 = vpop.permute.xlu0 %1183
  %1187 = vrot.lane.b32.xlu0 %v1177, 24
  %v1188 = vpop.permute.xlu0 %1187
  %v1190 = vsel %vm624, %v1174, %v1180
  %vm1191 = vcmask 130048
  %v1192 = vsel %vm1191, %v1190, %v1184
  %vm1193 = vcmask 195584
  %v1194 = vsel %vm1193, %v1192, %v1188
  %v1195 = vpack.c.bf16 %v1194, %v1194
  %v1196 = vld [vmem:[%s4] sm:$0xf]
  %v1197 = vld [vmem:[%s4 + $0x4] sm:$0xf]
  %v1198 = vld [vmem:[%s4 + $0x8] sm:$0xf]
  %v1199 = vld [vmem:[%s4 + $0xc] sm:$0xf]
  %v1200 = vlaneseq
  %v1201 = vshrl.u32 %v1200, 7
  %v1202 = vsub.s32 1, %v1201
  %v1203 = vrot.slane %v36, %v1202
  %v1208 = vunpack.c.l.b16 %v1196
  %v1209 = vunpack.c.l.b16 %v1197
  %v1210 = vunpack.c.l.b16 %v1198
  %v1211 = vunpack.c.l.b16 %v1199
  %v1212 = vpack.c.b16 %v1209, %v1208
  %v1213 = vpack.c.b16 %v1211, %v1210
  %v1217 = vsel %vm60, %v1195, 0
  %1219 = vmatprep.subr.bf16.mxu0 0
  %1220 = vmatpush1.bf16.msra.mxu0 %v1212
  %1221 = vmatprep.subr.bf16.mxu0 0
  %1222 = vmatpush1.bf16.msra.mxu0 %v1213
  %1223 = vmatprep.subr.bf16.mxu0 0
  %1224 = vmatpush1.bf16.msra.mxu0 0
  %1225 = vmatprep.subr.bf16.mxu0 0
  %1226 = vmatpush1.bf16.msra.mxu0 0
  %1227 = vmatprep.subr.bf16.mxu0 0
  %1228 = vmatpush1.bf16.msra.mxu0 0
  %1229 = vmatprep.subr.bf16.mxu0 0
  %1230 = vmatpush1.bf16.msra.mxu0 0
  %1231 = vmatprep.subr.bf16.mxu0 0
  %1232 = vmatpush1.bf16.msra.mxu0 0
  %1233 = vmatprep.subr.bf16.mxu0 0
  %1234 = vmatpush1.bf16.msra.mxu0 0
  %1235 = vmatprep.subr.bf16.mxu0 0
  %1236 = vmatpush1.bf16.msra.mxu0 0
  %1237 = vmatprep.subr.bf16.mxu0 0
  %1238 = vmatpush1.bf16.msra.mxu0 0
  %1239 = vmatprep.subr.bf16.mxu0 0
  %1240 = vmatpush1.bf16.msra.mxu0 0
  %1241 = vmatprep.subr.bf16.mxu0 0
  %1242 = vmatpush1.bf16.msra.mxu0 0
  %1243 = vmatprep.subr.bf16.mxu0 0
  %1244 = vmatpush1.bf16.msra.mxu0 0
  %1245 = vmatprep.subr.bf16.mxu0 0
  %1246 = vmatpush1.bf16.msra.mxu0 0
  %1247 = vmatprep.subr.bf16.mxu0 0
  %1248 = vmatpush1.bf16.msra.mxu0 0
  %1249 = vmatprep.subr.bf16.mxu0 0
  %1250 = vmatpush1.bf16.msra.mxu0 0
  %1251 = vmatprep.mubr.bf16.mxu0 0
  %1252 = vmatmul.mubr.bf16.gmra.mrb[0].mxu0 %v1217
  %v1253 = vpop.f32.mrb[0].mxu0
  %v1254 = vadd.f32 %v1203, %v1253
  %v1255 = vpop.f32.mrb[0].mxu0
  %v1256 = vpop.f32.mrb[0].mxu0
  %v1257 = vpop.f32.mrb[0].mxu0
  %1258 = vdwg.mxu0
  %v1259 = vadd.f32 %v37, %v1254
  %v1260 = vsel %vm60, %v1259, 0.0
  %1261 = vadd.xlane.f32.xlu0 %v1260
  %v1262 = vpop.xlane.xlu0 %1261
  %v1263 = vrcp.pop 32.0
  %v1264 = vmul.f32 %v1262, %v1263
  %v1265 = vsub.f32 %v1259, %v1264
  %v1266 = vmul.f32 %v1265, %v1265
  %v1267 = vsel %vm60, %v1266, 0.0
  %1268 = vadd.xlane.f32.xlu0 %v1267
  %v1269 = vpop.xlane.xlu0 %1268
  %v1270 = vmul.f32 %v1269, %v1263
  %v1271 = vadd.f32 %v1270, 1e-05
  %v1272 = vrsqrt.pop %v1271
  %v1273 = vmul.f32 %v1265, %v1272
  %v1274 = vlaneseq
  %v1275 = vshrl.u32 %v1274, 7
  %v1276 = vsub.s32 2, %v1275
  %v1277 = vrot.slane %v36, %v1276
  %v1278 = vmul.f32 %v1273, %v1277
  %v1279 = vlaneseq
  %v1280 = vshrl.u32 %v1279, 7
  %v1281 = vsub.s32 3, %v1280
  %v1282 = vrot.slane %v36, %v1281
  %v1283 = vadd.f32 %v1278, %v1282
  %v1284 = vpack.c.bf16 %v1283, %v1283
  %v1285 = vld [vmem:[%s5] sm:$0xf]
  %v1286 = vld [vmem:[%s5 + $0x4] sm:$0xf]
  %v1287 = vld [vmem:[%s5 + $0x8] sm:$0xf]
  %v1288 = vld [vmem:[%s5 + $0xc] sm:$0xf]
  %v1289 = vld [vmem:[%s8] sm:$0x1]
  %v1291 = vlaneseq
  %v1292 = vshrl.u32 %v1291, 7
  %v1293 = vsub.s32 0, %v1292
  %v1294 = vrot.slane %v1289, %v1293
  %v1300 = vunpack.c.l.b16 %v1285
  %v1301 = vunpack.c.l.b16 %v1286
  %v1302 = vunpack.c.l.b16 %v1287
  %v1303 = vunpack.c.l.b16 %v1288
  %v1304 = vpack.c.b16 %v1301, %v1300
  %v1305 = vpack.c.b16 %v1303, %v1302
  %v1309 = vsel %vm60, %v1284, 0
  %1311 = vmatprep.subr.bf16.mxu0 0
  %1312 = vmatpush1.bf16.msra.mxu0 %v1304
  %1313 = vmatprep.subr.bf16.mxu0 0
  %1314 = vmatpush1.bf16.msra.mxu0 %v1305
  %1315 = vmatprep.subr.bf16.mxu0 0
  %1316 = vmatpush1.bf16.msra.mxu0 0
  %1317 = vmatprep.subr.bf16.mxu0 0
  %1318 = vmatpush1.bf16.msra.mxu0 0
  %1319 = vmatprep.subr.bf16.mxu0 0
  %1320 = vmatpush1.bf16.msra.mxu0 0
  %1321 = vmatprep.subr.bf16.mxu0 0
  %1322 = vmatpush1.bf16.msra.mxu0 0
  %1323 = vmatprep.subr.bf16.mxu0 0
  %1324 = vmatpush1.bf16.msra.mxu0 0
  %1325 = vmatprep.subr.bf16.mxu0 0
  %1326 = vmatpush1.bf16.msra.mxu0 0
  %1327 = vmatprep.subr.bf16.mxu0 0
  %1328 = vmatpush1.bf16.msra.mxu0 0
  %1329 = vmatprep.subr.bf16.mxu0 0
  %1330 = vmatpush1.bf16.msra.mxu0 0
  %1331 = vmatprep.subr.bf16.mxu0 0
  %1332 = vmatpush1.bf16.msra.mxu0 0
  %1333 = vmatprep.subr.bf16.mxu0 0
  %1334 = vmatpush1.bf16.msra.mxu0 0
  %1335 = vmatprep.subr.bf16.mxu0 0
  %1336 = vmatpush1.bf16.msra.mxu0 0
  %1337 = vmatprep.subr.bf16.mxu0 0
  %1338 = vmatpush1.bf16.msra.mxu0 0
  %1339 = vmatprep.subr.bf16.mxu0 0
  %1340 = vmatpush1.bf16.msra.mxu0 0
  %1341 = vmatprep.subr.bf16.mxu0 0
  %1342 = vmatpush1.bf16.msra.mxu0 0
  %1343 = vmatprep.mubr.bf16.mxu0 0
  %1344 = vmatmul.mubr.bf16.gmra.mrb[0].mxu0 %v1309
  %v1345 = vpop.f32.mrb[0].mxu0
  %v1346 = vadd.f32 %v1294, %v1345
  %v1347 = vpop.f32.mrb[0].mxu0
  %v1348 = vpop.f32.mrb[0].mxu0
  %v1349 = vpop.f32.mrb[0].mxu0
  %1350 = vdwg.mxu0
  %v1351 = vmax.f32 %v1346, 0.0
  %v1352 = vpack.c.bf16 %v1351, %v1351
  %v1353 = vld [vmem:[%s6] sm:$0xf]
  %v1354 = vld [vmem:[%s6 + $0x4] sm:$0xf]
  %v1355 = vld [vmem:[%s6 + $0x8] sm:$0xf]
  %v1356 = vld [vmem:[%s6 + $0xc] sm:$0xf]
  %v1357 = vld [vmem:[%s6 + $0x10] sm:$0xf]
  %v1358 = vld [vmem:[%s6 + $0x14] sm:$0xf]
  %v1359 = vld [vmem:[%s6 + $0x18] sm:$0xf]
  %v1360 = vld [vmem:[%s6 + $0x1c] sm:$0xf]
  %v1361 = vlaneseq
  %v1362 = vshrl.u32 %v1361, 7
  %v1363 = vsub.s32 4, %v1362
  %v1364 = vrot.slane %v36, %v1363
  %v1373 = vunpack.c.l.b16 %v1353
  %v1374 = vunpack.c.l.b16 %v1354
  %v1375 = vunpack.c.l.b16 %v1355
  %v1376 = vunpack.c.l.b16 %v1356
  %v1377 = vunpack.c.l.b16 %v1357
  %v1378 = vunpack.c.l.b16 %v1358
  %v1379 = vunpack.c.l.b16 %v1359
  %v1380 = vunpack.c.l.b16 %v1360
  %v1381 = vpack.c.b16 %v1374, %v1373
  %v1382 = vpack.c.b16 %v1376, %v1375
  %v1383 = vpack.c.b16 %v1378, %v1377
  %v1384 = vpack.c.b16 %v1380, %v1379
  %vm1389 = vcmask 523264
  %v1391 = vsel %vm1389, %v1352, 0
  %1393 = vmatprep.subr.bf16.mxu0 0
  %1394 = vmatpush1.bf16.msra.mxu0 %v1381
  %1395 = vmatprep.subr.bf16.mxu0 0
  %1396 = vmatpush1.bf16.msra.mxu0 %v1382
  %1397 = vmatprep.subr.bf16.mxu0 0
  %1398 = vmatpush1.bf16.msra.mxu0 %v1383
  %1399 = vmatprep.subr.bf16.mxu0 0
  %1400 = vmatpush1.bf16.msra.mxu0 %v1384
  %1401 = vmatprep.subr.bf16.mxu0 0
  %1402 = vmatpush1.bf16.msra.mxu0 0
  %1403 = vmatprep.subr.bf16.mxu0 0
  %1404 = vmatpush1.bf16.msra.mxu0 0
  %1405 = vmatprep.subr.bf16.mxu0 0
  %1406 = vmatpush1.bf16.msra.mxu0 0
  %1407 = vmatprep.subr.bf16.mxu0 0
  %1408 = vmatpush1.bf16.msra.mxu0 0
  %1409 = vmatprep.subr.bf16.mxu0 0
  %1410 = vmatpush1.bf16.msra.mxu0 0
  %1411 = vmatprep.subr.bf16.mxu0 0
  %1412 = vmatpush1.bf16.msra.mxu0 0
  %1413 = vmatprep.subr.bf16.mxu0 0
  %1414 = vmatpush1.bf16.msra.mxu0 0
  %1415 = vmatprep.subr.bf16.mxu0 0
  %1416 = vmatpush1.bf16.msra.mxu0 0
  %1417 = vmatprep.subr.bf16.mxu0 0
  %1418 = vmatpush1.bf16.msra.mxu0 0
  %1419 = vmatprep.subr.bf16.mxu0 0
  %1420 = vmatpush1.bf16.msra.mxu0 0
  %1421 = vmatprep.subr.bf16.mxu0 0
  %1422 = vmatpush1.bf16.msra.mxu0 0
  %1423 = vmatprep.subr.bf16.mxu0 0
  %1424 = vmatpush1.bf16.msra.mxu0 0
  %1425 = vmatprep.mubr.bf16.mxu0 0
  %1426 = vmatmul.mubr.bf16.gmra.mrb[0].mxu0 %v1391
  %v1427 = vpop.f32.mrb[0].mxu0
  %v1428 = vadd.f32 %v1364, %v1427
  %v1429 = vpop.f32.mrb[0].mxu0
  %v1430 = vpop.f32.mrb[0].mxu0
  %v1431 = vpop.f32.mrb[0].mxu0
  %1432 = vdwg.mxu0
  %v1433 = vadd.f32 %v1283, %v1428
  %v1434 = vsel %vm60, %v1433, 0.0
  %1435 = vadd.xlane.f32.xlu0 %v1434
  %v1436 = vpop.xlane.xlu0 %1435
  %v1437 = vmul.f32 %v1436, %v1263
  %v1438 = vsub.f32 %v1433, %v1437
  %v1439 = vmul.f32 %v1438, %v1438
  %v1440 = vsel %vm60, %v1439, 0.0
  %1441 = vadd.xlane.f32.xlu0 %v1440
  %v1442 = vpop.xlane.xlu0 %1441
  %v1443 = vmul.f32 %v1442, %v1263
  %v1444 = vadd.f32 %v1443, 1e-05
  %v1445 = vrsqrt.pop %v1444
  %v1446 = vmul.f32 %v1438, %v1445
  %v1447 = vlaneseq
  %v1448 = vshrl.u32 %v1447, 7
  %v1449 = vsub.s32 5, %v1448
  %v1450 = vrot.slane %v36, %v1449
  %v1451 = vmul.f32 %v1446, %v1450
  %v1452 = vlaneseq
  %v1453 = vshrl.u32 %v1452, 7
  %v1454 = vsub.s32 6, %v1453
  %v1455 = vrot.slane %v36, %v1454
  %v1456 = vadd.f32 %v1451, %v1455
  %1457 = vst.msk [vmem:[%s10] sm:$0xff] %vm60, %v1456
  // Predicated region
  $region42: #{transformer_forward.5} parent=0 // pred_check
    _
  $region43: #{transformer_forward.5} parent=0 // pred_check_branch
    %1459 = sbr.rel (0) target = $region45
  $region44: #{transformer_forward.5} parent=0 // pred_region
    _
  $region45: #{transformer_forward.5} parent=0 // pred_fallthru
    _
  // Predicated region
  $region46: #{transformer_forward.5} parent=0 // pred_check
    _
  $region47: #{transformer_forward.5} parent=0 // pred_check_branch
    %1461 = sbr.rel (0) target = $region49
  $region48: #{transformer_forward.5} parent=0 // pred_region
    _
  $region49: #{transformer_forward.5} parent=0 // pred_fallthru
    _

// kernel: transformer_forward.7
$region0: #{transformer_forward.7}
  #allocation0 [shape = 'u32[]', space=smem, size = 0x4, offset = 0x4, fixed_abs, tag = 'smem constant byte address 0x4 - core index']
  #allocation1 [shape = 'u32[144,128]{1,0:T(1,128)}', space=vmem, size = 0x12000, scoped, tag = 'internal scratch']
  %s0 = inlined_call_operand.vmem [shape: f32[8,32], index: 0, kind: input, shape index: {}, may-alias: {0,1}]
  %s1 = inlined_call_operand.vmem [shape: f32[8,32], index: 1, kind: input, shape index: {}, may-alias: {0,1}]
  %s2 = inlined_call_operand.vmem [shape: f32[8,32], index: 2, kind: input, shape index: {}]
  %s3 = inlined_call_operand.vmem [shape: bf16[32,32], index: 3, kind: input, shape index: {}]
  %s4 = inlined_call_operand.vmem [shape: bf16[32,64], index: 4, kind: input, shape index: {}]
  %s5 = inlined_call_operand.vmem [shape: bf16[32,32], index: 5, kind: input, shape index: {}]
  %s6 = inlined_call_operand.vmem [shape: bf16[32,32], index: 6, kind: input, shape index: {}]
  %s7 = inlined_call_operand.vmem [shape: bf16[32,64], index: 7, kind: input, shape index: {}]
  %s8 = inlined_call_operand.vmem [shape: bf16[32,32], index: 8, kind: input, shape index: {}]
  %s9 = inlined_call_operand.vmem [shape: bf16[32,64], index: 9, kind: input, shape index: {}]
  %s10 = inlined_call_operand.vmem [shape: bf16[64,32], index: 10, kind: input, shape index: {}]
  %s11 = inlined_call_operand.vmem [shape: f32[1,64], index: 11, kind: input, shape index: {}]
  %s12 = inlined_call_operand.vmem [shape: f32[1,64], index: 12, kind: input, shape index: {}]
  %s13 = inlined_call_operand.vmem [shape: f32[1,64], index: 13, kind: input, shape index: {}]
  %s14 = inlined_call_operand.vmem [shape: f32[16,32], index: 14, kind: input, shape index: {}]
  %s15 = inlined_call_operand.vmem [shape: f32[8,32], index: 15, kind: output, shape index: {}]
  %s16 = sld [smem:[#allocation0]]
  $region70: #{transformer_forward.7} parent=0
    _
  %s18 = ssub.s32 1, %s16
  %s19 = scalar_select 0, %s18, %s16
  // Predicated region
  $region2: #{transformer_forward.7} parent=0 // pred_check
    _
  $region3: #{transformer_forward.7} parent=0 // pred_check_branch
    %21 = sbr.rel (0) target = $region5
  $region4: #{transformer_forward.7} parent=0 // pred_region
    _
  $region5: #{transformer_forward.7} parent=0 // pred_fallthru
    _
  // Predicated region
  $region6: #{transformer_forward.7} parent=0 // pred_check
    _
  $region7: #{transformer_forward.7} parent=0 // pred_check_branch
    %23 = sbr.rel (0) target = $region9
  $region8: #{transformer_forward.7} parent=0 // pred_region
    _
  $region9: #{transformer_forward.7} parent=0 // pred_fallthru
    _
  // Predicated region
  $region10: #{transformer_forward.7} parent=0 // pred_check
    _
  $region11: #{transformer_forward.7} parent=0 // pred_check_branch
    %25 = sbr.rel (0) target = $region13
  $region12: #{transformer_forward.7} parent=0 // pred_region
    _
  $region13: #{transformer_forward.7} parent=0 // pred_fallthru
    _
  // Predicated region
  $region14: #{transformer_forward.7} parent=0 // pred_check
    _
  $region15: #{transformer_forward.7} parent=0 // pred_check_branch
    %27 = sbr.rel (0) target = $region17
  $region16: #{transformer_forward.7} parent=0 // pred_region
    _
  $region17: #{transformer_forward.7} parent=0 // pred_fallthru
    _
  // Predicated region
  $region18: #{transformer_forward.7} parent=0 // pred_check
    _
  $region19: #{transformer_forward.7} parent=0 // pred_check_branch
    %29 = sbr.rel (0) target = $region21
  $region20: #{transformer_forward.7} parent=0 // pred_region
    _
  $region21: #{transformer_forward.7} parent=0 // pred_fallthru
    _
  // Predicated region
  $region22: #{transformer_forward.7} parent=0 // pred_check
    _
  $region23: #{transformer_forward.7} parent=0 // pred_check_branch
    %31 = sbr.rel (0) target = $region25
  $region24: #{transformer_forward.7} parent=0 // pred_region
    _
  $region25: #{transformer_forward.7} parent=0 // pred_fallthru
    _
  // Predicated region
  $region26: #{transformer_forward.7} parent=0 // pred_check
    _
  $region27: #{transformer_forward.7} parent=0 // pred_check_branch
    %33 = sbr.rel (0) target = $region29
  $region28: #{transformer_forward.7} parent=0 // pred_region
    _
  $region29: #{transformer_forward.7} parent=0 // pred_fallthru
    _
  // Predicated region
  $region30: #{transformer_forward.7} parent=0 // pred_check
    _
  $region31: #{transformer_forward.7} parent=0 // pred_check_branch
    %35 = sbr.rel (0) target = $region33
  $region32: #{transformer_forward.7} parent=0 // pred_region
    _
  $region33: #{transformer_forward.7} parent=0 // pred_fallthru
    _
  // Predicated region
  $region34: #{transformer_forward.7} parent=0 // pred_check
    _
  $region35: #{transformer_forward.7} parent=0 // pred_check_branch
    %37 = sbr.rel (0) target = $region37
  $region36: #{transformer_forward.7} parent=0 // pred_region
    _
  $region37: #{transformer_forward.7} parent=0 // pred_fallthru
    _
  // Predicated region
  $region38: #{transformer_forward.7} parent=0 // pred_check
    _
  $region39: #{transformer_forward.7} parent=0 // pred_check_branch
    %39 = sbr.rel (0) target = $region41
  $region40: #{transformer_forward.7} parent=0 // pred_region
    _
  $region41: #{transformer_forward.7} parent=0 // pred_fallthru
    _
  // Predicated region
  $region42: #{transformer_forward.7} parent=0 // pred_check
    _
  $region43: #{transformer_forward.7} parent=0 // pred_check_branch
    %41 = sbr.rel (0) target = $region45
  $region44: #{transformer_forward.7} parent=0 // pred_region
    _
  $region45: #{transformer_forward.7} parent=0 // pred_fallthru
    _
  // Predicated region
  $region46: #{transformer_forward.7} parent=0 // pred_check
    _
  $region47: #{transformer_forward.7} parent=0 // pred_check_branch
    %43 = sbr.rel (0) target = $region49
  $region48: #{transformer_forward.7} parent=0 // pred_region
    _
  $region49: #{transformer_forward.7} parent=0 // pred_fallthru
    _
  // Predicated region
  $region50: #{transformer_forward.7} parent=0 // pred_check
    _
  $region51: #{transformer_forward.7} parent=0 // pred_check_branch
    %45 = sbr.rel (0) target = $region53
  $region52: #{transformer_forward.7} parent=0 // pred_region
    _
  $region53: #{transformer_forward.7} parent=0 // pred_fallthru
    _
  // Predicated region
  $region54: #{transformer_forward.7} parent=0 // pred_check
    _
  $region55: #{transformer_forward.7} parent=0 // pred_check_branch
    %47 = sbr.rel (0) target = $region57
  $region56: #{transformer_forward.7} parent=0 // pred_region
    _
  $region57: #{transformer_forward.7} parent=0 // pred_fallthru
    _
  // Predicated region
  $region58: #{transformer_forward.7} parent=0 // pred_check
    _
  $region59: #{transformer_forward.7} parent=0 // pred_check_branch
    %49 = sbr.rel (0) target = $region61
  $region60: #{transformer_forward.7} parent=0 // pred_region
    _
  $region61: #{transformer_forward.7} parent=0 // pred_fallthru
    _
  %v51 = vld [vmem:[%s14] sm:$0xff]
  %v52 = vld [vmem:[%s14 + $0x8] sm:$0xff]
  %v53 = vld [vmem:[%s0] sm:$0xff]
  %v54 = vld [vmem:[%s1] sm:$0xff]
  %v55 = vld [vmem:[%s2] sm:$0xff]
  %s56 = smul.u32 0, 8
  %v57 = vpack.c.bf16 %v53, %v53
  %v58 = vld [vmem:[%s3] sm:$0xf]
  %v59 = vld [vmem:[%s3 + $0x4] sm:$0xf]
  %v60 = vld [vmem:[%s3 + $0x8] sm:$0xf]
  %v61 = vld [vmem:[%s3 + $0xc] sm:$0xf]
  %v62 = vlaneseq
  %v63 = vshrl.u32 %v62, 7
  %v64 = vsub.s32 0, %v63
  %v65 = vrot.slane %v51, %v64
  %v70 = vunpack.c.l.b16 %v58
  %v71 = vunpack.c.l.b16 %v59
  %v72 = vunpack.c.l.b16 %v60
  %v73 = vunpack.c.l.b16 %v61
  %v74 = vpack.c.b16 %v71, %v70
  %v75 = vpack.c.b16 %v73, %v72
  %vm78 = vcmask 261120
  %v80 = vsel %vm78, %v57, 0
  %82 = vmatprep.subr.bf16.mxu0 0
  %83 = vmatpush1.bf16.msra.mxu0 %v74
  %84 = vmatprep.subr.bf16.mxu0 0
  %85 = vmatpush1.bf16.msra.mxu0 %v75
  %86 = vmatprep.subr.bf16.mxu0 0
  %87 = vmatpush1.bf16.msra.mxu0 0
  %88 = vmatprep.subr.bf16.mxu0 0
  %89 = vmatpush1.bf16.msra.mxu0 0
  %90 = vmatprep.subr.bf16.mxu0 0
  %91 = vmatpush1.bf16.msra.mxu0 0
  %92 = vmatprep.subr.bf16.mxu0 0
  %93 = vmatpush1.bf16.msra.mxu0 0
  %94 = vmatprep.subr.bf16.mxu0 0
  %95 = vmatpush1.bf16.msra.mxu0 0
  %96 = vmatprep.subr.bf16.mxu0 0
  %97 = vmatpush1.bf16.msra.mxu0 0
  %98 = vmatprep.subr.bf16.mxu0 0
  %99 = vmatpush1.bf16.msra.mxu0 0
  %100 = vmatprep.subr.bf16.mxu0 0
  %101 = vmatpush1.bf16.msra.mxu0 0
  %102 = vmatprep.subr.bf16.mxu0 0
  %103 = vmatpush1.bf16.msra.mxu0 0
  %104 = vmatprep.subr.bf16.mxu0 0
  %105 = vmatpush1.bf16.msra.mxu0 0
  %106 = vmatprep.subr.bf16.mxu0 0
  %107 = vmatpush1.bf16.msra.mxu0 0
  %108 = vmatprep.subr.bf16.mxu0 0
  %109 = vmatpush1.bf16.msra.mxu0 0
  %110 = vmatprep.subr.bf16.mxu0 0
  %111 = vmatpush1.bf16.msra.mxu0 0
  %112 = vmatprep.subr.bf16.mxu0 0
  %113 = vmatpush1.bf16.msra.mxu0 0
  %114 = vmatprep.mubr.bf16.mxu0 0
  %115 = vmatmul.mubr.bf16.gmra.mrb[0].mxu0 %v80
  %v116 = vpop.f32.mrb[0].mxu0
  %v117 = vadd.f32 %v65, %v116
  %v118 = vpop.f32.mrb[0].mxu0
  %v119 = vpop.f32.mrb[0].mxu0
  %v120 = vpop.f32.mrb[0].mxu0
  %121 = vdwg.mxu0
  %v122 = vpack.c.bf16 %v54, %v54
  %v123 = vld [vmem:[%s4] sm:$0xf]
  %v124 = vld [vmem:[%s4 + $0x4] sm:$0xf]
  %v125 = vld [vmem:[%s4 + $0x8] sm:$0xf]
  %v126 = vld [vmem:[%s4 + $0xc] sm:$0xf]
  %v127 = vld [vmem:[%s11] sm:$0x1]
  %v129 = vlaneseq
  %v130 = vshrl.u32 %v129, 7
  %v131 = vsub.s32 0, %v130
  %v132 = vrot.slane %v127, %v131
  %v138 = vunpack.c.l.b16 %v123
  %v139 = vunpack.c.l.b16 %v124
  %v140 = vunpack.c.l.b16 %v125
  %v141 = vunpack.c.l.b16 %v126
  %v142 = vpack.c.b16 %v139, %v138
  %v143 = vpack.c.b16 %v141, %v140
  %v147 = vsel %vm78, %v122, 0
  %149 = vmatprep.subr.bf16.mxu0 0
  %150 = vmatpush1.bf16.msra.mxu0 %v142
  %151 = vmatprep.subr.bf16.mxu0 0
  %152 = vmatpush1.bf16.msra.mxu0 %v143
  %153 = vmatprep.subr.bf16.mxu0 0
  %154 = vmatpush1.bf16.msra.mxu0 0
  %155 = vmatprep.subr.bf16.mxu0 0
  %156 = vmatpush1.bf16.msra.mxu0 0
  %157 = vmatprep.subr.bf16.mxu0 0
  %158 = vmatpush1.bf16.msra.mxu0 0
  %159 = vmatprep.subr.bf16.mxu0 0
  %160 = vmatpush1.bf16.msra.mxu0 0
  %161 = vmatprep.subr.bf16.mxu0 0
  %162 = vmatpush1.bf16.msra.mxu0 0
  %163 = vmatprep.subr.bf16.mxu0 0
  %164 = vmatpush1.bf16.msra.mxu0 0
  %165 = vmatprep.subr.bf16.mxu0 0
  %166 = vmatpush1.bf16.msra.mxu0 0
  %167 = vmatprep.subr.bf16.mxu0 0
  %168 = vmatpush1.bf16.msra.mxu0 0
  %169 = vmatprep.subr.bf16.mxu0 0
  %170 = vmatpush1.bf16.msra.mxu0 0
  %171 = vmatprep.subr.bf16.mxu0 0
  %172 = vmatpush1.bf16.msra.mxu0 0
  %173 = vmatprep.subr.bf16.mxu0 0
  %174 = vmatpush1.bf16.msra.mxu0 0
  %175 = vmatprep.subr.bf16.mxu0 0
  %176 = vmatpush1.bf16.msra.mxu0 0
  %177 = vmatprep.subr.bf16.mxu0 0
  %178 = vmatpush1.bf16.msra.mxu0 0
  %179 = vmatprep.subr.bf16.mxu0 0
  %180 = vmatpush1.bf16.msra.mxu0 0
  %181 = vmatprep.mubr.bf16.mxu0 0
  %182 = vmatmul.mubr.bf16.gmra.mrb[0].mxu0 %v147
  %v183 = vpop.f32.mrb[0].mxu0
  %v184 = vadd.f32 %v132, %v183
  %v185 = vpop.f32.mrb[0].mxu0
  %v186 = vpop.f32.mrb[0].mxu0
  %v187 = vpop.f32.mrb[0].mxu0
  %188 = vdwg.mxu0
  %v189 = vmul.f32 %v117, 0.35355338
  %191 = vrot.lane.b32.xlu0 %v189, 120
  %v192 = vpop.permute.xlu0 %191
  %194 = vrot.lane.b32.xlu0 %v189, 112
  %v195 = vpop.permute.xlu0 %194
  %197 = vrot.lane.b32.xlu0 %v189, 104
  %v198 = vpop.permute.xlu0 %197
  %v200 = vcombine.low %v189, %v195
  %v201 = vcombine.high %v189, %v195
  %v203 = vunpack.c.l.s4 1983009808
  %v204 = vunpack.c.0.s8 %v203
  %v205 = vlaneseq
  %v206 = vshrl.u32 %v205, 7
  %v207 = vsub.s32 %v204, %v206
  %v208 = vrot.slane %v200, %v207
  %v210 = vunpack.c.l.s4 1983009808
  %v211 = vunpack.c.0.s8 %v210
  %v212 = vlaneseq
  %v213 = vshrl.u32 %v212, 7
  %v214 = vsub.s32 %v211, %v213
  %v215 = vrot.slane %v201, %v214
  %v216 = vcombine.low %v192, %v198
  %v217 = vcombine.high %v192, %v198
  %v219 = vunpack.c.l.s4 1983009808
  %v220 = vunpack.c.0.s8 %v219
  %v221 = vlaneseq
  %v222 = vshrl.u32 %v221, 7
  %v223 = vsub.s32 %v220, %v222
  %v224 = vrot.slane %v216, %v223
  %v226 = vunpack.c.l.s4 1983009808
  %v227 = vunpack.c.0.s8 %v226
  %v228 = vlaneseq
  %v229 = vshrl.u32 %v228, 7
  %v230 = vsub.s32 %v227, %v229
  %v231 = vrot.slane %v217, %v230
  %v232 = vcombine.low %v208, %v224
  %v233 = vcombine.high %v208, %v224
  %v235 = vunpack.c.l.s4 1934713408
  %v236 = vunpack.c.0.s8 %v235
  %v237 = vlaneseq
  %v238 = vshrl.u32 %v237, 7
  %v239 = vsub.s32 %v236, %v238
  %v240 = vrot.slane %v232, %v239
  %v242 = vunpack.c.l.s4 1934713408
  %v243 = vunpack.c.0.s8 %v242
  %v244 = vlaneseq
  %v245 = vshrl.u32 %v244, 7
  %v246 = vsub.s32 %v243, %v245
  %v247 = vrot.slane %v233, %v246
  %v248 = vcombine.low %v215, %v231
  %v249 = vcombine.high %v215, %v231
  %v251 = vunpack.c.l.s4 1934713408
  %v252 = vunpack.c.0.s8 %v251
  %v253 = vlaneseq
  %v254 = vshrl.u32 %v253, 7
  %v255 = vsub.s32 %v252, %v254
  %v256 = vrot.slane %v248, %v255
  %v258 = vunpack.c.l.s4 1934713408
  %v259 = vunpack.c.0.s8 %v258
  %v260 = vlaneseq
  %v261 = vshrl.u32 %v260, 7
  %v262 = vsub.s32 %v259, %v261
  %v263 = vrot.slane %v249, %v262
  %v264 = vcombine.high %v240, 0.0
  %v265 = vcombine.high %v247, 0.0
  %v266 = vcombine.high %v256, 0.0
  %v267 = vcombine.high %v263, 0.0
  %v268 = vcombine.low %v240, %v247
  %v270 = vunpack.c.l.s4 1983009808
  %v271 = vunpack.c.0.s8 %v270
  %v272 = vlaneseq
  %v273 = vshrl.u32 %v272, 7
  %v274 = vsub.s32 %v271, %v273
  %v275 = vrot.slane %v268, %v274
  %v276 = vcombine.low %v264, %v265
  %v278 = vunpack.c.l.s4 1983009808
  %v279 = vunpack.c.0.s8 %v278
  %v280 = vlaneseq
  %v281 = vshrl.u32 %v280, 7
  %v282 = vsub.s32 %v279, %v281
  %v283 = vrot.slane %v276, %v282
  %v284 = vcombine.low %v256, %v263
  %v286 = vunpack.c.l.s4 1983009808
  %v287 = vunpack.c.0.s8 %v286
  %v288 = vlaneseq
  %v289 = vshrl.u32 %v288, 7
  %v290 = vsub.s32 %v287, %v289
  %v291 = vrot.slane %v284, %v290
  %v292 = vcombine.low %v266, %v267
  %v294 = vunpack.c.l.s4 1983009808
  %v295 = vunpack.c.0.s8 %v294
  %v296 = vlaneseq
  %v297 = vshrl.u32 %v296, 7
  %v298 = vsub.s32 %v295, %v297
  %v299 = vrot.slane %v292, %v298
  %v300 = vcombine.low %v275, %v283
  %v301 = vcombine.high %v275, %v283
  %v303 = vunpack.c.l.s4 1934713408
  %v304 = vunpack.c.0.s8 %v303
  %v305 = vlaneseq
  %v306 = vshrl.u32 %v305, 7
  %v307 = vsub.s32 %v304, %v306
  %v308 = vrot.slane %v300, %v307
  %v310 = vunpack.c.l.s4 1934713408
  %v311 = vunpack.c.0.s8 %v310
  %v312 = vlaneseq
  %v313 = vshrl.u32 %v312, 7
  %v314 = vsub.s32 %v311, %v313
  %v315 = vrot.slane %v301, %v314
  %v316 = vcombine.low %v291, %v299
  %v317 = vcombine.high %v291, %v299
  %v319 = vunpack.c.l.s4 1934713408
  %v320 = vunpack.c.0.s8 %v319
  %v321 = vlaneseq
  %v322 = vshrl.u32 %v321, 7
  %v323 = vsub.s32 %v320, %v322
  %v324 = vrot.slane %v316, %v323
  %v326 = vunpack.c.l.s4 1934713408
  %v327 = vunpack.c.0.s8 %v326
  %v328 = vlaneseq
  %v329 = vshrl.u32 %v328, 7
  %v330 = vsub.s32 %v327, %v329
  %v331 = vrot.slane %v317, %v330
  %v332 = vcombine.low %v308, %v324
  %v333 = vcombine.high %v308, %v324
  %v334 = vcombine.low %v315, %v331
  %v335 = vcombine.high %v315, %v331
  %v336 = vpack.c.bf16 %v332, %v332
  %v337 = vpack.c.bf16 %v333, %v333
  %v338 = vpack.c.bf16 %v334, %v334
  %v339 = vpack.c.bf16 %v335, %v335
  %341 = vrot.lane.b32.xlu0 %v184, 120
  %v342 = vpop.permute.xlu0 %341
  %344 = vrot.lane.b32.xlu0 %v184, 112
  %v345 = vpop.permute.xlu0 %344
  %347 = vrot.lane.b32.xlu0 %v184, 104
  %v348 = vpop.permute.xlu0 %347
  %v350 = vcombine.low %v184, %v345
  %v351 = vcombine.high %v184, %v345
  %v353 = vunpack.c.l.s4 1983009808
  %v354 = vunpack.c.0.s8 %v353
  %v355 = vlaneseq
  %v356 = vshrl.u32 %v355, 7
  %v357 = vsub.s32 %v354, %v356
  %v358 = vrot.slane %v350, %v357
  %v360 = vunpack.c.l.s4 1983009808
  %v361 = vunpack.c.0.s8 %v360
  %v362 = vlaneseq
  %v363 = vshrl.u32 %v362, 7
  %v364 = vsub.s32 %v361, %v363
  %v365 = vrot.slane %v351, %v364
  %v366 = vcombine.low %v342, %v348
  %v367 = vcombine.high %v342, %v348
  %v369 = vunpack.c.l.s4 1983009808
  %v370 = vunpack.c.0.s8 %v369
  %v371 = vlaneseq
  %v372 = vshrl.u32 %v371, 7
  %v373 = vsub.s32 %v370, %v372
  %v374 = vrot.slane %v366, %v373
  %v376 = vunpack.c.l.s4 1983009808
  %v377 = vunpack.c.0.s8 %v376
  %v378 = vlaneseq
  %v379 = vshrl.u32 %v378, 7
  %v380 = vsub.s32 %v377, %v379
  %v381 = vrot.slane %v367, %v380
  %v382 = vcombine.low %v358, %v374
  %v383 = vcombine.high %v358, %v374
  %v385 = vunpack.c.l.s4 1934713408
  %v386 = vunpack.c.0.s8 %v385
  %v387 = vlaneseq
  %v388 = vshrl.u32 %v387, 7
  %v389 = vsub.s32 %v386, %v388
  %v390 = vrot.slane %v382, %v389
  %v392 = vunpack.c.l.s4 1934713408
  %v393 = vunpack.c.0.s8 %v392
  %v394 = vlaneseq
  %v395 = vshrl.u32 %v394, 7
  %v396 = vsub.s32 %v393, %v395
  %v397 = vrot.slane %v383, %v396
  %v398 = vcombine.low %v365, %v381
  %v399 = vcombine.high %v365, %v381
  %v401 = vunpack.c.l.s4 1934713408
  %v402 = vunpack.c.0.s8 %v401
  %v403 = vlaneseq
  %v404 = vshrl.u32 %v403, 7
  %v405 = vsub.s32 %v402, %v404
  %v406 = vrot.slane %v398, %v405
  %v408 = vunpack.c.l.s4 1934713408
  %v409 = vunpack.c.0.s8 %v408
  %v410 = vlaneseq
  %v411 = vshrl.u32 %v410, 7
  %v412 = vsub.s32 %v409, %v411
  %v413 = vrot.slane %v399, %v412
  %v414 = vcombine.high %v390, 0.0
  %v415 = vcombine.high %v397, 0.0
  %v416 = vcombine.high %v406, 0.0
  %v417 = vcombine.high %v413, 0.0
  %v418 = vcombine.low %v390, %v397
  %v420 = vunpack.c.l.s4 1983009808
  %v421 = vunpack.c.0.s8 %v420
  %v422 = vlaneseq
  %v423 = vshrl.u32 %v422, 7
  %v424 = vsub.s32 %v421, %v423
  %v425 = vrot.slane %v418, %v424
  %v426 = vcombine.low %v414, %v415
  %v428 = vunpack.c.l.s4 1983009808
  %v429 = vunpack.c.0.s8 %v428
  %v430 = vlaneseq
  %v431 = vshrl.u32 %v430, 7
  %v432 = vsub.s32 %v429, %v431
  %v433 = vrot.slane %v426, %v432
  %v434 = vcombine.low %v406, %v413
  %v436 = vunpack.c.l.s4 1983009808
  %v437 = vunpack.c.0.s8 %v436
  %v438 = vlaneseq
  %v439 = vshrl.u32 %v438, 7
  %v440 = vsub.s32 %v437, %v439
  %v441 = vrot.slane %v434, %v440
  %v442 = vcombine.low %v416, %v417
  %v444 = vunpack.c.l.s4 1983009808
  %v445 = vunpack.c.0.s8 %v444
  %v446 = vlaneseq
  %v447 = vshrl.u32 %v446, 7
  %v448 = vsub.s32 %v445, %v447
  %v449 = vrot.slane %v442, %v448
  %v450 = vcombine.low %v425, %v433
  %v451 = vcombine.high %v425, %v433
  %v453 = vunpack.c.l.s4 1934713408
  %v454 = vunpack.c.0.s8 %v453
  %v455 = vlaneseq
  %v456 = vshrl.u32 %v455, 7
  %v457 = vsub.s32 %v454, %v456
  %v458 = vrot.slane %v450, %v457
  %v460 = vunpack.c.l.s4 1934713408
  %v461 = vunpack.c.0.s8 %v460
  %v462 = vlaneseq
  %v463 = vshrl.u32 %v462, 7
  %v464 = vsub.s32 %v461, %v463
  %v465 = vrot.slane %v451, %v464
  %v466 = vcombine.low %v441, %v449
  %v467 = vcombine.high %v441, %v449
  %v469 = vunpack.c.l.s4 1934713408
  %v470 = vunpack.c.0.s8 %v469
  %v471 = vlaneseq
  %v472 = vshrl.u32 %v471, 7
  %v473 = vsub.s32 %v470, %v472
  %v474 = vrot.slane %v466, %v473
  %v476 = vunpack.c.l.s4 1934713408
  %v477 = vunpack.c.0.s8 %v476
  %v478 = vlaneseq
  %v479 = vshrl.u32 %v478, 7
  %v480 = vsub.s32 %v477, %v479
  %v481 = vrot.slane %v467, %v480
  %v482 = vcombine.low %v458, %v474
  %v483 = vcombine.high %v458, %v474
  %v484 = vcombine.low %v465, %v481
  %v485 = vcombine.high %v465, %v481
  %v486 = vpack.c.bf16 %v482, %v482
  %v487 = vpack.c.bf16 %v483, %v483
  %v488 = vpack.c.bf16 %v484, %v484
  %v489 = vpack.c.bf16 %v485, %v485
  %490 = vrot.lane.b32.xlu0 %v184, 96
  %v491 = vpop.permute.xlu0 %490
  %492 = vrot.lane.b32.xlu0 %v342, 96
  %v493 = vpop.permute.xlu0 %492
  %494 = vrot.lane.b32.xlu0 %v345, 96
  %v495 = vpop.permute.xlu0 %494
  %496 = vrot.lane.b32.xlu0 %v348, 96
  %v497 = vpop.permute.xlu0 %496
  %v502 = vcombine.low %v491, %v495
  %v503 = vcombine.high %v491, %v495
  %v505 = vunpack.c.l.s4 1983009808
  %v506 = vunpack.c.0.s8 %v505
  %v507 = vlaneseq
  %v508 = vshrl.u32 %v507, 7
  %v509 = vsub.s32 %v506, %v508
  %v510 = vrot.slane %v502, %v509
  %v512 = vunpack.c.l.s4 1983009808
  %v513 = vunpack.c.0.s8 %v512
  %v514 = vlaneseq
  %v515 = vshrl.u32 %v514, 7
  %v516 = vsub.s32 %v513, %v515
  %v517 = vrot.slane %v503, %v516
  %v518 = vcombine.low %v493, %v497
  %v519 = vcombine.high %v493, %v497
  %v521 = vunpack.c.l.s4 1983009808
  %v522 = vunpack.c.0.s8 %v521
  %v523 = vlaneseq
  %v524 = vshrl.u32 %v523, 7
  %v525 = vsub.s32 %v522, %v524
  %v526 = vrot.slane %v518, %v525
  %v528 = vunpack.c.l.s4 1983009808
  %v529 = vunpack.c.0.s8 %v528
  %v530 = vlaneseq
  %v531 = vshrl.u32 %v530, 7
  %v532 = vsub.s32 %v529, %v531
  %v533 = vrot.slane %v519, %v532
  %v534 = vcombine.low %v510, %v526
  %v535 = vcombine.high %v510, %v526
  %v537 = vunpack.c.l.s4 1934713408
  %v538 = vunpack.c.0.s8 %v537
  %v539 = vlaneseq
  %v540 = vshrl.u32 %v539, 7
  %v541 = vsub.s32 %v538, %v540
  %v542 = vrot.slane %v534, %v541
  %v544 = vunpack.c.l.s4 1934713408
  %v545 = vunpack.c.0.s8 %v544
  %v546 = vlaneseq
  %v547 = vshrl.u32 %v546, 7
  %v548 = vsub.s32 %v545, %v547
  %v549 = vrot.slane %v535, %v548
  %v550 = vcombine.low %v517, %v533
  %v551 = vcombine.high %v517, %v533
  %v553 = vunpack.c.l.s4 1934713408
  %v554 = vunpack.c.0.s8 %v553
  %v555 = vlaneseq
  %v556 = vshrl.u32 %v555, 7
  %v557 = vsub.s32 %v554, %v556
  %v558 = vrot.slane %v550, %v557
  %v560 = vunpack.c.l.s4 1934713408
  %v561 = vunpack.c.0.s8 %v560
  %v562 = vlaneseq
  %v563 = vshrl.u32 %v562, 7
  %v564 = vsub.s32 %v561, %v563
  %v565 = vrot.slane %v551, %v564
  %v566 = vcombine.high %v542, 0.0
  %v567 = vcombine.high %v549, 0.0
  %v568 = vcombine.high %v558, 0.0
  %v569 = vcombine.high %v565, 0.0
  %v570 = vcombine.low %v542, %v549
  %v572 = vunpack.c.l.s4 1983009808
  %v573 = vunpack.c.0.s8 %v572
  %v574 = vlaneseq
  %v575 = vshrl.u32 %v574, 7
  %v576 = vsub.s32 %v573, %v575
  %v577 = vrot.slane %v570, %v576
  %v578 = vcombine.low %v566, %v567
  %v580 = vunpack.c.l.s4 1983009808
  %v581 = vunpack.c.0.s8 %v580
  %v582 = vlaneseq
  %v583 = vshrl.u32 %v582, 7
  %v584 = vsub.s32 %v581, %v583
  %v585 = vrot.slane %v578, %v584
  %v586 = vcombine.low %v558, %v565
  %v588 = vunpack.c.l.s4 1983009808
  %v589 = vunpack.c.0.s8 %v588
  %v590 = vlaneseq
  %v591 = vshrl.u32 %v590, 7
  %v592 = vsub.s32 %v589, %v591
  %v593 = vrot.slane %v586, %v592
  %v594 = vcombine.low %v568, %v569
  %v596 = vunpack.c.l.s4 1983009808
  %v597 = vunpack.c.0.s8 %v596
  %v598 = vlaneseq
  %v599 = vshrl.u32 %v598, 7
  %v600 = vsub.s32 %v597, %v599
  %v601 = vrot.slane %v594, %v600
  %v602 = vcombine.low %v577, %v585
  %v603 = vcombine.high %v577, %v585
  %v605 = vunpack.c.l.s4 1934713408
  %v606 = vunpack.c.0.s8 %v605
  %v607 = vlaneseq
  %v608 = vshrl.u32 %v607, 7
  %v609 = vsub.s32 %v606, %v608
  %v610 = vrot.slane %v602, %v609
  %v612 = vunpack.c.l.s4 1934713408
  %v613 = vunpack.c.0.s8 %v612
  %v614 = vlaneseq
  %v615 = vshrl.u32 %v614, 7
  %v616 = vsub.s32 %v613, %v615
  %v617 = vrot.slane %v603, %v616
  %v618 = vcombine.low %v593, %v601
  %v619 = vcombine.high %v593, %v601
  %v621 = vunpack.c.l.s4 1934713408
  %v622 = vunpack.c.0.s8 %v621
  %v623 = vlaneseq
  %v624 = vshrl.u32 %v623, 7
  %v625 = vsub.s32 %v622, %v624
  %v626 = vrot.slane %v618, %v625
  %v628 = vunpack.c.l.s4 1934713408
  %v629 = vunpack.c.0.s8 %v628
  %v630 = vlaneseq
  %v631 = vshrl.u32 %v630, 7
  %v632 = vsub.s32 %v629, %v631
  %v633 = vrot.slane %v619, %v632
  %v634 = vcombine.low %v610, %v626
  %v635 = vcombine.high %v610, %v626
  %v636 = vcombine.low %v617, %v633
  %v637 = vcombine.high %v617, %v633
  %v638 = vpack.c.bf16 %v634, %v634
  %v639 = vpack.c.bf16 %v635, %v635
  %v640 = vpack.c.bf16 %v636, %v636
  %v641 = vpack.c.bf16 %v637, %v637
  %v642 = vlaneseq
  %v643 = vshrl.u32 %v642, 7
  %v644 = vstv %s56
  %v645 = vadd.s32 %v644, %v643
  %v646 = vlaneseq
  %v647 = vand.u32 %v646, 127
  %vm648 = vcmp.le.s32.totalorder %v647, %v645
  %v649 = vsel %vm648, 0.0, -1e+09
  %vm650 = vcmask 64512
  %v652 = vsel %vm650, %v336, 0
  %v655 = vsel %vm650, %v486, 0
  %657 = vmatprep.subr.bf16.mxu0 0
  %658 = vmatpush1.bf16.xpose.msra.mxu0 %v655
  %659 = vmatprep.subr.bf16.mxu0 0
  %660 = vmatpush1.bf16.xpose.msra.mxu0 0
  %661 = vmatprep.subr.bf16.mxu0 0
  %662 = vmatpush1.bf16.xpose.msra.mxu0 0
  %663 = vmatprep.subr.bf16.mxu0 0
  %664 = vmatpush1.bf16.xpose.msra.mxu0 0
  %665 = vmatprep.subr.bf16.mxu0 0
  %666 = vmatpush1.bf16.xpose.msra.mxu0 0
  %667 = vmatprep.subr.bf16.mxu0 0
  %668 = vmatpush1.bf16.xpose.msra.mxu0 0
  %669 = vmatprep.subr.bf16.mxu0 0
  %670 = vmatpush1.bf16.xpose.msra.mxu0 0
  %671 = vmatprep.subr.bf16.mxu0 0
  %672 = vmatpush1.bf16.xpose.msra.mxu0 0
  %673 = vmatprep.subr.bf16.mxu0 0
  %674 = vmatpush1.bf16.xpose.msra.mxu0 0
  %675 = vmatprep.subr.bf16.mxu0 0
  %676 = vmatpush1.bf16.xpose.msra.mxu0 0
  %677 = vmatprep.subr.bf16.mxu0 0
  %678 = vmatpush1.bf16.xpose.msra.mxu0 0
  %679 = vmatprep.subr.bf16.mxu0 0
  %680 = vmatpush1.bf16.xpose.msra.mxu0 0
  %681 = vmatprep.subr.bf16.mxu0 0
  %682 = vmatpush1.bf16.xpose.msra.mxu0 0
  %683 = vmatprep.subr.bf16.mxu0 0
  %684 = vmatpush1.bf16.xpose.msra.mxu0 0
  %685 = vmatprep.subr.bf16.mxu0 0
  %686 = vmatpush1.bf16.xpose.msra.mxu0 0
  %687 = vmatprep.subr.bf16.mxu0 0
  %688 = vmatpush1.bf16.xpose.msra.mxu0 0
  %689 = vmatprep.mubr.bf16.mxu0 0
  %690 = vmatmul.mubr.bf16.gmra.mrb[0].mxu0 %v652
  %v691 = vpop.f32.mrb[0].mxu0
  %v692 = vadd.f32 %v649, %v691
  %v693 = vpop.f32.mrb[0].mxu0
  %v694 = vpop.f32.mrb[0].mxu0
  %v695 = vpop.f32.mrb[0].mxu0
  %696 = vdwg.mxu0
  %v698 = vsel %vm650, %v337, 0
  %v701 = vsel %vm650, %v487, 0
  %703 = vmatprep.subr.bf16.mxu0 0
  %704 = vmatpush1.bf16.xpose.msra.mxu0 %v701
  %705 = vmatprep.subr.bf16.mxu0 0
  %706 = vmatpush1.bf16.xpose.msra.mxu0 0
  %707 = vmatprep.subr.bf16.mxu0 0
  %708 = vmatpush1.bf16.xpose.msra.mxu0 0
  %709 = vmatprep.subr.bf16.mxu0 0
  %710 = vmatpush1.bf16.xpose.msra.mxu0 0
  %711 = vmatprep.subr.bf16.mxu0 0
  %712 = vmatpush1.bf16.xpose.msra.mxu0 0
  %713 = vmatprep.subr.bf16.mxu0 0
  %714 = vmatpush1.bf16.xpose.msra.mxu0 0
  %715 = vmatprep.subr.bf16.mxu0 0
  %716 = vmatpush1.bf16.xpose.msra.mxu0 0
  %717 = vmatprep.subr.bf16.mxu0 0
  %718 = vmatpush1.bf16.xpose.msra.mxu0 0
  %719 = vmatprep.subr.bf16.mxu0 0
  %720 = vmatpush1.bf16.xpose.msra.mxu0 0
  %721 = vmatprep.subr.bf16.mxu0 0
  %722 = vmatpush1.bf16.xpose.msra.mxu0 0
  %723 = vmatprep.subr.bf16.mxu0 0
  %724 = vmatpush1.bf16.xpose.msra.mxu0 0
  %725 = vmatprep.subr.bf16.mxu0 0
  %726 = vmatpush1.bf16.xpose.msra.mxu0 0
  %727 = vmatprep.subr.bf16.mxu0 0
  %728 = vmatpush1.bf16.xpose.msra.mxu0 0
  %729 = vmatprep.subr.bf16.mxu0 0
  %730 = vmatpush1.bf16.xpose.msra.mxu0 0
  %731 = vmatprep.subr.bf16.mxu0 0
  %732 = vmatpush1.bf16.xpose.msra.mxu0 0
  %733 = vmatprep.subr.bf16.mxu0 0
  %734 = vmatpush1.bf16.xpose.msra.mxu0 0
  %735 = vmatprep.mubr.bf16.mxu0 0
  %736 = vmatmul.mubr.bf16.gmra.mrb[0].mxu0 %v698
  %v737 = vpop.f32.mrb[0].mxu0
  %v738 = vadd.f32 %v649, %v737
  %v739 = vpop.f32.mrb[0].mxu0
  %v740 = vpop.f32.mrb[0].mxu0
  %v741 = vpop.f32.mrb[0].mxu0
  %742 = vdwg.mxu0
  %v744 = vsel %vm650, %v338, 0
  %v747 = vsel %vm650, %v488, 0
  %749 = vmatprep.subr.bf16.mxu0 0
  %750 = vmatpush1.bf16.xpose.msra.mxu0 %v747
  %751 = vmatprep.subr.bf16.mxu0 0
  %752 = vmatpush1.bf16.xpose.msra.mxu0 0
  %753 = vmatprep.subr.bf16.mxu0 0
  %754 = vmatpush1.bf16.xpose.msra.mxu0 0
  %755 = vmatprep.subr.bf16.mxu0 0
  %756 = vmatpush1.bf16.xpose.msra.mxu0 0
  %757 = vmatprep.subr.bf16.mxu0 0
  %758 = vmatpush1.bf16.xpose.msra.mxu0 0
  %759 = vmatprep.subr.bf16.mxu0 0
  %760 = vmatpush1.bf16.xpose.msra.mxu0 0
  %761 = vmatprep.subr.bf16.mxu0 0
  %762 = vmatpush1.bf16.xpose.msra.mxu0 0
  %763 = vmatprep.subr.bf16.mxu0 0
  %764 = vmatpush1.bf16.xpose.msra.mxu0 0
  %765 = vmatprep.subr.bf16.mxu0 0
  %766 = vmatpush1.bf16.xpose.msra.mxu0 0
  %767 = vmatprep.subr.bf16.mxu0 0
  %768 = vmatpush1.bf16.xpose.msra.mxu0 0
  %769 = vmatprep.subr.bf16.mxu0 0
  %770 = vmatpush1.bf16.xpose.msra.mxu0 0
  %771 = vmatprep.subr.bf16.mxu0 0
  %772 = vmatpush1.bf16.xpose.msra.mxu0 0
  %773 = vmatprep.subr.bf16.mxu0 0
  %774 = vmatpush1.bf16.xpose.msra.mxu0 0
  %775 = vmatprep.subr.bf16.mxu0 0
  %776 = vmatpush1.bf16.xpose.msra.mxu0 0
  %777 = vmatprep.subr.bf16.mxu0 0
  %778 = vmatpush1.bf16.xpose.msra.mxu0 0
  %779 = vmatprep.subr.bf16.mxu0 0
  %780 = vmatpush1.bf16.xpose.msra.mxu0 0
  %781 = vmatprep.mubr.bf16.mxu0 0
  %782 = vmatmul.mubr.bf16.gmra.mrb[0].mxu0 %v744
  %v783 = vpop.f32.mrb[0].mxu0
  %v784 = vadd.f32 %v649, %v783
  %v785 = vpop.f32.mrb[0].mxu0
  %v786 = vpop.f32.mrb[0].mxu0
  %v787 = vpop.f32.mrb[0].mxu0
  %788 = vdwg.mxu0
  %v790 = vsel %vm650, %v339, 0
  %v793 = vsel %vm650, %v489, 0
  %795 = vmatprep.subr.bf16.mxu0 0
  %796 = vmatpush1.bf16.xpose.msra.mxu0 %v793
  %797 = vmatprep.subr.bf16.mxu0 0
  %798 = vmatpush1.bf16.xpose.msra.mxu0 0
  %799 = vmatprep.subr.bf16.mxu0 0
  %800 = vmatpush1.bf16.xpose.msra.mxu0 0
  %801 = vmatprep.subr.bf16.mxu0 0
  %802 = vmatpush1.bf16.xpose.msra.mxu0 0
  %803 = vmatprep.subr.bf16.mxu0 0
  %804 = vmatpush1.bf16.xpose.msra.mxu0 0
  %805 = vmatprep.subr.bf16.mxu0 0
  %806 = vmatpush1.bf16.xpose.msra.mxu0 0
  %807 = vmatprep.subr.bf16.mxu0 0
  %808 = vmatpush1.bf16.xpose.msra.mxu0 0
  %809 = vmatprep.subr.bf16.mxu0 0
  %810 = vmatpush1.bf16.xpose.msra.mxu0 0
  %811 = vmatprep.subr.bf16.mxu0 0
  %812 = vmatpush1.bf16.xpose.msra.mxu0 0
  %813 = vmatprep.subr.bf16.mxu0 0
  %814 = vmatpush1.bf16.xpose.msra.mxu0 0
  %815 = vmatprep.subr.bf16.mxu0 0
  %816 = vmatpush1.bf16.xpose.msra.mxu0 0
  %817 = vmatprep.subr.bf16.mxu0 0
  %818 = vmatpush1.bf16.xpose.msra.mxu0 0
  %819 = vmatprep.subr.bf16.mxu0 0
  %820 = vmatpush1.bf16.xpose.msra.mxu0 0
  %821 = vmatprep.subr.bf16.mxu0 0
  %822 = vmatpush1.bf16.xpose.msra.mxu0 0
  %823 = vmatprep.subr.bf16.mxu0 0
  %824 = vmatpush1.bf16.xpose.msra.mxu0 0
  %825 = vmatprep.subr.bf16.mxu0 0
  %826 = vmatpush1.bf16.xpose.msra.mxu0 0
  %827 = vmatprep.mubr.bf16.mxu0 0
  %828 = vmatmul.mubr.bf16.gmra.mrb[0].mxu0 %v790
  %v829 = vpop.f32.mrb[0].mxu0
  %v830 = vadd.f32 %v649, %v829
  %v831 = vpop.f32.mrb[0].mxu0
  %v832 = vpop.f32.mrb[0].mxu0
  %v833 = vpop.f32.mrb[0].mxu0
  %834 = vdwg.mxu0
  %v835 = vsel %vm650, %v692, -inf
  %836 = vmax.xlane.f32.xlu0 %v835
  %v837 = vpop.xlane.xlu0 %836
  %v838 = vsel %vm650, %v738, -inf
  %839 = vmax.xlane.f32.xlu0 %v838
  %v840 = vpop.xlane.xlu0 %839
  %v841 = vsel %vm650, %v784, -inf
  %842 = vmax.xlane.f32.xlu0 %v841
  %v843 = vpop.xlane.xlu0 %842
  %v844 = vsel %vm650, %v830, -inf
  %845 = vmax.xlane.f32.xlu0 %v844
  %v846 = vpop.xlane.xlu0 %845
  %v847 = vsub.f32 %v692, %v837
  %v848 = vsub.f32 %v738, %v840
  %v849 = vsub.f32 %v784, %v843
  %v850 = vsub.f32 %v830, %v846
  %v851 = vmul.f32 %v847, 1.442695
  %v852 = vpow.pop %v851
  %v853 = vmul.f32 %v848, 1.442695
  %v854 = vpow.pop %v853
  %v855 = vmul.f32 %v849, 1.442695
  %v856 = vpow.pop %v855
  %v857 = vmul.f32 %v850, 1.442695
  %v858 = vpow.pop %v857
  %v859 = vsel %vm650, %v852, 0.0
  %860 = vadd.xlane.f32.xlu0 %v859
  %v861 = vpop.xlane.xlu0 %860
  %v862 = vsel %vm650, %v854, 0.0
  %863 = vadd.xlane.f32.xlu0 %v862
  %v864 = vpop.xlane.xlu0 %863
  %v865 = vsel %vm650, %v856, 0.0
  %866 = vadd.xlane.f32.xlu0 %v865
  %v867 = vpop.xlane.xlu0 %866
  %v868 = vsel %vm650, %v858, 0.0
  %869 = vadd.xlane.f32.xlu0 %v868
  %v870 = vpop.xlane.xlu0 %869
  %v871 = vrcp.pop %v861
  %v872 = vrcp.pop %v864
  %v873 = vrcp.pop %v867
  %v874 = vrcp.pop %v870
  %v875 = vmul.f32 %v852, %v871
  %v876 = vmul.f32 %v854, %v872
  %v877 = vmul.f32 %v856, %v873
  %v878 = vmul.f32 %v858, %v874
  %v879 = vpack.c.bf16 %v875, %v875
  %v880 = vpack.c.bf16 %v876, %v876
  %v881 = vpack.c.bf16 %v877, %v877
  %v882 = vpack.c.bf16 %v878, %v878
  %v884 = vsel %vm650, %v879, 0
  %vm886 = vcmask 1043456
  %v888 = vsel %vm886, %v638, 0
  %890 = vmatprep.subr.bf16.mxu0 0
  %891 = vmatpush1.bf16.msra.mxu0 %v888
  %892 = vmatprep.subr.bf16.mxu0 0
  %893 = vmatpush1.bf16.msra.mxu0 0
  %894 = vmatprep.subr.bf16.mxu0 0
  %895 = vmatpush1.bf16.msra.mxu0 0
  %896 = vmatprep.subr.bf16.mxu0 0
  %897 = vmatpush1.bf16.msra.mxu0 0
  %898 = vmatprep.subr.bf16.mxu0 0
  %899 = vmatpush1.bf16.msra.mxu0 0
  %900 = vmatprep.subr.bf16.mxu0 0
  %901 = vmatpush1.bf16.msra.mxu0 0
  %902 = vmatprep.subr.bf16.mxu0 0
  %903 = vmatpush1.bf16.msra.mxu0 0
  %904 = vmatprep.subr.bf16.mxu0 0
  %905 = vmatpush1.bf16.msra.mxu0 0
  %906 = vmatprep.subr.bf16.mxu0 0
  %907 = vmatpush1.bf16.msra.mxu0 0
  %908 = vmatprep.subr.bf16.mxu0 0
  %909 = vmatpush1.bf16.msra.mxu0 0
  %910 = vmatprep.subr.bf16.mxu0 0
  %911 = vmatpush1.bf16.msra.mxu0 0
  %912 = vmatprep.subr.bf16.mxu0 0
  %913 = vmatpush1.bf16.msra.mxu0 0
  %914 = vmatprep.subr.bf16.mxu0 0
  %915 = vmatpush1.bf16.msra.mxu0 0
  %916 = vmatprep.subr.bf16.mxu0 0
  %917 = vmatpush1.bf16.msra.mxu0 0
  %918 = vmatprep.subr.bf16.mxu0 0
  %919 = vmatpush1.bf16.msra.mxu0 0
  %920 = vmatprep.subr.bf16.mxu0 0
  %921 = vmatpush1.bf16.msra.mxu0 0
  %922 = vmatprep.mubr.bf16.mxu0 0
  %923 = vmatmul.mubr.bf16.gmra.mrb[0].mxu0 %v884
  %v924 = vpop.f32.mrb[0].mxu0
  %v925 = vadd.f32 0.0, %v924
  %v926 = vpop.f32.mrb[0].mxu0
  %v927 = vpop.f32.mrb[0].mxu0
  %v928 = vpop.f32.mrb[0].mxu0
  %929 = vdwg.mxu0
  %v931 = vsel %vm650, %v880, 0
  %v934 = vsel %vm886, %v639, 0
  %936 = vmatprep.subr.bf16.mxu0 0
  %937 = vmatpush1.bf16.msra.mxu0 %v934
  %938 = vmatprep.subr.bf16.mxu0 0
  %939 = vmatpush1.bf16.msra.mxu0 0
  %940 = vmatprep.subr.bf16.mxu0 0
  %941 = vmatpush1.bf16.msra.mxu0 0
  %942 = vmatprep.subr.bf16.mxu0 0
  %943 = vmatpush1.bf16.msra.mxu0 0
  %944 = vmatprep.subr.bf16.mxu0 0
  %945 = vmatpush1.bf16.msra.mxu0 0
  %946 = vmatprep.subr.bf16.mxu0 0
  %947 = vmatpush1.bf16.msra.mxu0 0
  %948 = vmatprep.subr.bf16.mxu0 0
  %949 = vmatpush1.bf16.msra.mxu0 0
  %950 = vmatprep.subr.bf16.mxu0 0
  %951 = vmatpush1.bf16.msra.mxu0 0
  %952 = vmatprep.subr.bf16.mxu0 0
  %953 = vmatpush1.bf16.msra.mxu0 0
  %954 = vmatprep.subr.bf16.mxu0 0
  %955 = vmatpush1.bf16.msra.mxu0 0
  %956 = vmatprep.subr.bf16.mxu0 0
  %957 = vmatpush1.bf16.msra.mxu0 0
  %958 = vmatprep.subr.bf16.mxu0 0
  %959 = vmatpush1.bf16.msra.mxu0 0
  %960 = vmatprep.subr.bf16.mxu0 0
  %961 = vmatpush1.bf16.msra.mxu0 0
  %962 = vmatprep.subr.bf16.mxu0 0
  %963 = vmatpush1.bf16.msra.mxu0 0
  %964 = vmatprep.subr.bf16.mxu0 0
  %965 = vmatpush1.bf16.msra.mxu0 0
  %966 = vmatprep.subr.bf16.mxu0 0
  %967 = vmatpush1.bf16.msra.mxu0 0
  %968 = vmatprep.mubr.bf16.mxu0 0
  %969 = vmatmul.mubr.bf16.gmra.mrb[0].mxu0 %v931
  %v970 = vpop.f32.mrb[0].mxu0
  %v971 = vadd.f32 0.0, %v970
  %v972 = vpop.f32.mrb[0].mxu0
  %v973 = vpop.f32.mrb[0].mxu0
  %v974 = vpop.f32.mrb[0].mxu0
  %975 = vdwg.mxu0
  %v977 = vsel %vm650, %v881, 0
  %v980 = vsel %vm886, %v640, 0
  %982 = vmatprep.subr.bf16.mxu0 0
  %983 = vmatpush1.bf16.msra.mxu0 %v980
  %984 = vmatprep.subr.bf16.mxu0 0
  %985 = vmatpush1.bf16.msra.mxu0 0
  %986 = vmatprep.subr.bf16.mxu0 0
  %987 = vmatpush1.bf16.msra.mxu0 0
  %988 = vmatprep.subr.bf16.mxu0 0
  %989 = vmatpush1.bf16.msra.mxu0 0
  %990 = vmatprep.subr.bf16.mxu0 0
  %991 = vmatpush1.bf16.msra.mxu0 0
  %992 = vmatprep.subr.bf16.mxu0 0
  %993 = vmatpush1.bf16.msra.mxu0 0
  %994 = vmatprep.subr.bf16.mxu0 0
  %995 = vmatpush1.bf16.msra.mxu0 0
  %996 = vmatprep.subr.bf16.mxu0 0
  %997 = vmatpush1.bf16.msra.mxu0 0
  %998 = vmatprep.subr.bf16.mxu0 0
  %999 = vmatpush1.bf16.msra.mxu0 0
  %1000 = vmatprep.subr.bf16.mxu0 0
  %1001 = vmatpush1.bf16.msra.mxu0 0
  %1002 = vmatprep.subr.bf16.mxu0 0
  %1003 = vmatpush1.bf16.msra.mxu0 0
  %1004 = vmatprep.subr.bf16.mxu0 0
  %1005 = vmatpush1.bf16.msra.mxu0 0
  %1006 = vmatprep.subr.bf16.mxu0 0
  %1007 = vmatpush1.bf16.msra.mxu0 0
  %1008 = vmatprep.subr.bf16.mxu0 0
  %1009 = vmatpush1.bf16.msra.mxu0 0
  %1010 = vmatprep.subr.bf16.mxu0 0
  %1011 = vmatpush1.bf16.msra.mxu0 0
  %1012 = vmatprep.subr.bf16.mxu0 0
  %1013 = vmatpush1.bf16.msra.mxu0 0
  %1014 = vmatprep.mubr.bf16.mxu0 0
  %1015 = vmatmul.mubr.bf16.gmra.mrb[0].mxu0 %v977
  %v1016 = vpop.f32.mrb[0].mxu0
  %v1017 = vadd.f32 0.0, %v1016
  %v1018 = vpop.f32.mrb[0].mxu0
  %v1019 = vpop.f32.mrb[0].mxu0
  %v1020 = vpop.f32.mrb[0].mxu0
  %1021 = vdwg.mxu0
  %v1023 = vsel %vm650, %v882, 0
  %v1026 = vsel %vm886, %v641, 0
  %1028 = vmatprep.subr.bf16.mxu0 0
  %1029 = vmatpush1.bf16.msra.mxu0 %v1026
  %1030 = vmatprep.subr.bf16.mxu0 0
  %1031 = vmatpush1.bf16.msra.mxu0 0
  %1032 = vmatprep.subr.bf16.mxu0 0
  %1033 = vmatpush1.bf16.msra.mxu0 0
  %1034 = vmatprep.subr.bf16.mxu0 0
  %1035 = vmatpush1.bf16.msra.mxu0 0
  %1036 = vmatprep.subr.bf16.mxu0 0
  %1037 = vmatpush1.bf16.msra.mxu0 0
  %1038 = vmatprep.subr.bf16.mxu0 0
  %1039 = vmatpush1.bf16.msra.mxu0 0
  %1040 = vmatprep.subr.bf16.mxu0 0
  %1041 = vmatpush1.bf16.msra.mxu0 0
  %1042 = vmatprep.subr.bf16.mxu0 0
  %1043 = vmatpush1.bf16.msra.mxu0 0
  %1044 = vmatprep.subr.bf16.mxu0 0
  %1045 = vmatpush1.bf16.msra.mxu0 0
  %1046 = vmatprep.subr.bf16.mxu0 0
  %1047 = vmatpush1.bf16.msra.mxu0 0
  %1048 = vmatprep.subr.bf16.mxu0 0
  %1049 = vmatpush1.bf16.msra.mxu0 0
  %1050 = vmatprep.subr.bf16.mxu0 0
  %1051 = vmatpush1.bf16.msra.mxu0 0
  %1052 = vmatprep.subr.bf16.mxu0 0
  %1053 = vmatpush1.bf16.msra.mxu0 0
  %1054 = vmatprep.subr.bf16.mxu0 0
  %1055 = vmatpush1.bf16.msra.mxu0 0
  %1056 = vmatprep.subr.bf16.mxu0 0
  %1057 = vmatpush1.bf16.msra.mxu0 0
  %1058 = vmatprep.subr.bf16.mxu0 0
  %1059 = vmatpush1.bf16.msra.mxu0 0
  %1060 = vmatprep.mubr.bf16.mxu0 0
  %1061 = vmatmul.mubr.bf16.gmra.mrb[0].mxu0 %v1023
  %v1062 = vpop.f32.mrb[0].mxu0
  %v1063 = vadd.f32 0.0, %v1062
  %v1064 = vpop.f32.mrb[0].mxu0
  %v1065 = vpop.f32.mrb[0].mxu0
  %v1066 = vpop.f32.mrb[0].mxu0
  %1067 = vdwg.mxu0
  %v1068 = vcombine.low %v925, %v1017
  %v1069 = vcombine.high %v925, %v1017
  %v1071 = vunpack.c.l.s4 1983009808
  %v1072 = vunpack.c.0.s8 %v1071
  %v1073 = vlaneseq
  %v1074 = vshrl.u32 %v1073, 7
  %v1075 = vsub.s32 %v1072, %v1074
  %v1076 = vrot.slane %v1068, %v1075
  %v1078 = vunpack.c.l.s4 1983009808
  %v1079 = vunpack.c.0.s8 %v1078
  %v1080 = vlaneseq
  %v1081 = vshrl.u32 %v1080, 7
  %v1082 = vsub.s32 %v1079, %v1081
  %v1083 = vrot.slane %v1069, %v1082
  %v1084 = vcombine.low %v971, %v1063
  %v1085 = vcombine.high %v971, %v1063
  %v1087 = vunpack.c.l.s4 1983009808
  %v1088 = vunpack.c.0.s8 %v1087
  %v1089 = vlaneseq
  %v1090 = vshrl.u32 %v1089, 7
  %v1091 = vsub.s32 %v1088, %v1090
  %v1092 = vrot.slane %v1084, %v1091
  %v1094 = vunpack.c.l.s4 1983009808
  %v1095 = vunpack.c.0.s8 %v1094
  %v1096 = vlaneseq
  %v1097 = vshrl.u32 %v1096, 7
  %v1098 = vsub.s32 %v1095, %v1097
  %v1099 = vrot.slane %v1085, %v1098
  %v1100 = vcombine.low %v1076, %v1092
  %v1101 = vcombine.high %v1076, %v1092
  %v1103 = vunpack.c.l.s4 1934713408
  %v1104 = vunpack.c.0.s8 %v1103
  %v1105 = vlaneseq
  %v1106 = vshrl.u32 %v1105, 7
  %v1107 = vsub.s32 %v1104, %v1106
  %v1108 = vrot.slane %v1100, %v1107
  %v1110 = vunpack.c.l.s4 1934713408
  %v1111 = vunpack.c.0.s8 %v1110
  %v1112 = vlaneseq
  %v1113 = vshrl.u32 %v1112, 7
  %v1114 = vsub.s32 %v1111, %v1113
  %v1115 = vrot.slane %v1101, %v1114
  %v1116 = vcombine.low %v1083, %v1099
  %v1117 = vcombine.high %v1083, %v1099
  %v1119 = vunpack.c.l.s4 1934713408
  %v1120 = vunpack.c.0.s8 %v1119
  %v1121 = vlaneseq
  %v1122 = vshrl.u32 %v1121, 7
  %v1123 = vsub.s32 %v1120, %v1122
  %v1124 = vrot.slane %v1116, %v1123
  %v1126 = vunpack.c.l.s4 1934713408
  %v1127 = vunpack.c.0.s8 %v1126
  %v1128 = vlaneseq
  %v1129 = vshrl.u32 %v1128, 7
  %v1130 = vsub.s32 %v1127, %v1129
  %v1131 = vrot.slane %v1117, %v1130
  %v1132 = vcombine.high %v1108, 0.0
  %v1133 = vcombine.high %v1115, 0.0
  %v1134 = vcombine.high %v1124, 0.0
  %v1135 = vcombine.high %v1131, 0.0
  %v1136 = vcombine.low %v1108, %v1115
  %v1138 = vunpack.c.l.s4 1983009808
  %v1139 = vunpack.c.0.s8 %v1138
  %v1140 = vlaneseq
  %v1141 = vshrl.u32 %v1140, 7
  %v1142 = vsub.s32 %v1139, %v1141
  %v1143 = vrot.slane %v1136, %v1142
  %v1144 = vcombine.low %v1132, %v1133
  %v1146 = vunpack.c.l.s4 1983009808
  %v1147 = vunpack.c.0.s8 %v1146
  %v1148 = vlaneseq
  %v1149 = vshrl.u32 %v1148, 7
  %v1150 = vsub.s32 %v1147, %v1149
  %v1151 = vrot.slane %v1144, %v1150
  %v1152 = vcombine.low %v1124, %v1131
  %v1154 = vunpack.c.l.s4 1983009808
  %v1155 = vunpack.c.0.s8 %v1154
  %v1156 = vlaneseq
  %v1157 = vshrl.u32 %v1156, 7
  %v1158 = vsub.s32 %v1155, %v1157
  %v1159 = vrot.slane %v1152, %v1158
  %v1160 = vcombine.low %v1134, %v1135
  %v1162 = vunpack.c.l.s4 1983009808
  %v1163 = vunpack.c.0.s8 %v1162
  %v1164 = vlaneseq
  %v1165 = vshrl.u32 %v1164, 7
  %v1166 = vsub.s32 %v1163, %v1165
  %v1167 = vrot.slane %v1160, %v1166
  %v1168 = vcombine.low %v1143, %v1151
  %v1169 = vcombine.high %v1143, %v1151
  %v1171 = vunpack.c.l.s4 1934713408
  %v1172 = vunpack.c.0.s8 %v1171
  %v1173 = vlaneseq
  %v1174 = vshrl.u32 %v1173, 7
  %v1175 = vsub.s32 %v1172, %v1174
  %v1176 = vrot.slane %v1168, %v1175
  %v1178 = vunpack.c.l.s4 1934713408
  %v1179 = vunpack.c.0.s8 %v1178
  %v1180 = vlaneseq
  %v1181 = vshrl.u32 %v1180, 7
  %v1182 = vsub.s32 %v1179, %v1181
  %v1183 = vrot.slane %v1169, %v1182
  %v1184 = vcombine.low %v1159, %v1167
  %v1185 = vcombine.high %v1159, %v1167
  %v1187 = vunpack.c.l.s4 1934713408
  %v1188 = vunpack.c.0.s8 %v1187
  %v1189 = vlaneseq
  %v1190 = vshrl.u32 %v1189, 7
  %v1191 = vsub.s32 %v1188, %v1190
  %v1192 = vrot.slane %v1184, %v1191
  %v1194 = vunpack.c.l.s4 1934713408
  %v1195 = vunpack.c.0.s8 %v1194
  %v1196 = vlaneseq
  %v1197 = vshrl.u32 %v1196, 7
  %v1198 = vsub.s32 %v1195, %v1197
  %v1199 = vrot.slane %v1185, %v1198
  %v1200 = vcombine.low %v1176, %v1192
  %v1201 = vcombine.high %v1176, %v1192
  %v1202 = vcombine.low %v1183, %v1199
  %v1203 = vcombine.high %v1183, %v1199
  %1205 = vrot.lane.b32.xlu0 %v1201, 8
  %v1206 = vpop.permute.xlu0 %1205
  %1209 = vrot.lane.b32.xlu0 %v1202, 16
  %v1210 = vpop.permute.xlu0 %1209
  %1213 = vrot.lane.b32.xlu0 %v1203, 24
  %v1214 = vpop.permute.xlu0 %1213
  %v1216 = vsel %vm650, %v1200, %v1206
  %vm1217 = vcmask 130048
  %v1218 = vsel %vm1217, %v1216, %v1210
  %vm1219 = vcmask 195584
  %v1220 = vsel %vm1219, %v1218, %v1214
  %v1221 = vpack.c.bf16 %v1220, %v1220
  %v1222 = vld [vmem:[%s5] sm:$0xf]
  %v1223 = vld [vmem:[%s5 + $0x4] sm:$0xf]
  %v1224 = vld [vmem:[%s5 + $0x8] sm:$0xf]
  %v1225 = vld [vmem:[%s5 + $0xc] sm:$0xf]
  %v1226 = vlaneseq
  %v1227 = vshrl.u32 %v1226, 7
  %v1228 = vsub.s32 1, %v1227
  %v1229 = vrot.slane %v51, %v1228
  %v1234 = vunpack.c.l.b16 %v1222
  %v1235 = vunpack.c.l.b16 %v1223
  %v1236 = vunpack.c.l.b16 %v1224
  %v1237 = vunpack.c.l.b16 %v1225
  %v1238 = vpack.c.b16 %v1235, %v1234
  %v1239 = vpack.c.b16 %v1237, %v1236
  %v1243 = vsel %vm78, %v1221, 0
  %1245 = vmatprep.subr.bf16.mxu0 0
  %1246 = vmatpush1.bf16.msra.mxu0 %v1238
  %1247 = vmatprep.subr.bf16.mxu0 0
  %1248 = vmatpush1.bf16.msra.mxu0 %v1239
  %1249 = vmatprep.subr.bf16.mxu0 0
  %1250 = vmatpush1.bf16.msra.mxu0 0
  %1251 = vmatprep.subr.bf16.mxu0 0
  %1252 = vmatpush1.bf16.msra.mxu0 0
  %1253 = vmatprep.subr.bf16.mxu0 0
  %1254 = vmatpush1.bf16.msra.mxu0 0
  %1255 = vmatprep.subr.bf16.mxu0 0
  %1256 = vmatpush1.bf16.msra.mxu0 0
  %1257 = vmatprep.subr.bf16.mxu0 0
  %1258 = vmatpush1.bf16.msra.mxu0 0
  %1259 = vmatprep.subr.bf16.mxu0 0
  %1260 = vmatpush1.bf16.msra.mxu0 0
  %1261 = vmatprep.subr.bf16.mxu0 0
  %1262 = vmatpush1.bf16.msra.mxu0 0
  %1263 = vmatprep.subr.bf16.mxu0 0
  %1264 = vmatpush1.bf16.msra.mxu0 0
  %1265 = vmatprep.subr.bf16.mxu0 0
  %1266 = vmatpush1.bf16.msra.mxu0 0
  %1267 = vmatprep.subr.bf16.mxu0 0
  %1268 = vmatpush1.bf16.msra.mxu0 0
  %1269 = vmatprep.subr.bf16.mxu0 0
  %1270 = vmatpush1.bf16.msra.mxu0 0
  %1271 = vmatprep.subr.bf16.mxu0 0
  %1272 = vmatpush1.bf16.msra.mxu0 0
  %1273 = vmatprep.subr.bf16.mxu0 0
  %1274 = vmatpush1.bf16.msra.mxu0 0
  %1275 = vmatprep.subr.bf16.mxu0 0
  %1276 = vmatpush1.bf16.msra.mxu0 0
  %1277 = vmatprep.mubr.bf16.mxu0 0
  %1278 = vmatmul.mubr.bf16.gmra.mrb[0].mxu0 %v1243
  %v1279 = vpop.f32.mrb[0].mxu0
  %v1280 = vadd.f32 %v1229, %v1279
  %v1281 = vpop.f32.mrb[0].mxu0
  %v1282 = vpop.f32.mrb[0].mxu0
  %v1283 = vpop.f32.mrb[0].mxu0
  %1284 = vdwg.mxu0
  %v1285 = vadd.f32 %v53, %v1280
  %v1286 = vsel %vm78, %v1285, 0.0
  %1287 = vadd.xlane.f32.xlu0 %v1286
  %v1288 = vpop.xlane.xlu0 %1287
  %v1289 = vrcp.pop 32.0
  %v1290 = vmul.f32 %v1288, %v1289
  %v1291 = vsub.f32 %v1285, %v1290
  %v1292 = vmul.f32 %v1291, %v1291
  %v1293 = vsel %vm78, %v1292, 0.0
  %1294 = vadd.xlane.f32.xlu0 %v1293
  %v1295 = vpop.xlane.xlu0 %1294
  %v1296 = vmul.f32 %v1295, %v1289
  %v1297 = vadd.f32 %v1296, 1e-05
  %v1298 = vrsqrt.pop %v1297
  %v1299 = vmul.f32 %v1291, %v1298
  %v1300 = vlaneseq
  %v1301 = vshrl.u32 %v1300, 7
  %v1302 = vsub.s32 2, %v1301
  %v1303 = vrot.slane %v51, %v1302
  %v1304 = vmul.f32 %v1299, %v1303
  %v1305 = vlaneseq
  %v1306 = vshrl.u32 %v1305, 7
  %v1307 = vsub.s32 3, %v1306
  %v1308 = vrot.slane %v51, %v1307
  %v1309 = vadd.f32 %v1304, %v1308
  %v1310 = vpack.c.bf16 %v1309, %v1309
  %v1311 = vld [vmem:[%s6] sm:$0xf]
  %v1312 = vld [vmem:[%s6 + $0x4] sm:$0xf]
  %v1313 = vld [vmem:[%s6 + $0x8] sm:$0xf]
  %v1314 = vld [vmem:[%s6 + $0xc] sm:$0xf]
  %v1315 = vlaneseq
  %v1316 = vshrl.u32 %v1315, 7
  %v1317 = vsub.s32 4, %v1316
  %v1318 = vrot.slane %v51, %v1317
  %v1323 = vunpack.c.l.b16 %v1311
  %v1324 = vunpack.c.l.b16 %v1312
  %v1325 = vunpack.c.l.b16 %v1313
  %v1326 = vunpack.c.l.b16 %v1314
  %v1327 = vpack.c.b16 %v1324, %v1323
  %v1328 = vpack.c.b16 %v1326, %v1325
  %v1332 = vsel %vm78, %v1310, 0
  %1334 = vmatprep.subr.bf16.mxu0 0
  %1335 = vmatpush1.bf16.msra.mxu0 %v1327
  %1336 = vmatprep.subr.bf16.mxu0 0
  %1337 = vmatpush1.bf16.msra.mxu0 %v1328
  %1338 = vmatprep.subr.bf16.mxu0 0
  %1339 = vmatpush1.bf16.msra.mxu0 0
  %1340 = vmatprep.subr.bf16.mxu0 0
  %1341 = vmatpush1.bf16.msra.mxu0 0
  %1342 = vmatprep.subr.bf16.mxu0 0
  %1343 = vmatpush1.bf16.msra.mxu0 0
  %1344 = vmatprep.subr.bf16.mxu0 0
  %1345 = vmatpush1.bf16.msra.mxu0 0
  %1346 = vmatprep.subr.bf16.mxu0 0
  %1347 = vmatpush1.bf16.msra.mxu0 0
  %1348 = vmatprep.subr.bf16.mxu0 0
  %1349 = vmatpush1.bf16.msra.mxu0 0
  %1350 = vmatprep.subr.bf16.mxu0 0
  %1351 = vmatpush1.bf16.msra.mxu0 0
  %1352 = vmatprep.subr.bf16.mxu0 0
  %1353 = vmatpush1.bf16.msra.mxu0 0
  %1354 = vmatprep.subr.bf16.mxu0 0
  %1355 = vmatpush1.bf16.msra.mxu0 0
  %1356 = vmatprep.subr.bf16.mxu0 0
  %1357 = vmatpush1.bf16.msra.mxu0 0
  %1358 = vmatprep.subr.bf16.mxu0 0
  %1359 = vmatpush1.bf16.msra.mxu0 0
  %1360 = vmatprep.subr.bf16.mxu0 0
  %1361 = vmatpush1.bf16.msra.mxu0 0
  %1362 = vmatprep.subr.bf16.mxu0 0
  %1363 = vmatpush1.bf16.msra.mxu0 0
  %1364 = vmatprep.subr.bf16.mxu0 0
  %1365 = vmatpush1.bf16.msra.mxu0 0
  %1366 = vmatprep.mubr.bf16.mxu0 0
  %1367 = vmatmul.mubr.bf16.gmra.mrb[0].mxu0 %v1332
  %v1368 = vpop.f32.mrb[0].mxu0
  %v1369 = vadd.f32 %v1318, %v1368
  %v1370 = vpop.f32.mrb[0].mxu0
  %v1371 = vpop.f32.mrb[0].mxu0
  %v1372 = vpop.f32.mrb[0].mxu0
  %1373 = vdwg.mxu0
  %v1374 = vpack.c.bf16 %v55, %v55
  %v1375 = vld [vmem:[%s7] sm:$0xf]
  %v1376 = vld [vmem:[%s7 + $0x4] sm:$0xf]
  %v1377 = vld [vmem:[%s7 + $0x8] sm:$0xf]
  %v1378 = vld [vmem:[%s7 + $0xc] sm:$0xf]
  %v1379 = vld [vmem:[%s12] sm:$0x1]
  %v1381 = vlaneseq
  %v1382 = vshrl.u32 %v1381, 7
  %v1383 = vsub.s32 0, %v1382
  %v1384 = vrot.slane %v1379, %v1383
  %v1390 = vunpack.c.l.b16 %v1375
  %v1391 = vunpack.c.l.b16 %v1376
  %v1392 = vunpack.c.l.b16 %v1377
  %v1393 = vunpack.c.l.b16 %v1378
  %v1394 = vpack.c.b16 %v1391, %v1390
  %v1395 = vpack.c.b16 %v1393, %v1392
  %v1399 = vsel %vm78, %v1374, 0
  %1401 = vmatprep.subr.bf16.mxu0 0
  %1402 = vmatpush1.bf16.msra.mxu0 %v1394
  %1403 = vmatprep.subr.bf16.mxu0 0
  %1404 = vmatpush1.bf16.msra.mxu0 %v1395
  %1405 = vmatprep.subr.bf16.mxu0 0
  %1406 = vmatpush1.bf16.msra.mxu0 0
  %1407 = vmatprep.subr.bf16.mxu0 0
  %1408 = vmatpush1.bf16.msra.mxu0 0
  %1409 = vmatprep.subr.bf16.mxu0 0
  %1410 = vmatpush1.bf16.msra.mxu0 0
  %1411 = vmatprep.subr.bf16.mxu0 0
  %1412 = vmatpush1.bf16.msra.mxu0 0
  %1413 = vmatprep.subr.bf16.mxu0 0
  %1414 = vmatpush1.bf16.msra.mxu0 0
  %1415 = vmatprep.subr.bf16.mxu0 0
  %1416 = vmatpush1.bf16.msra.mxu0 0
  %1417 = vmatprep.subr.bf16.mxu0 0
  %1418 = vmatpush1.bf16.msra.mxu0 0
  %1419 = vmatprep.subr.bf16.mxu0 0
  %1420 = vmatpush1.bf16.msra.mxu0 0
  %1421 = vmatprep.subr.bf16.mxu0 0
  %1422 = vmatpush1.bf16.msra.mxu0 0
  %1423 = vmatprep.subr.bf16.mxu0 0
  %1424 = vmatpush1.bf16.msra.mxu0 0
  %1425 = vmatprep.subr.bf16.mxu0 0
  %1426 = vmatpush1.bf16.msra.mxu0 0
  %1427 = vmatprep.subr.bf16.mxu0 0
  %1428 = vmatpush1.bf16.msra.mxu0 0
  %1429 = vmatprep.subr.bf16.mxu0 0
  %1430 = vmatpush1.bf16.msra.mxu0 0
  %1431 = vmatprep.subr.bf16.mxu0 0
  %1432 = vmatpush1.bf16.msra.mxu0 0
  %1433 = vmatprep.mubr.bf16.mxu0 0
  %1434 = vmatmul.mubr.bf16.gmra.mrb[0].mxu0 %v1399
  %v1435 = vpop.f32.mrb[0].mxu0
  %v1436 = vadd.f32 %v1384, %v1435
  %v1437 = vpop.f32.mrb[0].mxu0
  %v1438 = vpop.f32.mrb[0].mxu0
  %v1439 = vpop.f32.mrb[0].mxu0
  %1440 = vdwg.mxu0
  %v1441 = vmul.f32 %v1369, 0.35355338
  %1443 = vrot.lane.b32.xlu0 %v1441, 120
  %v1444 = vpop.permute.xlu0 %1443
  %1446 = vrot.lane.b32.xlu0 %v1441, 112
  %v1447 = vpop.permute.xlu0 %1446
  %1449 = vrot.lane.b32.xlu0 %v1441, 104
  %v1450 = vpop.permute.xlu0 %1449
  %v1452 = vcombine.low %v1441, %v1447
  %v1453 = vcombine.high %v1441, %v1447
  %v1455 = vunpack.c.l.s4 1983009808
  %v1456 = vunpack.c.0.s8 %v1455
  %v1457 = vlaneseq
  %v1458 = vshrl.u32 %v1457, 7
  %v1459 = vsub.s32 %v1456, %v1458
  %v1460 = vrot.slane %v1452, %v1459
  %v1462 = vunpack.c.l.s4 1983009808
  %v1463 = vunpack.c.0.s8 %v1462
  %v1464 = vlaneseq
  %v1465 = vshrl.u32 %v1464, 7
  %v1466 = vsub.s32 %v1463, %v1465
  %v1467 = vrot.slane %v1453, %v1466
  %v1468 = vcombine.low %v1444, %v1450
  %v1469 = vcombine.high %v1444, %v1450
  %v1471 = vunpack.c.l.s4 1983009808
  %v1472 = vunpack.c.0.s8 %v1471
  %v1473 = vlaneseq
  %v1474 = vshrl.u32 %v1473, 7
  %v1475 = vsub.s32 %v1472, %v1474
  %v1476 = vrot.slane %v1468, %v1475
  %v1478 = vunpack.c.l.s4 1983009808
  %v1479 = vunpack.c.0.s8 %v1478
  %v1480 = vlaneseq
  %v1481 = vshrl.u32 %v1480, 7
  %v1482 = vsub.s32 %v1479, %v1481
  %v1483 = vrot.slane %v1469, %v1482
  %v1484 = vcombine.low %v1460, %v1476
  %v1485 = vcombine.high %v1460, %v1476
  %v1487 = vunpack.c.l.s4 1934713408
  %v1488 = vunpack.c.0.s8 %v1487
  %v1489 = vlaneseq
  %v1490 = vshrl.u32 %v1489, 7
  %v1491 = vsub.s32 %v1488, %v1490
  %v1492 = vrot.slane %v1484, %v1491
  %v1494 = vunpack.c.l.s4 1934713408
  %v1495 = vunpack.c.0.s8 %v1494
  %v1496 = vlaneseq
  %v1497 = vshrl.u32 %v1496, 7
  %v1498 = vsub.s32 %v1495, %v1497
  %v1499 = vrot.slane %v1485, %v1498
  %v1500 = vcombine.low %v1467, %v1483
  %v1501 = vcombine.high %v1467, %v1483
  %v1503 = vunpack.c.l.s4 1934713408
  %v1504 = vunpack.c.0.s8 %v1503
  %v1505 = vlaneseq
  %v1506 = vshrl.u32 %v1505, 7
  %v1507 = vsub.s32 %v1504, %v1506
  %v1508 = vrot.slane %v1500, %v1507
  %v1510 = vunpack.c.l.s4 1934713408
  %v1511 = vunpack.c.0.s8 %v1510
  %v1512 = vlaneseq
  %v1513 = vshrl.u32 %v1512, 7
  %v1514 = vsub.s32 %v1511, %v1513
  %v1515 = vrot.slane %v1501, %v1514
  %v1516 = vcombine.high %v1492, 0.0
  %v1517 = vcombine.high %v1499, 0.0
  %v1518 = vcombine.high %v1508, 0.0
  %v1519 = vcombine.high %v1515, 0.0
  %v1520 = vcombine.low %v1492, %v1499
  %v1522 = vunpack.c.l.s4 1983009808
  %v1523 = vunpack.c.0.s8 %v1522
  %v1524 = vlaneseq
  %v1525 = vshrl.u32 %v1524, 7
  %v1526 = vsub.s32 %v1523, %v1525
  %v1527 = vrot.slane %v1520, %v1526
  %v1528 = vcombine.low %v1516, %v1517
  %v1530 = vunpack.c.l.s4 1983009808
  %v1531 = vunpack.c.0.s8 %v1530
  %v1532 = vlaneseq
  %v1533 = vshrl.u32 %v1532, 7
  %v1534 = vsub.s32 %v1531, %v1533
  %v1535 = vrot.slane %v1528, %v1534
  %v1536 = vcombine.low %v1508, %v1515
  %v1538 = vunpack.c.l.s4 1983009808
  %v1539 = vunpack.c.0.s8 %v1538
  %v1540 = vlaneseq
  %v1541 = vshrl.u32 %v1540, 7
  %v1542 = vsub.s32 %v1539, %v1541
  %v1543 = vrot.slane %v1536, %v1542
  %v1544 = vcombine.low %v1518, %v1519
  %v1546 = vunpack.c.l.s4 1983009808
  %v1547 = vunpack.c.0.s8 %v1546
  %v1548 = vlaneseq
  %v1549 = vshrl.u32 %v1548, 7
  %v1550 = vsub.s32 %v1547, %v1549
  %v1551 = vrot.slane %v1544, %v1550
  %v1552 = vcombine.low %v1527, %v1535
  %v1553 = vcombine.high %v1527, %v1535
  %v1555 = vunpack.c.l.s4 1934713408
  %v1556 = vunpack.c.0.s8 %v1555
  %v1557 = vlaneseq
  %v1558 = vshrl.u32 %v1557, 7
  %v1559 = vsub.s32 %v1556, %v1558
  %v1560 = vrot.slane %v1552, %v1559
  %v1562 = vunpack.c.l.s4 1934713408
  %v1563 = vunpack.c.0.s8 %v1562
  %v1564 = vlaneseq
  %v1565 = vshrl.u32 %v1564, 7
  %v1566 = vsub.s32 %v1563, %v1565
  %v1567 = vrot.slane %v1553, %v1566
  %v1568 = vcombine.low %v1543, %v1551
  %v1569 = vcombine.high %v1543, %v1551
  %v1571 = vunpack.c.l.s4 1934713408
  %v1572 = vunpack.c.0.s8 %v1571
  %v1573 = vlaneseq
  %v1574 = vshrl.u32 %v1573, 7
  %v1575 = vsub.s32 %v1572, %v1574
  %v1576 = vrot.slane %v1568, %v1575
  %v1578 = vunpack.c.l.s4 1934713408
  %v1579 = vunpack.c.0.s8 %v1578
  %v1580 = vlaneseq
  %v1581 = vshrl.u32 %v1580, 7
  %v1582 = vsub.s32 %v1579, %v1581
  %v1583 = vrot.slane %v1569, %v1582
  %v1584 = vcombine.low %v1560, %v1576
  %v1585 = vcombine.high %v1560, %v1576
  %v1586 = vcombine.low %v1567, %v1583
  %v1587 = vcombine.high %v1567, %v1583
  %v1588 = vpack.c.bf16 %v1584, %v1584
  %v1589 = vpack.c.bf16 %v1585, %v1585
  %v1590 = vpack.c.bf16 %v1586, %v1586
  %v1591 = vpack.c.bf16 %v1587, %v1587
  %1593 = vrot.lane.b32.xlu0 %v1436, 120
  %v1594 = vpop.permute.xlu0 %1593
  %1596 = vrot.lane.b32.xlu0 %v1436, 112
  %v1597 = vpop.permute.xlu0 %1596
  %1599 = vrot.lane.b32.xlu0 %v1436, 104
  %v1600 = vpop.permute.xlu0 %1599
  %v1602 = vcombine.low %v1436, %v1597
  %v1603 = vcombine.high %v1436, %v1597
  %v1605 = vunpack.c.l.s4 1983009808
  %v1606 = vunpack.c.0.s8 %v1605
  %v1607 = vlaneseq
  %v1608 = vshrl.u32 %v1607, 7
  %v1609 = vsub.s32 %v1606, %v1608
  %v1610 = vrot.slane %v1602, %v1609
  %v1612 = vunpack.c.l.s4 1983009808
  %v1613 = vunpack.c.0.s8 %v1612
  %v1614 = vlaneseq
  %v1615 = vshrl.u32 %v1614, 7
  %v1616 = vsub.s32 %v1613, %v1615
  %v1617 = vrot.slane %v1603, %v1616
  %v1618 = vcombine.low %v1594, %v1600
  %v1619 = vcombine.high %v1594, %v1600
  %v1621 = vunpack.c.l.s4 1983009808
  %v1622 = vunpack.c.0.s8 %v1621
  %v1623 = vlaneseq
  %v1624 = vshrl.u32 %v1623, 7
  %v1625 = vsub.s32 %v1622, %v1624
  %v1626 = vrot.slane %v1618, %v1625
  %v1628 = vunpack.c.l.s4 1983009808
  %v1629 = vunpack.c.0.s8 %v1628
  %v1630 = vlaneseq
  %v1631 = vshrl.u32 %v1630, 7
  %v1632 = vsub.s32 %v1629, %v1631
  %v1633 = vrot.slane %v1619, %v1632
  %v1634 = vcombine.low %v1610, %v1626
  %v1635 = vcombine.high %v1610, %v1626
  %v1637 = vunpack.c.l.s4 1934713408
  %v1638 = vunpack.c.0.s8 %v1637
  %v1639 = vlaneseq
  %v1640 = vshrl.u32 %v1639, 7
  %v1641 = vsub.s32 %v1638, %v1640
  %v1642 = vrot.slane %v1634, %v1641
  %v1644 = vunpack.c.l.s4 1934713408
  %v1645 = vunpack.c.0.s8 %v1644
  %v1646 = vlaneseq
  %v1647 = vshrl.u32 %v1646, 7
  %v1648 = vsub.s32 %v1645, %v1647
  %v1649 = vrot.slane %v1635, %v1648
  %v1650 = vcombine.low %v1617, %v1633
  %v1651 = vcombine.high %v1617, %v1633
  %v1653 = vunpack.c.l.s4 1934713408
  %v1654 = vunpack.c.0.s8 %v1653
  %v1655 = vlaneseq
  %v1656 = vshrl.u32 %v1655, 7
  %v1657 = vsub.s32 %v1654, %v1656
  %v1658 = vrot.slane %v1650, %v1657
  %v1660 = vunpack.c.l.s4 1934713408
  %v1661 = vunpack.c.0.s8 %v1660
  %v1662 = vlaneseq
  %v1663 = vshrl.u32 %v1662, 7
  %v1664 = vsub.s32 %v1661, %v1663
  %v1665 = vrot.slane %v1651, %v1664
  %v1666 = vcombine.high %v1642, 0.0
  %v1667 = vcombine.high %v1649, 0.0
  %v1668 = vcombine.high %v1658, 0.0
  %v1669 = vcombine.high %v1665, 0.0
  %v1670 = vcombine.low %v1642, %v1649
  %v1672 = vunpack.c.l.s4 1983009808
  %v1673 = vunpack.c.0.s8 %v1672
  %v1674 = vlaneseq
  %v1675 = vshrl.u32 %v1674, 7
  %v1676 = vsub.s32 %v1673, %v1675
  %v1677 = vrot.slane %v1670, %v1676
  %v1678 = vcombine.low %v1666, %v1667
  %v1680 = vunpack.c.l.s4 1983009808
  %v1681 = vunpack.c.0.s8 %v1680
  %v1682 = vlaneseq
  %v1683 = vshrl.u32 %v1682, 7
  %v1684 = vsub.s32 %v1681, %v1683
  %v1685 = vrot.slane %v1678, %v1684
  %v1686 = vcombine.low %v1658, %v1665
  %v1688 = vunpack.c.l.s4 1983009808
  %v1689 = vunpack.c.0.s8 %v1688
  %v1690 = vlaneseq
  %v1691 = vshrl.u32 %v1690, 7
  %v1692 = vsub.s32 %v1689, %v1691
  %v1693 = vrot.slane %v1686, %v1692
  %v1694 = vcombine.low %v1668, %v1669
  %v1696 = vunpack.c.l.s4 1983009808
  %v1697 = vunpack.c.0.s8 %v1696
  %v1698 = vlaneseq
  %v1699 = vshrl.u32 %v1698, 7
  %v1700 = vsub.s32 %v1697, %v1699
  %v1701 = vrot.slane %v1694, %v1700
  %v1702 = vcombine.low %v1677, %v1685
  %v1703 = vcombine.high %v1677, %v1685
  %v1705 = vunpack.c.l.s4 1934713408
  %v1706 = vunpack.c.0.s8 %v1705
  %v1707 = vlaneseq
  %v1708 = vshrl.u32 %v1707, 7
  %v1709 = vsub.s32 %v1706, %v1708
  %v1710 = vrot.slane %v1702, %v1709
  %v1712 = vunpack.c.l.s4 1934713408
  %v1713 = vunpack.c.0.s8 %v1712
  %v1714 = vlaneseq
  %v1715 = vshrl.u32 %v1714, 7
  %v1716 = vsub.s32 %v1713, %v1715
  %v1717 = vrot.slane %v1703, %v1716
  %v1718 = vcombine.low %v1693, %v1701
  %v1719 = vcombine.high %v1693, %v1701
  %v1721 = vunpack.c.l.s4 1934713408
  %v1722 = vunpack.c.0.s8 %v1721
  %v1723 = vlaneseq
  %v1724 = vshrl.u32 %v1723, 7
  %v1725 = vsub.s32 %v1722, %v1724
  %v1726 = vrot.slane %v1718, %v1725
  %v1728 = vunpack.c.l.s4 1934713408
  %v1729 = vunpack.c.0.s8 %v1728
  %v1730 = vlaneseq
  %v1731 = vshrl.u32 %v1730, 7
  %v1732 = vsub.s32 %v1729, %v1731
  %v1733 = vrot.slane %v1719, %v1732
  %v1734 = vcombine.low %v1710, %v1726
  %v1735 = vcombine.high %v1710, %v1726
  %v1736 = vcombine.low %v1717, %v1733
  %v1737 = vcombine.high %v1717, %v1733
  %v1738 = vpack.c.bf16 %v1734, %v1734
  %v1739 = vpack.c.bf16 %v1735, %v1735
  %v1740 = vpack.c.bf16 %v1736, %v1736
  %v1741 = vpack.c.bf16 %v1737, %v1737
  %1742 = vrot.lane.b32.xlu0 %v1436, 96
  %v1743 = vpop.permute.xlu0 %1742
  %1744 = vrot.lane.b32.xlu0 %v1594, 96
  %v1745 = vpop.permute.xlu0 %1744
  %1746 = vrot.lane.b32.xlu0 %v1597, 96
  %v1747 = vpop.permute.xlu0 %1746
  %1748 = vrot.lane.b32.xlu0 %v1600, 96
  %v1749 = vpop.permute.xlu0 %1748
  %v1754 = vcombine.low %v1743, %v1747
  %v1755 = vcombine.high %v1743, %v1747
  %v1757 = vunpack.c.l.s4 1983009808
  %v1758 = vunpack.c.0.s8 %v1757
  %v1759 = vlaneseq
  %v1760 = vshrl.u32 %v1759, 7
  %v1761 = vsub.s32 %v1758, %v1760
  %v1762 = vrot.slane %v1754, %v1761
  %v1764 = vunpack.c.l.s4 1983009808
  %v1765 = vunpack.c.0.s8 %v1764
  %v1766 = vlaneseq
  %v1767 = vshrl.u32 %v1766, 7
  %v1768 = vsub.s32 %v1765, %v1767
  %v1769 = vrot.slane %v1755, %v1768
  %v1770 = vcombine.low %v1745, %v1749
  %v1771 = vcombine.high %v1745, %v1749
  %v1773 = vunpack.c.l.s4 1983009808
  %v1774 = vunpack.c.0.s8 %v1773
  %v1775 = vlaneseq
  %v1776 = vshrl.u32 %v1775, 7
  %v1777 = vsub.s32 %v1774, %v1776
  %v1778 = vrot.slane %v1770, %v1777
  %v1780 = vunpack.c.l.s4 1983009808
  %v1781 = vunpack.c.0.s8 %v1780
  %v1782 = vlaneseq
  %v1783 = vshrl.u32 %v1782, 7
  %v1784 = vsub.s32 %v1781, %v1783
  %v1785 = vrot.slane %v1771, %v1784
  %v1786 = vcombine.low %v1762, %v1778
  %v1787 = vcombine.high %v1762, %v1778
  %v1789 = vunpack.c.l.s4 1934713408
  %v1790 = vunpack.c.0.s8 %v1789
  %v1791 = vlaneseq
  %v1792 = vshrl.u32 %v1791, 7
  %v1793 = vsub.s32 %v1790, %v1792
  %v1794 = vrot.slane %v1786, %v1793
  %v1796 = vunpack.c.l.s4 1934713408
  %v1797 = vunpack.c.0.s8 %v1796
  %v1798 = vlaneseq
  %v1799 = vshrl.u32 %v1798, 7
  %v1800 = vsub.s32 %v1797, %v1799
  %v1801 = vrot.slane %v1787, %v1800
  %v1802 = vcombine.low %v1769, %v1785
  %v1803 = vcombine.high %v1769, %v1785
  %v1805 = vunpack.c.l.s4 1934713408
  %v1806 = vunpack.c.0.s8 %v1805
  %v1807 = vlaneseq
  %v1808 = vshrl.u32 %v1807, 7
  %v1809 = vsub.s32 %v1806, %v1808
  %v1810 = vrot.slane %v1802, %v1809
  %v1812 = vunpack.c.l.s4 1934713408
  %v1813 = vunpack.c.0.s8 %v1812
  %v1814 = vlaneseq
  %v1815 = vshrl.u32 %v1814, 7
  %v1816 = vsub.s32 %v1813, %v1815
  %v1817 = vrot.slane %v1803, %v1816
  %v1818 = vcombine.high %v1794, 0.0
  %v1819 = vcombine.high %v1801, 0.0
  %v1820 = vcombine.high %v1810, 0.0
  %v1821 = vcombine.high %v1817, 0.0
  %v1822 = vcombine.low %v1794, %v1801
  %v1824 = vunpack.c.l.s4 1983009808
  %v1825 = vunpack.c.0.s8 %v1824
  %v1826 = vlaneseq
  %v1827 = vshrl.u32 %v1826, 7
  %v1828 = vsub.s32 %v1825, %v1827
  %v1829 = vrot.slane %v1822, %v1828
  %v1830 = vcombine.low %v1818, %v1819
  %v1832 = vunpack.c.l.s4 1983009808
  %v1833 = vunpack.c.0.s8 %v1832
  %v1834 = vlaneseq
  %v1835 = vshrl.u32 %v1834, 7
  %v1836 = vsub.s32 %v1833, %v1835
  %v1837 = vrot.slane %v1830, %v1836
  %v1838 = vcombine.low %v1810, %v1817
  %v1840 = vunpack.c.l.s4 1983009808
  %v1841 = vunpack.c.0.s8 %v1840
  %v1842 = vlaneseq
  %v1843 = vshrl.u32 %v1842, 7
  %v1844 = vsub.s32 %v1841, %v1843
  %v1845 = vrot.slane %v1838, %v1844
  %v1846 = vcombine.low %v1820, %v1821
  %v1848 = vunpack.c.l.s4 1983009808
  %v1849 = vunpack.c.0.s8 %v1848
  %v1850 = vlaneseq
  %v1851 = vshrl.u32 %v1850, 7
  %v1852 = vsub.s32 %v1849, %v1851
  %v1853 = vrot.slane %v1846, %v1852
  %v1854 = vcombine.low %v1829, %v1837
  %v1855 = vcombine.high %v1829, %v1837
  %v1857 = vunpack.c.l.s4 1934713408
  %v1858 = vunpack.c.0.s8 %v1857
  %v1859 = vlaneseq
  %v1860 = vshrl.u32 %v1859, 7
  %v1861 = vsub.s32 %v1858, %v1860
  %v1862 = vrot.slane %v1854, %v1861
  %v1864 = vunpack.c.l.s4 1934713408
  %v1865 = vunpack.c.0.s8 %v1864
  %v1866 = vlaneseq
  %v1867 = vshrl.u32 %v1866, 7
  %v1868 = vsub.s32 %v1865, %v1867
  %v1869 = vrot.slane %v1855, %v1868
  %v1870 = vcombine.low %v1845, %v1853
  %v1871 = vcombine.high %v1845, %v1853
  %v1873 = vunpack.c.l.s4 1934713408
  %v1874 = vunpack.c.0.s8 %v1873
  %v1875 = vlaneseq
  %v1876 = vshrl.u32 %v1875, 7
  %v1877 = vsub.s32 %v1874, %v1876
  %v1878 = vrot.slane %v1870, %v1877
  %v1880 = vunpack.c.l.s4 1934713408
  %v1881 = vunpack.c.0.s8 %v1880
  %v1882 = vlaneseq
  %v1883 = vshrl.u32 %v1882, 7
  %v1884 = vsub.s32 %v1881, %v1883
  %v1885 = vrot.slane %v1871, %v1884
  %v1886 = vcombine.low %v1862, %v1878
  %v1887 = vcombine.high %v1862, %v1878
  %v1888 = vcombine.low %v1869, %v1885
  %v1889 = vcombine.high %v1869, %v1885
  %v1890 = vpack.c.bf16 %v1886, %v1886
  %v1891 = vpack.c.bf16 %v1887, %v1887
  %v1892 = vpack.c.bf16 %v1888, %v1888
  %v1893 = vpack.c.bf16 %v1889, %v1889
  %v1895 = vsel %vm650, %v1588, 0
  %v1898 = vsel %vm650, %v1738, 0
  %1900 = vmatprep.subr.bf16.mxu0 0
  %1901 = vmatpush1.bf16.xpose.msra.mxu0 %v1898
  %1902 = vmatprep.subr.bf16.mxu0 0
  %1903 = vmatpush1.bf16.xpose.msra.mxu0 0
  %1904 = vmatprep.subr.bf16.mxu0 0
  %1905 = vmatpush1.bf16.xpose.msra.mxu0 0
  %1906 = vmatprep.subr.bf16.mxu0 0
  %1907 = vmatpush1.bf16.xpose.msra.mxu0 0
  %1908 = vmatprep.subr.bf16.mxu0 0
  %1909 = vmatpush1.bf16.xpose.msra.mxu0 0
  %1910 = vmatprep.subr.bf16.mxu0 0
  %1911 = vmatpush1.bf16.xpose.msra.mxu0 0
  %1912 = vmatprep.subr.bf16.mxu0 0
  %1913 = vmatpush1.bf16.xpose.msra.mxu0 0
  %1914 = vmatprep.subr.bf16.mxu0 0
  %1915 = vmatpush1.bf16.xpose.msra.mxu0 0
  %1916 = vmatprep.subr.bf16.mxu0 0
  %1917 = vmatpush1.bf16.xpose.msra.mxu0 0
  %1918 = vmatprep.subr.bf16.mxu0 0
  %1919 = vmatpush1.bf16.xpose.msra.mxu0 0
  %1920 = vmatprep.subr.bf16.mxu0 0
  %1921 = vmatpush1.bf16.xpose.msra.mxu0 0
  %1922 = vmatprep.subr.bf16.mxu0 0
  %1923 = vmatpush1.bf16.xpose.msra.mxu0 0
  %1924 = vmatprep.subr.bf16.mxu0 0
  %1925 = vmatpush1.bf16.xpose.msra.mxu0 0
  %1926 = vmatprep.subr.bf16.mxu0 0
  %1927 = vmatpush1.bf16.xpose.msra.mxu0 0
  %1928 = vmatprep.subr.bf16.mxu0 0
  %1929 = vmatpush1.bf16.xpose.msra.mxu0 0
  %1930 = vmatprep.subr.bf16.mxu0 0
  %1931 = vmatpush1.bf16.xpose.msra.mxu0 0
  %1932 = vmatprep.mubr.bf16.mxu0 0
  %1933 = vmatmul.mubr.bf16.gmra.mrb[0].mxu0 %v1895
  %v1934 = vpop.f32.mrb[0].mxu0
  %v1935 = vadd.f32 0.0, %v1934
  %v1936 = vpop.f32.mrb[0].mxu0
  %v1937 = vpop.f32.mrb[0].mxu0
  %v1938 = vpop.f32.mrb[0].mxu0
  %1939 = vdwg.mxu0
  %v1941 = vsel %vm650, %v1589, 0
  %v1944 = vsel %vm650, %v1739, 0
  %1946 = vmatprep.subr.bf16.mxu0 0
  %1947 = vmatpush1.bf16.xpose.msra.mxu0 %v1944
  %1948 = vmatprep.subr.bf16.mxu0 0
  %1949 = vmatpush1.bf16.xpose.msra.mxu0 0
  %1950 = vmatprep.subr.bf16.mxu0 0
  %1951 = vmatpush1.bf16.xpose.msra.mxu0 0
  %1952 = vmatprep.subr.bf16.mxu0 0
  %1953 = vmatpush1.bf16.xpose.msra.mxu0 0
  %1954 = vmatprep.subr.bf16.mxu0 0
  %1955 = vmatpush1.bf16.xpose.msra.mxu0 0
  %1956 = vmatprep.subr.bf16.mxu0 0
  %1957 = vmatpush1.bf16.xpose.msra.mxu0 0
  %1958 = vmatprep.subr.bf16.mxu0 0
  %1959 = vmatpush1.bf16.xpose.msra.mxu0 0
  %1960 = vmatprep.subr.bf16.mxu0 0
  %1961 = vmatpush1.bf16.xpose.msra.mxu0 0
  %1962 = vmatprep.subr.bf16.mxu0 0
  %1963 = vmatpush1.bf16.xpose.msra.mxu0 0
  %1964 = vmatprep.subr.bf16.mxu0 0
  %1965 = vmatpush1.bf16.xpose.msra.mxu0 0
  %1966 = vmatprep.subr.bf16.mxu0 0
  %1967 = vmatpush1.bf16.xpose.msra.mxu0 0
  %1968 = vmatprep.subr.bf16.mxu0 0
  %1969 = vmatpush1.bf16.xpose.msra.mxu0 0
  %1970 = vmatprep.subr.bf16.mxu0 0
  %1971 = vmatpush1.bf16.xpose.msra.mxu0 0
  %1972 = vmatprep.subr.bf16.mxu0 0
  %1973 = vmatpush1.bf16.xpose.msra.mxu0 0
  %1974 = vmatprep.subr.bf16.mxu0 0
  %1975 = vmatpush1.bf16.xpose.msra.mxu0 0
  %1976 = vmatprep.subr.bf16.mxu0 0
  %1977 = vmatpush1.bf16.xpose.msra.mxu0 0
  %1978 = vmatprep.mubr.bf16.mxu0 0
  %1979 = vmatmul.mubr.bf16.gmra.mrb[0].mxu0 %v1941
  %v1980 = vpop.f32.mrb[0].mxu0
  %v1981 = vadd.f32 0.0, %v1980
  %v1982 = vpop.f32.mrb[0].mxu0
  %v1983 = vpop.f32.mrb[0].mxu0
  %v1984 = vpop.f32.mrb[0].mxu0
  %1985 = vdwg.mxu0
  %v1987 = vsel %vm650, %v1590, 0
  %v1990 = vsel %vm650, %v1740, 0
  %1992 = vmatprep.subr.bf16.mxu0 0
  %1993 = vmatpush1.bf16.xpose.msra.mxu0 %v1990
  %1994 = vmatprep.subr.bf16.mxu0 0
  %1995 = vmatpush1.bf16.xpose.msra.mxu0 0
  %1996 = vmatprep.subr.bf16.mxu0 0
  %1997 = vmatpush1.bf16.xpose.msra.mxu0 0
  %1998 = vmatprep.subr.bf16.mxu0 0
  %1999 = vmatpush1.bf16.xpose.msra.mxu0 0
  %2000 = vmatprep.subr.bf16.mxu0 0
  %2001 = vmatpush1.bf16.xpose.msra.mxu0 0
  %2002 = vmatprep.subr.bf16.mxu0 0
  %2003 = vmatpush1.bf16.xpose.msra.mxu0 0
  %2004 = vmatprep.subr.bf16.mxu0 0
  %2005 = vmatpush1.bf16.xpose.msra.mxu0 0
  %2006 = vmatprep.subr.bf16.mxu0 0
  %2007 = vmatpush1.bf16.xpose.msra.mxu0 0
  %2008 = vmatprep.subr.bf16.mxu0 0
  %2009 = vmatpush1.bf16.xpose.msra.mxu0 0
  %2010 = vmatprep.subr.bf16.mxu0 0
  %2011 = vmatpush1.bf16.xpose.msra.mxu0 0
  %2012 = vmatprep.subr.bf16.mxu0 0
  %2013 = vmatpush1.bf16.xpose.msra.mxu0 0
  %2014 = vmatprep.subr.bf16.mxu0 0
  %2015 = vmatpush1.bf16.xpose.msra.mxu0 0
  %2016 = vmatprep.subr.bf16.mxu0 0
  %2017 = vmatpush1.bf16.xpose.msra.mxu0 0
  %2018 = vmatprep.subr.bf16.mxu0 0
  %2019 = vmatpush1.bf16.xpose.msra.mxu0 0
  %2020 = vmatprep.subr.bf16.mxu0 0
  %2021 = vmatpush1.bf16.xpose.msra.mxu0 0
  %2022 = vmatprep.subr.bf16.mxu0 0
  %2023 = vmatpush1.bf16.xpose.msra.mxu0 0
  %2024 = vmatprep.mubr.bf16.mxu0 0
  %2025 = vmatmul.mubr.bf16.gmra.mrb[0].mxu0 %v1987
  %v2026 = vpop.f32.mrb[0].mxu0
  %v2027 = vadd.f32 0.0, %v2026
  %v2028 = vpop.f32.mrb[0].mxu0
  %v2029 = vpop.f32.mrb[0].mxu0
  %v2030 = vpop.f32.mrb[0].mxu0
  %2031 = vdwg.mxu0
  %v2033 = vsel %vm650, %v1591, 0
  %v2036 = vsel %vm650, %v1741, 0
  %2038 = vmatprep.subr.bf16.mxu0 0
  %2039 = vmatpush1.bf16.xpose.msra.mxu0 %v2036
  %2040 = vmatprep.subr.bf16.mxu0 0
  %2041 = vmatpush1.bf16.xpose.msra.mxu0 0
  %2042 = vmatprep.subr.bf16.mxu0 0
  %2043 = vmatpush1.bf16.xpose.msra.mxu0 0
  %2044 = vmatprep.subr.bf16.mxu0 0
  %2045 = vmatpush1.bf16.xpose.msra.mxu0 0
  %2046 = vmatprep.subr.bf16.mxu0 0
  %2047 = vmatpush1.bf16.xpose.msra.mxu0 0
  %2048 = vmatprep.subr.bf16.mxu0 0
  %2049 = vmatpush1.bf16.xpose.msra.mxu0 0
  %2050 = vmatprep.subr.bf16.mxu0 0
  %2051 = vmatpush1.bf16.xpose.msra.mxu0 0
  %2052 = vmatprep.subr.bf16.mxu0 0
  %2053 = vmatpush1.bf16.xpose.msra.mxu0 0
  %2054 = vmatprep.subr.bf16.mxu0 0
  %2055 = vmatpush1.bf16.xpose.msra.mxu0 0
  %2056 = vmatprep.subr.bf16.mxu0 0
  %2057 = vmatpush1.bf16.xpose.msra.mxu0 0
  %2058 = vmatprep.subr.bf16.mxu0 0
  %2059 = vmatpush1.bf16.xpose.msra.mxu0 0
  %2060 = vmatprep.subr.bf16.mxu0 0
  %2061 = vmatpush1.bf16.xpose.msra.mxu0 0
  %2062 = vmatprep.subr.bf16.mxu0 0
  %2063 = vmatpush1.bf16.xpose.msra.mxu0 0
  %2064 = vmatprep.subr.bf16.mxu0 0
  %2065 = vmatpush1.bf16.xpose.msra.mxu0 0
  %2066 = vmatprep.subr.bf16.mxu0 0
  %2067 = vmatpush1.bf16.xpose.msra.mxu0 0
  %2068 = vmatprep.subr.bf16.mxu0 0
  %2069 = vmatpush1.bf16.xpose.msra.mxu0 0
  %2070 = vmatprep.mubr.bf16.mxu0 0
  %2071 = vmatmul.mubr.bf16.gmra.mrb[0].mxu0 %v2033
  %v2072 = vpop.f32.mrb[0].mxu0
  %v2073 = vadd.f32 0.0, %v2072
  %v2074 = vpop.f32.mrb[0].mxu0
  %v2075 = vpop.f32.mrb[0].mxu0
  %v2076 = vpop.f32.mrb[0].mxu0
  %2077 = vdwg.mxu0
  %v2078 = vsel %vm650, %v1935, -inf
  %2079 = vmax.xlane.f32.xlu0 %v2078
  %v2080 = vpop.xlane.xlu0 %2079
  %v2081 = vsel %vm650, %v1981, -inf
  %2082 = vmax.xlane.f32.xlu0 %v2081
  %v2083 = vpop.xlane.xlu0 %2082
  %v2084 = vsel %vm650, %v2027, -inf
  %2085 = vmax.xlane.f32.xlu0 %v2084
  %v2086 = vpop.xlane.xlu0 %2085
  %v2087 = vsel %vm650, %v2073, -inf
  %2088 = vmax.xlane.f32.xlu0 %v2087
  %v2089 = vpop.xlane.xlu0 %2088
  %v2090 = vsub.f32 %v1935, %v2080
  %v2091 = vsub.f32 %v1981, %v2083
  %v2092 = vsub.f32 %v2027, %v2086
  %v2093 = vsub.f32 %v2073, %v2089
  %v2094 = vmul.f32 %v2090, 1.442695
  %v2095 = vpow.pop %v2094
  %v2096 = vmul.f32 %v2091, 1.442695
  %v2097 = vpow.pop %v2096
  %v2098 = vmul.f32 %v2092, 1.442695
  %v2099 = vpow.pop %v2098
  %v2100 = vmul.f32 %v2093, 1.442695
  %v2101 = vpow.pop %v2100
  %v2102 = vsel %vm650, %v2095, 0.0
  %2103 = vadd.xlane.f32.xlu0 %v2102
  %v2104 = vpop.xlane.xlu0 %2103
  %v2105 = vsel %vm650, %v2097, 0.0
  %2106 = vadd.xlane.f32.xlu0 %v2105
  %v2107 = vpop.xlane.xlu0 %2106
  %v2108 = vsel %vm650, %v2099, 0.0
  %2109 = vadd.xlane.f32.xlu0 %v2108
  %v2110 = vpop.xlane.xlu0 %2109
  %v2111 = vsel %vm650, %v2101, 0.0
  %2112 = vadd.xlane.f32.xlu0 %v2111
  %v2113 = vpop.xlane.xlu0 %2112
  %v2114 = vrcp.pop %v2104
  %v2115 = vrcp.pop %v2107
  %v2116 = vrcp.pop %v2110
  %v2117 = vrcp.pop %v2113
  %v2118 = vmul.f32 %v2095, %v2114
  %v2119 = vmul.f32 %v2097, %v2115
  %v2120 = vmul.f32 %v2099, %v2116
  %v2121 = vmul.f32 %v2101, %v2117
  %v2122 = vpack.c.bf16 %v2118, %v2118
  %v2123 = vpack.c.bf16 %v2119, %v2119
  %v2124 = vpack.c.bf16 %v2120, %v2120
  %v2125 = vpack.c.bf16 %v2121, %v2121
  %v2127 = vsel %vm650, %v2122, 0
  %v2130 = vsel %vm886, %v1890, 0
  %2132 = vmatprep.subr.bf16.mxu0 0
  %2133 = vmatpush1.bf16.msra.mxu0 %v2130
  %2134 = vmatprep.subr.bf16.mxu0 0
  %2135 = vmatpush1.bf16.msra.mxu0 0
  %2136 = vmatprep.subr.bf16.mxu0 0
  %2137 = vmatpush1.bf16.msra.mxu0 0
  %2138 = vmatprep.subr.bf16.mxu0 0
  %2139 = vmatpush1.bf16.msra.mxu0 0
  %2140 = vmatprep.subr.bf16.mxu0 0
  %2141 = vmatpush1.bf16.msra.mxu0 0
  %2142 = vmatprep.subr.bf16.mxu0 0
  %2143 = vmatpush1.bf16.msra.mxu0 0
  %2144 = vmatprep.subr.bf16.mxu0 0
  %2145 = vmatpush1.bf16.msra.mxu0 0
  %2146 = vmatprep.subr.bf16.mxu0 0
  %2147 = vmatpush1.bf16.msra.mxu0 0
  %2148 = vmatprep.subr.bf16.mxu0 0
  %2149 = vmatpush1.bf16.msra.mxu0 0
  %2150 = vmatprep.subr.bf16.mxu0 0
  %2151 = vmatpush1.bf16.msra.mxu0 0
  %2152 = vmatprep.subr.bf16.mxu0 0
  %2153 = vmatpush1.bf16.msra.mxu0 0
  %2154 = vmatprep.subr.bf16.mxu0 0
  %2155 = vmatpush1.bf16.msra.mxu0 0
  %2156 = vmatprep.subr.bf16.mxu0 0
  %2157 = vmatpush1.bf16.msra.mxu0 0
  %2158 = vmatprep.subr.bf16.mxu0 0
  %2159 = vmatpush1.bf16.msra.mxu0 0
  %2160 = vmatprep.subr.bf16.mxu0 0
  %2161 = vmatpush1.bf16.msra.mxu0 0
  %2162 = vmatprep.subr.bf16.mxu0 0
  %2163 = vmatpush1.bf16.msra.mxu0 0
  %2164 = vmatprep.mubr.bf16.mxu0 0
  %2165 = vmatmul.mubr.bf16.gmra.mrb[0].mxu0 %v2127
  %v2166 = vpop.f32.mrb[0].mxu0
  %v2167 = vadd.f32 0.0, %v2166
  %v2168 = vpop.f32.mrb[0].mxu0
  %v2169 = vpop.f32.mrb[0].mxu0
  %v2170 = vpop.f32.mrb[0].mxu0
  %2171 = vdwg.mxu0
  %v2173 = vsel %vm650, %v2123, 0
  %v2176 = vsel %vm886, %v1891, 0
  %2178 = vmatprep.subr.bf16.mxu0 0
  %2179 = vmatpush1.bf16.msra.mxu0 %v2176
  %2180 = vmatprep.subr.bf16.mxu0 0
  %2181 = vmatpush1.bf16.msra.mxu0 0
  %2182 = vmatprep.subr.bf16.mxu0 0
  %2183 = vmatpush1.bf16.msra.mxu0 0
  %2184 = vmatprep.subr.bf16.mxu0 0
  %2185 = vmatpush1.bf16.msra.mxu0 0
  %2186 = vmatprep.subr.bf16.mxu0 0
  %2187 = vmatpush1.bf16.msra.mxu0 0
  %2188 = vmatprep.subr.bf16.mxu0 0
  %2189 = vmatpush1.bf16.msra.mxu0 0
  %2190 = vmatprep.subr.bf16.mxu0 0
  %2191 = vmatpush1.bf16.msra.mxu0 0
  %2192 = vmatprep.subr.bf16.mxu0 0
  %2193 = vmatpush1.bf16.msra.mxu0 0
  %2194 = vmatprep.subr.bf16.mxu0 0
  %2195 = vmatpush1.bf16.msra.mxu0 0
  %2196 = vmatprep.subr.bf16.mxu0 0
  %2197 = vmatpush1.bf16.msra.mxu0 0
  %2198 = vmatprep.subr.bf16.mxu0 0
  %2199 = vmatpush1.bf16.msra.mxu0 0
  %2200 = vmatprep.subr.bf16.mxu0 0
  %2201 = vmatpush1.bf16.msra.mxu0 0
  %2202 = vmatprep.subr.bf16.mxu0 0
  %2203 = vmatpush1.bf16.msra.mxu0 0
  %2204 = vmatprep.subr.bf16.mxu0 0
  %2205 = vmatpush1.bf16.msra.mxu0 0
  %2206 = vmatprep.subr.bf16.mxu0 0
  %2207 = vmatpush1.bf16.msra.mxu0 0
  %2208 = vmatprep.subr.bf16.mxu0 0
  %2209 = vmatpush1.bf16.msra.mxu0 0
  %2210 = vmatprep.mubr.bf16.mxu0 0
  %2211 = vmatmul.mubr.bf16.gmra.mrb[0].mxu0 %v2173
  %v2212 = vpop.f32.mrb[0].mxu0
  %v2213 = vadd.f32 0.0, %v2212
  %v2214 = vpop.f32.mrb[0].mxu0
  %v2215 = vpop.f32.mrb[0].mxu0
  %v2216 = vpop.f32.mrb[0].mxu0
  %2217 = vdwg.mxu0
  %v2219 = vsel %vm650, %v2124, 0
  %v2222 = vsel %vm886, %v1892, 0
  %2224 = vmatprep.subr.bf16.mxu0 0
  %2225 = vmatpush1.bf16.msra.mxu0 %v2222
  %2226 = vmatprep.subr.bf16.mxu0 0
  %2227 = vmatpush1.bf16.msra.mxu0 0
  %2228 = vmatprep.subr.bf16.mxu0 0
  %2229 = vmatpush1.bf16.msra.mxu0 0
  %2230 = vmatprep.subr.bf16.mxu0 0
  %2231 = vmatpush1.bf16.msra.mxu0 0
  %2232 = vmatprep.subr.bf16.mxu0 0
  %2233 = vmatpush1.bf16.msra.mxu0 0
  %2234 = vmatprep.subr.bf16.mxu0 0
  %2235 = vmatpush1.bf16.msra.mxu0 0
  %2236 = vmatprep.subr.bf16.mxu0 0
  %2237 = vmatpush1.bf16.msra.mxu0 0
  %2238 = vmatprep.subr.bf16.mxu0 0
  %2239 = vmatpush1.bf16.msra.mxu0 0
  %2240 = vmatprep.subr.bf16.mxu0 0
  %2241 = vmatpush1.bf16.msra.mxu0 0
  %2242 = vmatprep.subr.bf16.mxu0 0
  %2243 = vmatpush1.bf16.msra.mxu0 0
  %2244 = vmatprep.subr.bf16.mxu0 0
  %2245 = vmatpush1.bf16.msra.mxu0 0
  %2246 = vmatprep.subr.bf16.mxu0 0
  %2247 = vmatpush1.bf16.msra.mxu0 0
  %2248 = vmatprep.subr.bf16.mxu0 0
  %2249 = vmatpush1.bf16.msra.mxu0 0
  %2250 = vmatprep.subr.bf16.mxu0 0
  %2251 = vmatpush1.bf16.msra.mxu0 0
  %2252 = vmatprep.subr.bf16.mxu0 0
  %2253 = vmatpush1.bf16.msra.mxu0 0
  %2254 = vmatprep.subr.bf16.mxu0 0
  %2255 = vmatpush1.bf16.msra.mxu0 0
  %2256 = vmatprep.mubr.bf16.mxu0 0
  %2257 = vmatmul.mubr.bf16.gmra.mrb[0].mxu0 %v2219
  %v2258 = vpop.f32.mrb[0].mxu0
  %v2259 = vadd.f32 0.0, %v2258
  %v2260 = vpop.f32.mrb[0].mxu0
  %v2261 = vpop.f32.mrb[0].mxu0
  %v2262 = vpop.f32.mrb[0].mxu0
  %2263 = vdwg.mxu0
  %v2265 = vsel %vm650, %v2125, 0
  %v2268 = vsel %vm886, %v1893, 0
  %2270 = vmatprep.subr.bf16.mxu0 0
  %2271 = vmatpush1.bf16.msra.mxu0 %v2268
  %2272 = vmatprep.subr.bf16.mxu0 0
  %2273 = vmatpush1.bf16.msra.mxu0 0
  %2274 = vmatprep.subr.bf16.mxu0 0
  %2275 = vmatpush1.bf16.msra.mxu0 0
  %2276 = vmatprep.subr.bf16.mxu0 0
  %2277 = vmatpush1.bf16.msra.mxu0 0
  %2278 = vmatprep.subr.bf16.mxu0 0
  %2279 = vmatpush1.bf16.msra.mxu0 0
  %2280 = vmatprep.subr.bf16.mxu0 0
  %2281 = vmatpush1.bf16.msra.mxu0 0
  %2282 = vmatprep.subr.bf16.mxu0 0
  %2283 = vmatpush1.bf16.msra.mxu0 0
  %2284 = vmatprep.subr.bf16.mxu0 0
  %2285 = vmatpush1.bf16.msra.mxu0 0
  %2286 = vmatprep.subr.bf16.mxu0 0
  %2287 = vmatpush1.bf16.msra.mxu0 0
  %2288 = vmatprep.subr.bf16.mxu0 0
  %2289 = vmatpush1.bf16.msra.mxu0 0
  %2290 = vmatprep.subr.bf16.mxu0 0
  %2291 = vmatpush1.bf16.msra.mxu0 0
  %2292 = vmatprep.subr.bf16.mxu0 0
  %2293 = vmatpush1.bf16.msra.mxu0 0
  %2294 = vmatprep.subr.bf16.mxu0 0
  %2295 = vmatpush1.bf16.msra.mxu0 0
  %2296 = vmatprep.subr.bf16.mxu0 0
  %2297 = vmatpush1.bf16.msra.mxu0 0
  %2298 = vmatprep.subr.bf16.mxu0 0
  %2299 = vmatpush1.bf16.msra.mxu0 0
  %2300 = vmatprep.subr.bf16.mxu0 0
  %2301 = vmatpush1.bf16.msra.mxu0 0
  %2302 = vmatprep.mubr.bf16.mxu0 0
  %2303 = vmatmul.mubr.bf16.gmra.mrb[0].mxu0 %v2265
  %v2304 = vpop.f32.mrb[0].mxu0
  %v2305 = vadd.f32 0.0, %v2304
  %v2306 = vpop.f32.mrb[0].mxu0
  %v2307 = vpop.f32.mrb[0].mxu0
  %v2308 = vpop.f32.mrb[0].mxu0
  %2309 = vdwg.mxu0
  %v2310 = vcombine.low %v2167, %v2259
  %v2311 = vcombine.high %v2167, %v2259
  %v2313 = vunpack.c.l.s4 1983009808
  %v2314 = vunpack.c.0.s8 %v2313
  %v2315 = vlaneseq
  %v2316 = vshrl.u32 %v2315, 7
  %v2317 = vsub.s32 %v2314, %v2316
  %v2318 = vrot.slane %v2310, %v2317
  %v2320 = vunpack.c.l.s4 1983009808
  %v2321 = vunpack.c.0.s8 %v2320
  %v2322 = vlaneseq
  %v2323 = vshrl.u32 %v2322, 7
  %v2324 = vsub.s32 %v2321, %v2323
  %v2325 = vrot.slane %v2311, %v2324
  %v2326 = vcombine.low %v2213, %v2305
  %v2327 = vcombine.high %v2213, %v2305
  %v2329 = vunpack.c.l.s4 1983009808
  %v2330 = vunpack.c.0.s8 %v2329
  %v2331 = vlaneseq
  %v2332 = vshrl.u32 %v2331, 7
  %v2333 = vsub.s32 %v2330, %v2332
  %v2334 = vrot.slane %v2326, %v2333
  %v2336 = vunpack.c.l.s4 1983009808
  %v2337 = vunpack.c.0.s8 %v2336
  %v2338 = vlaneseq
  %v2339 = vshrl.u32 %v2338, 7
  %v2340 = vsub.s32 %v2337, %v2339
  %v2341 = vrot.slane %v2327, %v2340
  %v2342 = vcombine.low %v2318, %v2334
  %v2343 = vcombine.high %v2318, %v2334
  %v2345 = vunpack.c.l.s4 1934713408
  %v2346 = vunpack.c.0.s8 %v2345
  %v2347 = vlaneseq
  %v2348 = vshrl.u32 %v2347, 7
  %v2349 = vsub.s32 %v2346, %v2348
  %v2350 = vrot.slane %v2342, %v2349
  %v2352 = vunpack.c.l.s4 1934713408
  %v2353 = vunpack.c.0.s8 %v2352
  %v2354 = vlaneseq
  %v2355 = vshrl.u32 %v2354, 7
  %v2356 = vsub.s32 %v2353, %v2355
  %v2357 = vrot.slane %v2343, %v2356
  %v2358 = vcombine.low %v2325, %v2341
  %v2359 = vcombine.high %v2325, %v2341
  %v2361 = vunpack.c.l.s4 1934713408
  %v2362 = vunpack.c.0.s8 %v2361
  %v2363 = vlaneseq
  %v2364 = vshrl.u32 %v2363, 7
  %v2365 = vsub.s32 %v2362, %v2364
  %v2366 = vrot.slane %v2358, %v2365
  %v2368 = vunpack.c.l.s4 1934713408
  %v2369 = vunpack.c.0.s8 %v2368
  %v2370 = vlaneseq
  %v2371 = vshrl.u32 %v2370, 7
  %v2372 = vsub.s32 %v2369, %v2371
  %v2373 = vrot.slane %v2359, %v2372
  %v2374 = vcombine.high %v2350, 0.0
  %v2375 = vcombine.high %v2357, 0.0
  %v2376 = vcombine.high %v2366, 0.0
  %v2377 = vcombine.high %v2373, 0.0
  %v2378 = vcombine.low %v2350, %v2357
  %v2380 = vunpack.c.l.s4 1983009808
  %v2381 = vunpack.c.0.s8 %v2380
  %v2382 = vlaneseq
  %v2383 = vshrl.u32 %v2382, 7
  %v2384 = vsub.s32 %v2381, %v2383
  %v2385 = vrot.slane %v2378, %v2384
  %v2386 = vcombine.low %v2374, %v2375
  %v2388 = vunpack.c.l.s4 1983009808
  %v2389 = vunpack.c.0.s8 %v2388
  %v2390 = vlaneseq
  %v2391 = vshrl.u32 %v2390, 7
  %v2392 = vsub.s32 %v2389, %v2391
  %v2393 = vrot.slane %v2386, %v2392
  %v2394 = vcombine.low %v2366, %v2373
  %v2396 = vunpack.c.l.s4 1983009808
  %v2397 = vunpack.c.0.s8 %v2396
  %v2398 = vlaneseq
  %v2399 = vshrl.u32 %v2398, 7
  %v2400 = vsub.s32 %v2397, %v2399
  %v2401 = vrot.slane %v2394, %v2400
  %v2402 = vcombine.low %v2376, %v2377
  %v2404 = vunpack.c.l.s4 1983009808
  %v2405 = vunpack.c.0.s8 %v2404
  %v2406 = vlaneseq
  %v2407 = vshrl.u32 %v2406, 7
  %v2408 = vsub.s32 %v2405, %v2407
  %v2409 = vrot.slane %v2402, %v2408
  %v2410 = vcombine.low %v2385, %v2393
  %v2411 = vcombine.high %v2385, %v2393
  %v2413 = vunpack.c.l.s4 1934713408
  %v2414 = vunpack.c.0.s8 %v2413
  %v2415 = vlaneseq
  %v2416 = vshrl.u32 %v2415, 7
  %v2417 = vsub.s32 %v2414, %v2416
  %v2418 = vrot.slane %v2410, %v2417
  %v2420 = vunpack.c.l.s4 1934713408
  %v2421 = vunpack.c.0.s8 %v2420
  %v2422 = vlaneseq
  %v2423 = vshrl.u32 %v2422, 7
  %v2424 = vsub.s32 %v2421, %v2423
  %v2425 = vrot.slane %v2411, %v2424
  %v2426 = vcombine.low %v2401, %v2409
  %v2427 = vcombine.high %v2401, %v2409
  %v2429 = vunpack.c.l.s4 1934713408
  %v2430 = vunpack.c.0.s8 %v2429
  %v2431 = vlaneseq
  %v2432 = vshrl.u32 %v2431, 7
  %v2433 = vsub.s32 %v2430, %v2432
  %v2434 = vrot.slane %v2426, %v2433
  %v2436 = vunpack.c.l.s4 1934713408
  %v2437 = vunpack.c.0.s8 %v2436
  %v2438 = vlaneseq
  %v2439 = vshrl.u32 %v2438, 7
  %v2440 = vsub.s32 %v2437, %v2439
  %v2441 = vrot.slane %v2427, %v2440
  %v2442 = vcombine.low %v2418, %v2434
  %v2443 = vcombine.high %v2418, %v2434
  %v2444 = vcombine.low %v2425, %v2441
  %v2445 = vcombine.high %v2425, %v2441
  %2447 = vrot.lane.b32.xlu0 %v2443, 8
  %v2448 = vpop.permute.xlu0 %2447
  %2451 = vrot.lane.b32.xlu0 %v2444, 16
  %v2452 = vpop.permute.xlu0 %2451
  %2455 = vrot.lane.b32.xlu0 %v2445, 24
  %v2456 = vpop.permute.xlu0 %2455
  %v2458 = vsel %vm650, %v2442, %v2448
  %v2459 = vsel %vm1217, %v2458, %v2452
  %v2460 = vsel %vm1219, %v2459, %v2456
  %v2461 = vpack.c.bf16 %v2460, %v2460
  %v2462 = vld [vmem:[%s8] sm:$0xf]
  %v2463 = vld [vmem:[%s8 + $0x4] sm:$0xf]
  %v2464 = vld [vmem:[%s8 + $0x8] sm:$0xf]
  %v2465 = vld [vmem:[%s8 + $0xc] sm:$0xf]
  %v2466 = vlaneseq
  %v2467 = vshrl.u32 %v2466, 7
  %v2468 = vsub.s32 5, %v2467
  %v2469 = vrot.slane %v51, %v2468
  %v2474 = vunpack.c.l.b16 %v2462
  %v2475 = vunpack.c.l.b16 %v2463
  %v2476 = vunpack.c.l.b16 %v2464
  %v2477 = vunpack.c.l.b16 %v2465
  %v2478 = vpack.c.b16 %v2475, %v2474
  %v2479 = vpack.c.b16 %v2477, %v2476
  %v2483 = vsel %vm78, %v2461, 0
  %2485 = vmatprep.subr.bf16.mxu0 0
  %2486 = vmatpush1.bf16.msra.mxu0 %v2478
  %2487 = vmatprep.subr.bf16.mxu0 0
  %2488 = vmatpush1.bf16.msra.mxu0 %v2479
  %2489 = vmatprep.subr.bf16.mxu0 0
  %2490 = vmatpush1.bf16.msra.mxu0 0
  %2491 = vmatprep.subr.bf16.mxu0 0
  %2492 = vmatpush1.bf16.msra.mxu0 0
  %2493 = vmatprep.subr.bf16.mxu0 0
  %2494 = vmatpush1.bf16.msra.mxu0 0
  %2495 = vmatprep.subr.bf16.mxu0 0
  %2496 = vmatpush1.bf16.msra.mxu0 0
  %2497 = vmatprep.subr.bf16.mxu0 0
  %2498 = vmatpush1.bf16.msra.mxu0 0
  %2499 = vmatprep.subr.bf16.mxu0 0
  %2500 = vmatpush1.bf16.msra.mxu0 0
  %2501 = vmatprep.subr.bf16.mxu0 0
  %2502 = vmatpush1.bf16.msra.mxu0 0
  %2503 = vmatprep.subr.bf16.mxu0 0
  %2504 = vmatpush1.bf16.msra.mxu0 0
  %2505 = vmatprep.subr.bf16.mxu0 0
  %2506 = vmatpush1.bf16.msra.mxu0 0
  %2507 = vmatprep.subr.bf16.mxu0 0
  %2508 = vmatpush1.bf16.msra.mxu0 0
  %2509 = vmatprep.subr.bf16.mxu0 0
  %2510 = vmatpush1.bf16.msra.mxu0 0
  %2511 = vmatprep.subr.bf16.mxu0 0
  %2512 = vmatpush1.bf16.msra.mxu0 0
  %2513 = vmatprep.subr.bf16.mxu0 0
  %2514 = vmatpush1.bf16.msra.mxu0 0
  %2515 = vmatprep.subr.bf16.mxu0 0
  %2516 = vmatpush1.bf16.msra.mxu0 0
  %2517 = vmatprep.mubr.bf16.mxu0 0
  %2518 = vmatmul.mubr.bf16.gmra.mrb[0].mxu0 %v2483
  %v2519 = vpop.f32.mrb[0].mxu0
  %v2520 = vadd.f32 %v2469, %v2519
  %v2521 = vpop.f32.mrb[0].mxu0
  %v2522 = vpop.f32.mrb[0].mxu0
  %v2523 = vpop.f32.mrb[0].mxu0
  %2524 = vdwg.mxu0
  %v2525 = vadd.f32 %v1309, %v2520
  %v2526 = vsel %vm78, %v2525, 0.0
  %2527 = vadd.xlane.f32.xlu0 %v2526
  %v2528 = vpop.xlane.xlu0 %2527
  %v2529 = vmul.f32 %v2528, %v1289
  %v2530 = vsub.f32 %v2525, %v2529
  %v2531 = vmul.f32 %v2530, %v2530
  %v2532 = vsel %vm78, %v2531, 0.0
  %2533 = vadd.xlane.f32.xlu0 %v2532
  %v2534 = vpop.xlane.xlu0 %2533
  %v2535 = vmul.f32 %v2534, %v1289
  %v2536 = vadd.f32 %v2535, 1e-05
  %v2537 = vrsqrt.pop %v2536
  %v2538 = vmul.f32 %v2530, %v2537
  %v2539 = vlaneseq
  %v2540 = vshrl.u32 %v2539, 7
  %v2541 = vsub.s32 6, %v2540
  %v2542 = vrot.slane %v51, %v2541
  %v2543 = vmul.f32 %v2538, %v2542
  %v2544 = vlaneseq
  %v2545 = vshrl.u32 %v2544, 7
  %v2546 = vsub.s32 7, %v2545
  %v2547 = vrot.slane %v51, %v2546
  %v2548 = vadd.f32 %v2543, %v2547
  %v2549 = vpack.c.bf16 %v2548, %v2548
  %v2550 = vld [vmem:[%s9] sm:$0xf]
  %v2551 = vld [vmem:[%s9 + $0x4] sm:$0xf]
  %v2552 = vld [vmem:[%s9 + $0x8] sm:$0xf]
  %v2553 = vld [vmem:[%s9 + $0xc] sm:$0xf]
  %v2554 = vld [vmem:[%s13] sm:$0x1]
  %v2556 = vlaneseq
  %v2557 = vshrl.u32 %v2556, 7
  %v2558 = vsub.s32 0, %v2557
  %v2559 = vrot.slane %v2554, %v2558
  %v2565 = vunpack.c.l.b16 %v2550
  %v2566 = vunpack.c.l.b16 %v2551
  %v2567 = vunpack.c.l.b16 %v2552
  %v2568 = vunpack.c.l.b16 %v2553
  %v2569 = vpack.c.b16 %v2566, %v2565
  %v2570 = vpack.c.b16 %v2568, %v2567
  %v2574 = vsel %vm78, %v2549, 0
  %2576 = vmatprep.subr.bf16.mxu0 0
  %2577 = vmatpush1.bf16.msra.mxu0 %v2569
  %2578 = vmatprep.subr.bf16.mxu0 0
  %2579 = vmatpush1.bf16.msra.mxu0 %v2570
  %2580 = vmatprep.subr.bf16.mxu0 0
  %2581 = vmatpush1.bf16.msra.mxu0 0
  %2582 = vmatprep.subr.bf16.mxu0 0
  %2583 = vmatpush1.bf16.msra.mxu0 0
  %2584 = vmatprep.subr.bf16.mxu0 0
  %2585 = vmatpush1.bf16.msra.mxu0 0
  %2586 = vmatprep.subr.bf16.mxu0 0
  %2587 = vmatpush1.bf16.msra.mxu0 0
  %2588 = vmatprep.subr.bf16.mxu0 0
  %2589 = vmatpush1.bf16.msra.mxu0 0
  %2590 = vmatprep.subr.bf16.mxu0 0
  %2591 = vmatpush1.bf16.msra.mxu0 0
  %2592 = vmatprep.subr.bf16.mxu0 0
  %2593 = vmatpush1.bf16.msra.mxu0 0
  %2594 = vmatprep.subr.bf16.mxu0 0
  %2595 = vmatpush1.bf16.msra.mxu0 0
  %2596 = vmatprep.subr.bf16.mxu0 0
  %2597 = vmatpush1.bf16.msra.mxu0 0
  %2598 = vmatprep.subr.bf16.mxu0 0
  %2599 = vmatpush1.bf16.msra.mxu0 0
  %2600 = vmatprep.subr.bf16.mxu0 0
  %2601 = vmatpush1.bf16.msra.mxu0 0
  %2602 = vmatprep.subr.bf16.mxu0 0
  %2603 = vmatpush1.bf16.msra.mxu0 0
  %2604 = vmatprep.subr.bf16.mxu0 0
  %2605 = vmatpush1.bf16.msra.mxu0 0
  %2606 = vmatprep.subr.bf16.mxu0 0
  %2607 = vmatpush1.bf16.msra.mxu0 0
  %2608 = vmatprep.mubr.bf16.mxu0 0
  %2609 = vmatmul.mubr.bf16.gmra.mrb[0].mxu0 %v2574
  %v2610 = vpop.f32.mrb[0].mxu0
  %v2611 = vadd.f32 %v2559, %v2610
  %v2612 = vpop.f32.mrb[0].mxu0
  %v2613 = vpop.f32.mrb[0].mxu0
  %v2614 = vpop.f32.mrb[0].mxu0
  %2615 = vdwg.mxu0
  %v2616 = vmax.f32 %v2611, 0.0
  %v2617 = vpack.c.bf16 %v2616, %v2616
  %v2618 = vld [vmem:[%s10] sm:$0xf]
  %v2619 = vld [vmem:[%s10 + $0x4] sm:$0xf]
  %v2620 = vld [vmem:[%s10 + $0x8] sm:$0xf]
  %v2621 = vld [vmem:[%s10 + $0xc] sm:$0xf]
  %v2622 = vld [vmem:[%s10 + $0x10] sm:$0xf]
  %v2623 = vld [vmem:[%s10 + $0x14] sm:$0xf]
  %v2624 = vld [vmem:[%s10 + $0x18] sm:$0xf]
  %v2625 = vld [vmem:[%s10 + $0x1c] sm:$0xf]
  %v2626 = vlaneseq
  %v2627 = vshrl.u32 %v2626, 7
  %v2628 = vsub.s32 0, %v2627
  %v2629 = vrot.slane %v52, %v2628
  %v2638 = vunpack.c.l.b16 %v2618
  %v2639 = vunpack.c.l.b16 %v2619
  %v2640 = vunpack.c.l.b16 %v2620
  %v2641 = vunpack.c.l.b16 %v2621
  %v2642 = vunpack.c.l.b16 %v2622
  %v2643 = vunpack.c.l.b16 %v2623
  %v2644 = vunpack.c.l.b16 %v2624
  %v2645 = vunpack.c.l.b16 %v2625
  %v2646 = vpack.c.b16 %v2639, %v2638
  %v2647 = vpack.c.b16 %v2641, %v2640
  %v2648 = vpack.c.b16 %v2643, %v2642
  %v2649 = vpack.c.b16 %v2645, %v2644
  %vm2654 = vcmask 523264
  %v2656 = vsel %vm2654, %v2617, 0
  %2658 = vmatprep.subr.bf16.mxu0 0
  %2659 = vmatpush1.bf16.msra.mxu0 %v2646
  %2660 = vmatprep.subr.bf16.mxu0 0
  %2661 = vmatpush1.bf16.msra.mxu0 %v2647
  %2662 = vmatprep.subr.bf16.mxu0 0
  %2663 = vmatpush1.bf16.msra.mxu0 %v2648
  %2664 = vmatprep.subr.bf16.mxu0 0
  %2665 = vmatpush1.bf16.msra.mxu0 %v2649
  %2666 = vmatprep.subr.bf16.mxu0 0
  %2667 = vmatpush1.bf16.msra.mxu0 0
  %2668 = vmatprep.subr.bf16.mxu0 0
  %2669 = vmatpush1.bf16.msra.mxu0 0
  %2670 = vmatprep.subr.bf16.mxu0 0
  %2671 = vmatpush1.bf16.msra.mxu0 0
  %2672 = vmatprep.subr.bf16.mxu0 0
  %2673 = vmatpush1.bf16.msra.mxu0 0
  %2674 = vmatprep.subr.bf16.mxu0 0
  %2675 = vmatpush1.bf16.msra.mxu0 0
  %2676 = vmatprep.subr.bf16.mxu0 0
  %2677 = vmatpush1.bf16.msra.mxu0 0
  %2678 = vmatprep.subr.bf16.mxu0 0
  %2679 = vmatpush1.bf16.msra.mxu0 0
  %2680 = vmatprep.subr.bf16.mxu0 0
  %2681 = vmatpush1.bf16.msra.mxu0 0
  %2682 = vmatprep.subr.bf16.mxu0 0
  %2683 = vmatpush1.bf16.msra.mxu0 0
  %2684 = vmatprep.subr.bf16.mxu0 0
  %2685 = vmatpush1.bf16.msra.mxu0 0
  %2686 = vmatprep.subr.bf16.mxu0 0
  %2687 = vmatpush1.bf16.msra.mxu0 0
  %2688 = vmatprep.subr.bf16.mxu0 0
  %2689 = vmatpush1.bf16.msra.mxu0 0
  %2690 = vmatprep.mubr.bf16.mxu0 0
  %2691 = vmatmul.mubr.bf16.gmra.mrb[0].mxu0 %v2656
  %v2692 = vpop.f32.mrb[0].mxu0
  %v2693 = vadd.f32 %v2629, %v2692
  %v2694 = vpop.f32.mrb[0].mxu0
  %v2695 = vpop.f32.mrb[0].mxu0
  %v2696 = vpop.f32.mrb[0].mxu0
  %2697 = vdwg.mxu0
  %v2698 = vadd.f32 %v2548, %v2693
  %v2699 = vsel %vm78, %v2698, 0.0
  %2700 = vadd.xlane.f32.xlu0 %v2699
  %v2701 = vpop.xlane.xlu0 %2700
  %v2702 = vmul.f32 %v2701, %v1289
  %v2703 = vsub.f32 %v2698, %v2702
  %v2704 = vmul.f32 %v2703, %v2703
  %v2705 = vsel %vm78, %v2704, 0.0
  %2706 = vadd.xlane.f32.xlu0 %v2705
  %v2707 = vpop.xlane.xlu0 %2706
  %v2708 = vmul.f32 %v2707, %v1289
  %v2709 = vadd.f32 %v2708, 1e-05
  %v2710 = vrsqrt.pop %v2709
  %v2711 = vmul.f32 %v2703, %v2710
  %v2712 = vlaneseq
  %v2713 = vshrl.u32 %v2712, 7
  %v2714 = vsub.s32 1, %v2713
  %v2715 = vrot.slane %v52, %v2714
  %v2716 = vmul.f32 %v2711, %v2715
  %v2717 = vlaneseq
  %v2718 = vshrl.u32 %v2717, 7
  %v2719 = vsub.s32 2, %v2718
  %v2720 = vrot.slane %v52, %v2719
  %v2721 = vadd.f32 %v2716, %v2720
  %2722 = vst.msk [vmem:[%s15] sm:$0xff] %vm78, %v2721
  // Predicated region
  $region62: #{transformer_forward.7} parent=0 // pred_check
    _
  $region63: #{transformer_forward.7} parent=0 // pred_check_branch
    %2724 = sbr.rel (0) target = $region65
  $region64: #{transformer_forward.7} parent=0 // pred_region
    _
  $region65: #{transformer_forward.7} parent=0 // pred_fallthru
    _
  // Predicated region
  $region66: #{transformer_forward.7} parent=0 // pred_check
    _
  $region67: #{transformer_forward.7} parent=0 // pred_check_branch
    %2726 = sbr.rel (0) target = $region69
  $region68: #{transformer_forward.7} parent=0 // pred_region
    _
  $region69: #{transformer_forward.7} parent=0 // pred_fallthru
    _

</llo_original>
